<compile_context>
chip_gen: v6e
topology: v6e:2x2x1
jax: 0.10.0
libtpu: 0.0.40
codegen_flags: <defaults>
</compile_context>

<pallas_src>
import random as pyrandom

import jax
import jax.numpy as jnp
from jax.experimental import pallas as pl
from jax.experimental.pallas import tpu as pltpu


_VMEM = pl.BlockSpec(memory_space=pltpu.MemorySpace.VMEM)
_SMEM = pl.BlockSpec(memory_space=pltpu.MemorySpace.SMEM)


# --------------------------- shared LSTM cell math --------------------------

def _lstm_cell_update(gates, c_prev, H):
    """gates: (B, 4H) pre-activation (PyTorch order i,f,g,o); c_prev: (B, H)."""
    # One sigmoid + one tanh over the full lane-dense (B, 4H) block (EUP),
    # then static quarter slices.
    sig = jax.nn.sigmoid(gates)
    th = jnp.tanh(gates)
    i_g = sig[:, 0 * H:1 * H]
    f_g = sig[:, 1 * H:2 * H]
    g_g = th[:, 2 * H:3 * H]
    o_g = sig[:, 3 * H:4 * H]
    c_new = f_g * c_prev + i_g * g_g
    h_new = o_g * jnp.tanh(c_new)
    return h_new, c_new


# --------------------------- fused seq2seq kernel ----------------------------

def make_seq2seq_kernel(num_layers, src_len, n_steps, out_vocab):
    n_hi = 3 * (num_layers - 1)

    def kernel(*refs):
        gx0_ref = refs[0]                      # (S, Bp, 4H) enc layer-0 pre-gates
        enc_whh0_ref = refs[1]                 # (H, 4H)
        enc_hi = refs[2:2 + n_hi]              # enc layers >=1: (w_ih_t, w_hh_t, b)
        pos = 2 + n_hi
        emb_w0_ref = refs[pos]                 # (Vpad, 4H) fused dec emb @ W_ih0 + b0
        dec_whh0_ref = refs[pos + 1]           # (H, 4H)
        dec_hi = refs[pos + 2:pos + 2 + n_hi]  # dec layers >=1
        pos = pos + 2 + n_hi
        fc_w_ref, fc_b_ref, trg_ref, use_ref, preds_ref = refs[pos:pos + 5]

        Bp = gx0_ref.shape[1]
        H = enc_whh0_ref.shape[0]
        Vpad = emb_w0_ref.shape[0]
        f32 = jnp.float32

        h = [jnp.zeros((Bp, H), f32) for _ in range(num_layers)]
        c = [jnp.zeros((Bp, H), f32) for _ in range(num_layers)]

        # ---------------- encoder recurrence (fully unrolled) ----------------
        # TODO(synk): nn.Dropout is treated as eval-mode identity everywhere
        # (required for folding the embedding tables into the layer-0 weights).
        for t in range(src_len):
            # layer 0: embedding lookup, x @ W_ih and bias folded into gx0.
            gates = gx0_ref[t] + jnp.dot(h[0], enc_whh0_ref[...],
                                         preferred_element_type=f32)
            h[0], c[0] = _lstm_cell_update(gates, c[0], H)
            x = h[0]
            for l in range(1, num_layers):
                wih_ref, whh_ref, b_ref = enc_hi[3 * (l - 1):3 * (l - 1) + 3]
                gates = (jnp.dot(x, wih_ref[...], preferred_element_type=f32)
                         + jnp.dot(h[l], whh_ref[...], preferred_element_type=f32)
                         + b_ref[...])
                h[l], c[l] = _lstm_cell_update(gates, c[l], H)
                x = h[l]

        # ------------- decoder recurrence with argmax feedback ---------------
        lane = jax.lax.broadcasted_iota(jnp.int32, (Bp, Vpad), 1)
        prev_idx = jnp.zeros((Bp, 1), jnp.int32)
        for i in range(n_steps):
            # scalar-predicated token select (teacher-forcing schedule in SMEM)
            tok = jnp.where(use_ref[i] > 0, trg_ref[i], prev_idx)   # (Bp, 1) i32
            tok_oh = (lane == tok).astype(f32)                      # (Bp, Vpad)
            # layer 0: embedding + W_ih + bias folded into emb_W0 -> a single
            # (Bp,Vpad)x(Vpad,4H) MXU matmul plus the recurrent h matmul.
            gates = (jnp.dot(tok_oh, emb_w0_ref[...], preferred_element_type=f32)
                     + jnp.dot(h[0], dec_whh0_ref[...], preferred_element_type=f32))
            h[0], c[0] = _lstm_cell_update(gates, c[0], H)
            x = h[0]
            for l in range(1, num_layers):
                wih_ref, whh_ref, b_ref = dec_hi[3 * (l - 1):3 * (l - 1) + 3]
                gates = (jnp.dot(x, wih_ref[...], preferred_element_type=f32)
                         + jnp.dot(h[l], whh_ref[...], preferred_element_type=f32)
                         + b_ref[...])
                h[l], c[l] = _lstm_cell_update(gates, c[l], H)
                x = h[l]

            pred = (jnp.dot(x, fc_w_ref[...], preferred_element_type=f32)
                    + fc_b_ref[...])
            preds_ref[i] = pred                      # lane-dense (Bp, 128) store

            # argmax over real vocab lanes (lowest index on ties) -> next token
            masked = jnp.where(lane < out_vocab, pred, -jnp.inf)
            m = jnp.max(masked, axis=-1, keepdims=True)
            prev_idx = jnp.min(jnp.where(masked >= m, lane, Vpad),
                               axis=-1, keepdims=True)

    return kernel


# ----------------------------- parameter init -------------------------------

def _uniform(key, shape, scale):
    return jax.random.uniform(key, shape, jnp.float32, -scale, scale)


def init_params(key, input_vocab, output_vocab, emb_size, hidden, num_layers):
    ks = iter(jax.random.split(key, 64))
    s = 1.0 / jnp.sqrt(hidden)

    def lstm_stack(in_dim):
        layers = []
        for l in range(num_layers):
            d = in_dim if l == 0 else hidden
            layers.append(dict(
                w_ih_t=_uniform(next(ks), (d, 4 * hidden), s),
                w_hh_t=_uniform(next(ks), (hidden, 4 * hidden), s),
                # combined bias = b_ih + b_hh (PyTorch has both)
                b=_uniform(next(ks), (1, 4 * hidden), s)
                  + _uniform(next(ks), (1, 4 * hidden), s),
            ))
        return layers

    enc = dict(
        embedding=jax.random.normal(next(ks), (input_vocab, emb_size), jnp.float32),
        lstm=lstm_stack(emb_size),
    )
    dec = dict(
        embedding=jax.random.normal(next(ks), (output_vocab, emb_size), jnp.float32),
        lstm=lstm_stack(emb_size),
        fc_w=_uniform(next(ks), (hidden, output_vocab), s),
        fc_b=_uniform(next(ks), (1, output_vocab), s),
    )
    return dict(enc=enc, dec=dec)


# ------------------------------ Seq2Seq forward -----------------------------

def _round_up(x, m):
    return ((x + m - 1) // m) * m


@jax.jit
def _seq2seq_impl(src, trg, use_trg, params):
    src_len, B = src.shape
    trg_len = trg.shape[0]
    n_steps = trg_len - 1

    enc_lstm = params['enc']['lstm']
    dec_lstm = params['dec']['lstm']
    num_layers = len(enc_lstm)
    out_vocab = params['dec']['fc_w'].shape[1]

    Bp = max(8, _round_up(B, 8))                    # full sublane group
    Vpad = max(128, _round_up(out_vocab, 128))      # lane-dense logits

    # --- encoder prep (XLA): fold embedding + layer-0 W_ih + bias, gather ---
    enc_tbl = (jnp.dot(params['enc']['embedding'], enc_lstm[0]['w_ih_t'])
               + enc_lstm[0]['b'])                                  # (Vin, 4H)
    gx0 = jnp.take(enc_tbl, src, axis=0)                            # (S, B, 4H)
    gx0 = jnp.pad(gx0, ((0, 0), (0, Bp - B), (0, 0)))

    # --- decoder prep (XLA): fold embedding + layer-0 W_ih + bias -----------
    dec_tbl = (jnp.dot(params['dec']['embedding'], dec_lstm[0]['w_ih_t'])
               + dec_lstm[0]['b'])                                  # (Vout, 4H)
    emb_w0 = jnp.pad(dec_tbl, ((0, Vpad - out_vocab), (0, 0)))       # (Vpad, 4H)
    fc_w_pad = jnp.pad(params['dec']['fc_w'], ((0, 0), (0, Vpad - out_vocab)))
    fc_b_pad = jnp.pad(params['dec']['fc_b'], ((0, 0), (0, Vpad - out_vocab)))
    trg_tok = jnp.pad(trg[:n_steps], ((0, 0), (0, Bp - B)))[:, :, None]
    trg_tok = trg_tok.astype(jnp.int32)                              # (n, Bp, 1)

    args = [gx0, enc_lstm[0]['w_hh_t']]
    for l in range(1, num_layers):
        lp = enc_lstm[l]
        args += [lp['w_ih_t'], lp['w_hh_t'], lp['b']]
    args += [emb_w0, dec_lstm[0]['w_hh_t']]
    for l in range(1, num_layers):
        lp = dec_lstm[l]
        args += [lp['w_ih_t'], lp['w_hh_t'], lp['b']]
    args += [fc_w_pad, fc_b_pad, trg_tok, use_trg]

    in_specs = [_VMEM] * (len(args) - 1) + [_SMEM]   # schedule scalars in SMEM

    preds = pl.pallas_call(
        make_seq2seq_kernel(num_layers, src_len, n_steps, out_vocab),
        out_shape=jax.ShapeDtypeStruct((n_steps, Bp, Vpad), jnp.float32),
        in_specs=in_specs,
        out_specs=_VMEM,
    )(*args)

    outputs = jnp.concatenate(
        [jnp.zeros((1, B, out_vocab), jnp.float32),
         preds[:, :B, :out_vocab]], axis=0)
    return outputs


def seq2seq_forward(src, trg, params, teacher_forcing_ratio=0.5, seed=0):
    """src: (src_len, B) int32, trg: (trg_len, B) int32 -> (trg_len, B, V)."""
    trg_len = trg.shape[0]
    assert trg_len >= 2 and src.shape[1] == trg.shape[1]
    # Host-side RNG, same draw order as the PyTorch loop (one draw per step
    # tt=1..trg_len-1); the draw at step tt decides the input of step tt+1.
    rng = pyrandom.Random(seed)
    draws = [1 if rng.random() < teacher_forcing_ratio else 0
             for _ in range(trg_len - 1)]
    # use_trg[i]: feed trg[i] at decoder step i (tt=i+1); step 0 always uses
    # trg[0]; the last draw is made but unused, matching the reference.
    use_trg = jnp.asarray([1] + draws[:trg_len - 2], dtype=jnp.int32)
    return _seq2seq_impl(src, trg, use_trg, params)


# ----------------------------------- main ------------------------------------

if __name__ == "__main__":
    INPUT_VOCAB = 11     # source vocab
    OUTPUT_VOCAB = 13    # target vocab (decoder output_size)
    EMB = 16
    HIDDEN = 32          # 4*H = 128 -> lane-aligned gates
    NUM_LAYERS = 2
    SRC_LEN = 6
    TRG_LEN = 5
    BATCH = 4            # padded to 8 internally

    key = jax.random.PRNGKey(0)
    kp, ks, kt = jax.random.split(key, 3)

    params = init_params(kp, INPUT_VOCAB, OUTPUT_VOCAB, EMB, HIDDEN, NUM_LAYERS)
    src = jax.random.randint(ks, (SRC_LEN, BATCH), 0, INPUT_VOCAB, dtype=jnp.int32)
    trg = jax.random.randint(kt, (TRG_LEN, BATCH), 0, OUTPUT_VOCAB, dtype=jnp.int32)

    outputs = seq2seq_forward(src, trg, params, teacher_forcing_ratio=0.5, seed=0)
    outputs = jax.block_until_ready(outputs)

    assert outputs.shape == (TRG_LEN, BATCH, OUTPUT_VOCAB)
    assert bool(jnp.all(outputs[0] == 0.0))
    assert bool(jnp.all(jnp.isfinite(outputs)))
    print("KERNEL_OK")
</pallas_src>

<mosaic_0001>
module attributes {stable_mosaic.version = 11 : i64} {
  func.func @kernel(%arg0: memref<6x8x128xf32, #tpu.memory_space<vmem>>, %arg1: memref<32x128xf32, #tpu.memory_space<vmem>>, %arg2: memref<32x128xf32, #tpu.memory_space<vmem>>, %arg3: memref<32x128xf32, #tpu.memory_space<vmem>>, %arg4: memref<1x128xf32, #tpu.memory_space<vmem>>, %arg5: memref<128x128xf32, #tpu.memory_space<vmem>>, %arg6: memref<32x128xf32, #tpu.memory_space<vmem>>, %arg7: memref<32x128xf32, #tpu.memory_space<vmem>>, %arg8: memref<32x128xf32, #tpu.memory_space<vmem>>, %arg9: memref<1x128xf32, #tpu.memory_space<vmem>>, %arg10: memref<32x128xf32, #tpu.memory_space<vmem>>, %arg11: memref<1x128xf32, #tpu.memory_space<vmem>>, %arg12: memref<4x8x1xi32, #tpu.memory_space<vmem>>, %arg13: memref<4xi32, #tpu.memory_space<smem>>, %arg14: memref<4x8x128xf32, #tpu.memory_space<vmem>>) attributes {dimension_semantics = [], scalar_prefetch = 0 : i64, scratch_operands = 0 : i64, tpu.core_type = #tpu.core_type<tc>} {
    %cst = arith.constant 0.000000e+00 : f32
    %0 = vector.broadcast %cst : f32 to vector<8x32xf32>
    %cst_0 = arith.constant 0.000000e+00 : f32
    %1 = vector.broadcast %cst_0 : f32 to vector<8x32xf32>
    %cst_1 = arith.constant 0.000000e+00 : f32
    %2 = vector.broadcast %cst_1 : f32 to vector<8x32xf32>
    %cst_2 = arith.constant 0.000000e+00 : f32
    %3 = vector.broadcast %cst_2 : f32 to vector<8x32xf32>
    %c0 = arith.constant 0 : index
    %c0_3 = arith.constant 0 : index
    %c0_4 = arith.constant 0 : index
    %4 = vector.load %arg0[%c0, %c0_3, %c0_4] : memref<6x8x128xf32, #tpu.memory_space<vmem>>, vector<1x8x128xf32>
    %5 = vector.shape_cast %4 : vector<1x8x128xf32> to vector<8x128xf32>
    %c0_5 = arith.constant 0 : index
    %c0_6 = arith.constant 0 : index
    %6 = vector.load %arg1[%c0_5, %c0_6] : memref<32x128xf32, #tpu.memory_space<vmem>>, vector<32x128xf32>
    %cst_7 = arith.constant dense<0.000000e+00> : vector<8x128xf32>
    %7 = tpu.matmul %0, %6, %cst_7 {dimension_numbers = #tpu.dot_dimension_numbers<[1], [0], [0], [1], [0, 0, 1, 1], [], []>} : vector<8x32xf32>, vector<32x128xf32>, vector<8x128xf32> -> vector<8x128xf32>
    %8 = arith.addf %5, %7 : vector<8x128xf32>
    %9 = arith.negf %8 : vector<8x128xf32>
    %10 = math.exp %9 : vector<8x128xf32>
    %cst_8 = arith.constant 1.000000e+00 : f32
    %11 = vector.broadcast %cst_8 : f32 to vector<8x128xf32>
    %12 = arith.addf %11, %10 : vector<8x128xf32>
    %13 = arith.divf %11, %12 : vector<8x128xf32>
    %14 = math.tanh %8 : vector<8x128xf32>
    %15 = vector.extract_strided_slice %13 {offsets = [0, 0], sizes = [8, 32], strides = [1, 1]} : vector<8x128xf32> to vector<8x32xf32>
    %16 = vector.extract_strided_slice %13 {offsets = [0, 32], sizes = [8, 32], strides = [1, 1]} : vector<8x128xf32> to vector<8x32xf32>
    %17 = vector.extract_strided_slice %14 {offsets = [0, 64], sizes = [8, 32], strides = [1, 1]} : vector<8x128xf32> to vector<8x32xf32>
    %18 = vector.extract_strided_slice %13 {offsets = [0, 96], sizes = [8, 32], strides = [1, 1]} : vector<8x128xf32> to vector<8x32xf32>
    %19 = arith.mulf %16, %2 : vector<8x32xf32>
    %20 = arith.mulf %15, %17 : vector<8x32xf32>
    %21 = arith.addf %19, %20 : vector<8x32xf32>
    %22 = math.tanh %21 : vector<8x32xf32>
    %23 = arith.mulf %18, %22 : vector<8x32xf32>
    %c0_9 = arith.constant 0 : index
    %c0_10 = arith.constant 0 : index
    %24 = vector.load %arg2[%c0_9, %c0_10] : memref<32x128xf32, #tpu.memory_space<vmem>>, vector<32x128xf32>
    %cst_11 = arith.constant dense<0.000000e+00> : vector<8x128xf32>
    %25 = tpu.matmul %23, %24, %cst_11 {dimension_numbers = #tpu.dot_dimension_numbers<[1], [0], [0], [1], [0, 0, 1, 1], [], []>} : vector<8x32xf32>, vector<32x128xf32>, vector<8x128xf32> -> vector<8x128xf32>
    %c0_12 = arith.constant 0 : index
    %c0_13 = arith.constant 0 : index
    %26 = vector.load %arg3[%c0_12, %c0_13] : memref<32x128xf32, #tpu.memory_space<vmem>>, vector<32x128xf32>
    %cst_14 = arith.constant dense<0.000000e+00> : vector<8x128xf32>
    %27 = tpu.matmul %1, %26, %cst_14 {dimension_numbers = #tpu.dot_dimension_numbers<[1], [0], [0], [1], [0, 0, 1, 1], [], []>} : vector<8x32xf32>, vector<32x128xf32>, vector<8x128xf32> -> vector<8x128xf32>
    %28 = arith.addf %25, %27 : vector<8x128xf32>
    %c0_15 = arith.constant 0 : index
    %c0_16 = arith.constant 0 : index
    %29 = vector.load %arg4[%c0_15, %c0_16] : memref<1x128xf32, #tpu.memory_space<vmem>>, vector<1x128xf32>
    %30 = vector.broadcast %29 : vector<1x128xf32> to vector<8x128xf32>
    %31 = arith.addf %28, %30 : vector<8x128xf32>
    %32 = arith.negf %31 : vector<8x128xf32>
    %33 = math.exp %32 : vector<8x128xf32>
    %cst_17 = arith.constant 1.000000e+00 : f32
    %34 = vector.broadcast %cst_17 : f32 to vector<8x128xf32>
    %35 = arith.addf %34, %33 : vector<8x128xf32>
    %36 = arith.divf %34, %35 : vector<8x128xf32>
    %37 = math.tanh %31 : vector<8x128xf32>
    %38 = vector.extract_strided_slice %36 {offsets = [0, 0], sizes = [8, 32], strides = [1, 1]} : vector<8x128xf32> to vector<8x32xf32>
    %39 = vector.extract_strided_slice %36 {offsets = [0, 32], sizes = [8, 32], strides = [1, 1]} : vector<8x128xf32> to vector<8x32xf32>
    %40 = vector.extract_strided_slice %37 {offsets = [0, 64], sizes = [8, 32], strides = [1, 1]} : vector<8x128xf32> to vector<8x32xf32>
    %41 = vector.extract_strided_slice %36 {offsets = [0, 96], sizes = [8, 32], strides = [1, 1]} : vector<8x128xf32> to vector<8x32xf32>
    %42 = arith.mulf %39, %3 : vector<8x32xf32>
    %43 = arith.mulf %38, %40 : vector<8x32xf32>
    %44 = arith.addf %42, %43 : vector<8x32xf32>
    %45 = math.tanh %44 : vector<8x32xf32>
    %46 = arith.mulf %41, %45 : vector<8x32xf32>
    %c1 = arith.constant 1 : index
    %c0_18 = arith.constant 0 : index
    %c0_19 = arith.constant 0 : index
    %47 = vector.load %arg0[%c1, %c0_18, %c0_19] : memref<6x8x128xf32, #tpu.memory_space<vmem>>, vector<1x8x128xf32>
    %48 = vector.shape_cast %47 : vector<1x8x128xf32> to vector<8x128xf32>
    %c0_20 = arith.constant 0 : index
    %c0_21 = arith.constant 0 : index
    %49 = vector.load %arg1[%c0_20, %c0_21] : memref<32x128xf32, #tpu.memory_space<vmem>>, vector<32x128xf32>
    %cst_22 = arith.constant dense<0.000000e+00> : vector<8x128xf32>
    %50 = tpu.matmul %23, %49, %cst_22 {dimension_numbers = #tpu.dot_dimension_numbers<[1], [0], [0], [1], [0, 0, 1, 1], [], []>} : vector<8x32xf32>, vector<32x128xf32>, vector<8x128xf32> -> vector<8x128xf32>
    %51 = arith.addf %48, %50 : vector<8x128xf32>
    %52 = arith.negf %51 : vector<8x128xf32>
    %53 = math.exp %52 : vector<8x128xf32>
    %cst_23 = arith.constant 1.000000e+00 : f32
    %54 = vector.broadcast %cst_23 : f32 to vector<8x128xf32>
    %55 = arith.addf %54, %53 : vector<8x128xf32>
    %56 = arith.divf %54, %55 : vector<8x128xf32>
    %57 = math.tanh %51 : vector<8x128xf32>
    %58 = vector.extract_strided_slice %56 {offsets = [0, 0], sizes = [8, 32], strides = [1, 1]} : vector<8x128xf32> to vector<8x32xf32>
    %59 = vector.extract_strided_slice %56 {offsets = [0, 32], sizes = [8, 32], strides = [1, 1]} : vector<8x128xf32> to vector<8x32xf32>
    %60 = vector.extract_strided_slice %57 {offsets = [0, 64], sizes = [8, 32], strides = [1, 1]} : vector<8x128xf32> to vector<8x32xf32>
    %61 = vector.extract_strided_slice %56 {offsets = [0, 96], sizes = [8, 32], strides = [1, 1]} : vector<8x128xf32> to vector<8x32xf32>
    %62 = arith.mulf %59, %21 : vector<8x32xf32>
    %63 = arith.mulf %58, %60 : vector<8x32xf32>
    %64 = arith.addf %62, %63 : vector<8x32xf32>
    %65 = math.tanh %64 : vector<8x32xf32>
    %66 = arith.mulf %61, %65 : vector<8x32xf32>
    %c0_24 = arith.constant 0 : index
    %c0_25 = arith.constant 0 : index
    %67 = vector.load %arg2[%c0_24, %c0_25] : memref<32x128xf32, #tpu.memory_space<vmem>>, vector<32x128xf32>
    %cst_26 = arith.constant dense<0.000000e+00> : vector<8x128xf32>
    %68 = tpu.matmul %66, %67, %cst_26 {dimension_numbers = #tpu.dot_dimension_numbers<[1], [0], [0], [1], [0, 0, 1, 1], [], []>} : vector<8x32xf32>, vector<32x128xf32>, vector<8x128xf32> -> vector<8x128xf32>
    %c0_27 = arith.constant 0 : index
    %c0_28 = arith.constant 0 : index
    %69 = vector.load %arg3[%c0_27, %c0_28] : memref<32x128xf32, #tpu.memory_space<vmem>>, vector<32x128xf32>
    %cst_29 = arith.constant dense<0.000000e+00> : vector<8x128xf32>
    %70 = tpu.matmul %46, %69, %cst_29 {dimension_numbers = #tpu.dot_dimension_numbers<[1], [0], [0], [1], [0, 0, 1, 1], [], []>} : vector<8x32xf32>, vector<32x128xf32>, vector<8x128xf32> -> vector<8x128xf32>
    %71 = arith.addf %68, %70 : vector<8x128xf32>
    %c0_30 = arith.constant 0 : index
    %c0_31 = arith.constant 0 : index
    %72 = vector.load %arg4[%c0_30, %c0_31] : memref<1x128xf32, #tpu.memory_space<vmem>>, vector<1x128xf32>
    %73 = vector.broadcast %72 : vector<1x128xf32> to vector<8x128xf32>
    %74 = arith.addf %71, %73 : vector<8x128xf32>
    %75 = arith.negf %74 : vector<8x128xf32>
    %76 = math.exp %75 : vector<8x128xf32>
    %cst_32 = arith.constant 1.000000e+00 : f32
    %77 = vector.broadcast %cst_32 : f32 to vector<8x128xf32>
    %78 = arith.addf %77, %76 : vector<8x128xf32>
    %79 = arith.divf %77, %78 : vector<8x128xf32>
    %80 = math.tanh %74 : vector<8x128xf32>
    %81 = vector.extract_strided_slice %79 {offsets = [0, 0], sizes = [8, 32], strides = [1, 1]} : vector<8x128xf32> to vector<8x32xf32>
    %82 = vector.extract_strided_slice %79 {offsets = [0, 32], sizes = [8, 32], strides = [1, 1]} : vector<8x128xf32> to vector<8x32xf32>
    %83 = vector.extract_strided_slice %80 {offsets = [0, 64], sizes = [8, 32], strides = [1, 1]} : vector<8x128xf32> to vector<8x32xf32>
    %84 = vector.extract_strided_slice %79 {offsets = [0, 96], sizes = [8, 32], strides = [1, 1]} : vector<8x128xf32> to vector<8x32xf32>
    %85 = arith.mulf %82, %44 : vector<8x32xf32>
    %86 = arith.mulf %81, %83 : vector<8x32xf32>
    %87 = arith.addf %85, %86 : vector<8x32xf32>
    %88 = math.tanh %87 : vector<8x32xf32>
    %89 = arith.mulf %84, %88 : vector<8x32xf32>
    %c2 = arith.constant 2 : index
    %c0_33 = arith.constant 0 : index
    %c0_34 = arith.constant 0 : index
    %90 = vector.load %arg0[%c2, %c0_33, %c0_34] : memref<6x8x128xf32, #tpu.memory_space<vmem>>, vector<1x8x128xf32>
    %91 = vector.shape_cast %90 : vector<1x8x128xf32> to vector<8x128xf32>
    %c0_35 = arith.constant 0 : index
    %c0_36 = arith.constant 0 : index
    %92 = vector.load %arg1[%c0_35, %c0_36] : memref<32x128xf32, #tpu.memory_space<vmem>>, vector<32x128xf32>
    %cst_37 = arith.constant dense<0.000000e+00> : vector<8x128xf32>
    %93 = tpu.matmul %66, %92, %cst_37 {dimension_numbers = #tpu.dot_dimension_numbers<[1], [0], [0], [1], [0, 0, 1, 1], [], []>} : vector<8x32xf32>, vector<32x128xf32>, vector<8x128xf32> -> vector<8x128xf32>
    %94 = arith.addf %91, %93 : vector<8x128xf32>
    %95 = arith.negf %94 : vector<8x128xf32>
    %96 = math.exp %95 : vector<8x128xf32>
    %cst_38 = arith.constant 1.000000e+00 : f32
    %97 = vector.broadcast %cst_38 : f32 to vector<8x128xf32>
    %98 = arith.addf %97, %96 : vector<8x128xf32>
    %99 = arith.divf %97, %98 : vector<8x128xf32>
    %100 = math.tanh %94 : vector<8x128xf32>
    %101 = vector.extract_strided_slice %99 {offsets = [0, 0], sizes = [8, 32], strides = [1, 1]} : vector<8x128xf32> to vector<8x32xf32>
    %102 = vector.extract_strided_slice %99 {offsets = [0, 32], sizes = [8, 32], strides = [1, 1]} : vector<8x128xf32> to vector<8x32xf32>
    %103 = vector.extract_strided_slice %100 {offsets = [0, 64], sizes = [8, 32], strides = [1, 1]} : vector<8x128xf32> to vector<8x32xf32>
    %104 = vector.extract_strided_slice %99 {offsets = [0, 96], sizes = [8, 32], strides = [1, 1]} : vector<8x128xf32> to vector<8x32xf32>
    %105 = arith.mulf %102, %64 : vector<8x32xf32>
    %106 = arith.mulf %101, %103 : vector<8x32xf32>
    %107 = arith.addf %105, %106 : vector<8x32xf32>
    %108 = math.tanh %107 : vector<8x32xf32>
    %109 = arith.mulf %104, %108 : vector<8x32xf32>
    %c0_39 = arith.constant 0 : index
    %c0_40 = arith.constant 0 : index
    %110 = vector.load %arg2[%c0_39, %c0_40] : memref<32x128xf32, #tpu.memory_space<vmem>>, vector<32x128xf32>
    %cst_41 = arith.constant dense<0.000000e+00> : vector<8x128xf32>
    %111 = tpu.matmul %109, %110, %cst_41 {dimension_numbers = #tpu.dot_dimension_numbers<[1], [0], [0], [1], [0, 0, 1, 1], [], []>} : vector<8x32xf32>, vector<32x128xf32>, vector<8x128xf32> -> vector<8x128xf32>
    %c0_42 = arith.constant 0 : index
    %c0_43 = arith.constant 0 : index
    %112 = vector.load %arg3[%c0_42, %c0_43] : memref<32x128xf32, #tpu.memory_space<vmem>>, vector<32x128xf32>
    %cst_44 = arith.constant dense<0.000000e+00> : vector<8x128xf32>
    %113 = tpu.matmul %89, %112, %cst_44 {dimension_numbers = #tpu.dot_dimension_numbers<[1], [0], [0], [1], [0, 0, 1, 1], [], []>} : vector<8x32xf32>, vector<32x128xf32>, vector<8x128xf32> -> vector<8x128xf32>
    %114 = arith.addf %111, %113 : vector<8x128xf32>
    %c0_45 = arith.constant 0 : index
    %c0_46 = arith.constant 0 : index
    %115 = vector.load %arg4[%c0_45, %c0_46] : memref<1x128xf32, #tpu.memory_space<vmem>>, vector<1x128xf32>
    %116 = vector.broadcast %115 : vector<1x128xf32> to vector<8x128xf32>
    %117 = arith.addf %114, %116 : vector<8x128xf32>
    %118 = arith.negf %117 : vector<8x128xf32>
    %119 = math.exp %118 : vector<8x128xf32>
    %cst_47 = arith.constant 1.000000e+00 : f32
    %120 = vector.broadcast %cst_47 : f32 to vector<8x128xf32>
    %121 = arith.addf %120, %119 : vector<8x128xf32>
    %122 = arith.divf %120, %121 : vector<8x128xf32>
    %123 = math.tanh %117 : vector<8x128xf32>
    %124 = vector.extract_strided_slice %122 {offsets = [0, 0], sizes = [8, 32], strides = [1, 1]} : vector<8x128xf32> to vector<8x32xf32>
    %125 = vector.extract_strided_slice %122 {offsets = [0, 32], sizes = [8, 32], strides = [1, 1]} : vector<8x128xf32> to vector<8x32xf32>
    %126 = vector.extract_strided_slice %123 {offsets = [0, 64], sizes = [8, 32], strides = [1, 1]} : vector<8x128xf32> to vector<8x32xf32>
    %127 = vector.extract_strided_slice %122 {offsets = [0, 96], sizes = [8, 32], strides = [1, 1]} : vector<8x128xf32> to vector<8x32xf32>
    %128 = arith.mulf %125, %87 : vector<8x32xf32>
    %129 = arith.mulf %124, %126 : vector<8x32xf32>
    %130 = arith.addf %128, %129 : vector<8x32xf32>
    %131 = math.tanh %130 : vector<8x32xf32>
    %132 = arith.mulf %127, %131 : vector<8x32xf32>
    %c3 = arith.constant 3 : index
    %c0_48 = arith.constant 0 : index
    %c0_49 = arith.constant 0 : index
    %133 = vector.load %arg0[%c3, %c0_48, %c0_49] : memref<6x8x128xf32, #tpu.memory_space<vmem>>, vector<1x8x128xf32>
    %134 = vector.shape_cast %133 : vector<1x8x128xf32> to vector<8x128xf32>
    %c0_50 = arith.constant 0 : index
    %c0_51 = arith.constant 0 : index
    %135 = vector.load %arg1[%c0_50, %c0_51] : memref<32x128xf32, #tpu.memory_space<vmem>>, vector<32x128xf32>
    %cst_52 = arith.constant dense<0.000000e+00> : vector<8x128xf32>
    %136 = tpu.matmul %109, %135, %cst_52 {dimension_numbers = #tpu.dot_dimension_numbers<[1], [0], [0], [1], [0, 0, 1, 1], [], []>} : vector<8x32xf32>, vector<32x128xf32>, vector<8x128xf32> -> vector<8x128xf32>
    %137 = arith.addf %134, %136 : vector<8x128xf32>
    %138 = arith.negf %137 : vector<8x128xf32>
    %139 = math.exp %138 : vector<8x128xf32>
    %cst_53 = arith.constant 1.000000e+00 : f32
    %140 = vector.broadcast %cst_53 : f32 to vector<8x128xf32>
    %141 = arith.addf %140, %139 : vector<8x128xf32>
    %142 = arith.divf %140, %141 : vector<8x128xf32>
    %143 = math.tanh %137 : vector<8x128xf32>
    %144 = vector.extract_strided_slice %142 {offsets = [0, 0], sizes = [8, 32], strides = [1, 1]} : vector<8x128xf32> to vector<8x32xf32>
    %145 = vector.extract_strided_slice %142 {offsets = [0, 32], sizes = [8, 32], strides = [1, 1]} : vector<8x128xf32> to vector<8x32xf32>
    %146 = vector.extract_strided_slice %143 {offsets = [0, 64], sizes = [8, 32], strides = [1, 1]} : vector<8x128xf32> to vector<8x32xf32>
    %147 = vector.extract_strided_slice %142 {offsets = [0, 96], sizes = [8, 32], strides = [1, 1]} : vector<8x128xf32> to vector<8x32xf32>
    %148 = arith.mulf %145, %107 : vector<8x32xf32>
    %149 = arith.mulf %144, %146 : vector<8x32xf32>
    %150 = arith.addf %148, %149 : vector<8x32xf32>
    %151 = math.tanh %150 : vector<8x32xf32>
    %152 = arith.mulf %147, %151 : vector<8x32xf32>
    %c0_54 = arith.constant 0 : index
    %c0_55 = arith.constant 0 : index
    %153 = vector.load %arg2[%c0_54, %c0_55] : memref<32x128xf32, #tpu.memory_space<vmem>>, vector<32x128xf32>
    %cst_56 = arith.constant dense<0.000000e+00> : vector<8x128xf32>
    %154 = tpu.matmul %152, %153, %cst_56 {dimension_numbers = #tpu.dot_dimension_numbers<[1], [0], [0], [1], [0, 0, 1, 1], [], []>} : vector<8x32xf32>, vector<32x128xf32>, vector<8x128xf32> -> vector<8x128xf32>
    %c0_57 = arith.constant 0 : index
    %c0_58 = arith.constant 0 : index
    %155 = vector.load %arg3[%c0_57, %c0_58] : memref<32x128xf32, #tpu.memory_space<vmem>>, vector<32x128xf32>
    %cst_59 = arith.constant dense<0.000000e+00> : vector<8x128xf32>
    %156 = tpu.matmul %132, %155, %cst_59 {dimension_numbers = #tpu.dot_dimension_numbers<[1], [0], [0], [1], [0, 0, 1, 1], [], []>} : vector<8x32xf32>, vector<32x128xf32>, vector<8x128xf32> -> vector<8x128xf32>
    %157 = arith.addf %154, %156 : vector<8x128xf32>
    %c0_60 = arith.constant 0 : index
    %c0_61 = arith.constant 0 : index
    %158 = vector.load %arg4[%c0_60, %c0_61] : memref<1x128xf32, #tpu.memory_space<vmem>>, vector<1x128xf32>
    %159 = vector.broadcast %158 : vector<1x128xf32> to vector<8x128xf32>
    %160 = arith.addf %157, %159 : vector<8x128xf32>
    %161 = arith.negf %160 : vector<8x128xf32>
    %162 = math.exp %161 : vector<8x128xf32>
    %cst_62 = arith.constant 1.000000e+00 : f32
    %163 = vector.broadcast %cst_62 : f32 to vector<8x128xf32>
    %164 = arith.addf %163, %162 : vector<8x128xf32>
    %165 = arith.divf %163, %164 : vector<8x128xf32>
    %166 = math.tanh %160 : vector<8x128xf32>
    %167 = vector.extract_strided_slice %165 {offsets = [0, 0], sizes = [8, 32], strides = [1, 1]} : vector<8x128xf32> to vector<8x32xf32>
    %168 = vector.extract_strided_slice %165 {offsets = [0, 32], sizes = [8, 32], strides = [1, 1]} : vector<8x128xf32> to vector<8x32xf32>
    %169 = vector.extract_strided_slice %166 {offsets = [0, 64], sizes = [8, 32], strides = [1, 1]} : vector<8x128xf32> to vector<8x32xf32>
    %170 = vector.extract_strided_slice %165 {offsets = [0, 96], sizes = [8, 32], strides = [1, 1]} : vector<8x128xf32> to vector<8x32xf32>
    %171 = arith.mulf %168, %130 : vector<8x32xf32>
    %172 = arith.mulf %167, %169 : vector<8x32xf32>
    %173 = arith.addf %171, %172 : vector<8x32xf32>
    %174 = math.tanh %173 : vector<8x32xf32>
    %175 = arith.mulf %170, %174 : vector<8x32xf32>
    %c4 = arith.constant 4 : index
    %c0_63 = arith.constant 0 : index
    %c0_64 = arith.constant 0 : index
    %176 = vector.load %arg0[%c4, %c0_63, %c0_64] : memref<6x8x128xf32, #tpu.memory_space<vmem>>, vector<1x8x128xf32>
    %177 = vector.shape_cast %176 : vector<1x8x128xf32> to vector<8x128xf32>
    %c0_65 = arith.constant 0 : index
    %c0_66 = arith.constant 0 : index
    %178 = vector.load %arg1[%c0_65, %c0_66] : memref<32x128xf32, #tpu.memory_space<vmem>>, vector<32x128xf32>
    %cst_67 = arith.constant dense<0.000000e+00> : vector<8x128xf32>
    %179 = tpu.matmul %152, %178, %cst_67 {dimension_numbers = #tpu.dot_dimension_numbers<[1], [0], [0], [1], [0, 0, 1, 1], [], []>} : vector<8x32xf32>, vector<32x128xf32>, vector<8x128xf32> -> vector<8x128xf32>
    %180 = arith.addf %177, %179 : vector<8x128xf32>
    %181 = arith.negf %180 : vector<8x128xf32>
    %182 = math.exp %181 : vector<8x128xf32>
    %cst_68 = arith.constant 1.000000e+00 : f32
    %183 = vector.broadcast %cst_68 : f32 to vector<8x128xf32>
    %184 = arith.addf %183, %182 : vector<8x128xf32>
    %185 = arith.divf %183, %184 : vector<8x128xf32>
    %186 = math.tanh %180 : vector<8x128xf32>
    %187 = vector.extract_strided_slice %185 {offsets = [0, 0], sizes = [8, 32], strides = [1, 1]} : vector<8x128xf32> to vector<8x32xf32>
    %188 = vector.extract_strided_slice %185 {offsets = [0, 32], sizes = [8, 32], strides = [1, 1]} : vector<8x128xf32> to vector<8x32xf32>
    %189 = vector.extract_strided_slice %186 {offsets = [0, 64], sizes = [8, 32], strides = [1, 1]} : vector<8x128xf32> to vector<8x32xf32>
    %190 = vector.extract_strided_slice %185 {offsets = [0, 96], sizes = [8, 32], strides = [1, 1]} : vector<8x128xf32> to vector<8x32xf32>
    %191 = arith.mulf %188, %150 : vector<8x32xf32>
    %192 = arith.mulf %187, %189 : vector<8x32xf32>
    %193 = arith.addf %191, %192 : vector<8x32xf32>
    %194 = math.tanh %193 : vector<8x32xf32>
    %195 = arith.mulf %190, %194 : vector<8x32xf32>
    %c0_69 = arith.constant 0 : index
    %c0_70 = arith.constant 0 : index
    %196 = vector.load %arg2[%c0_69, %c0_70] : memref<32x128xf32, #tpu.memory_space<vmem>>, vector<32x128xf32>
    %cst_71 = arith.constant dense<0.000000e+00> : vector<8x128xf32>
    %197 = tpu.matmul %195, %196, %cst_71 {dimension_numbers = #tpu.dot_dimension_numbers<[1], [0], [0], [1], [0, 0, 1, 1], [], []>} : vector<8x32xf32>, vector<32x128xf32>, vector<8x128xf32> -> vector<8x128xf32>
    %c0_72 = arith.constant 0 : index
    %c0_73 = arith.constant 0 : index
    %198 = vector.load %arg3[%c0_72, %c0_73] : memref<32x128xf32, #tpu.memory_space<vmem>>, vector<32x128xf32>
    %cst_74 = arith.constant dense<0.000000e+00> : vector<8x128xf32>
    %199 = tpu.matmul %175, %198, %cst_74 {dimension_numbers = #tpu.dot_dimension_numbers<[1], [0], [0], [1], [0, 0, 1, 1], [], []>} : vector<8x32xf32>, vector<32x128xf32>, vector<8x128xf32> -> vector<8x128xf32>
    %200 = arith.addf %197, %199 : vector<8x128xf32>
    %c0_75 = arith.constant 0 : index
    %c0_76 = arith.constant 0 : index
    %201 = vector.load %arg4[%c0_75, %c0_76] : memref<1x128xf32, #tpu.memory_space<vmem>>, vector<1x128xf32>
    %202 = vector.broadcast %201 : vector<1x128xf32> to vector<8x128xf32>
    %203 = arith.addf %200, %202 : vector<8x128xf32>
    %204 = arith.negf %203 : vector<8x128xf32>
    %205 = math.exp %204 : vector<8x128xf32>
    %cst_77 = arith.constant 1.000000e+00 : f32
    %206 = vector.broadcast %cst_77 : f32 to vector<8x128xf32>
    %207 = arith.addf %206, %205 : vector<8x128xf32>
    %208 = arith.divf %206, %207 : vector<8x128xf32>
    %209 = math.tanh %203 : vector<8x128xf32>
    %210 = vector.extract_strided_slice %208 {offsets = [0, 0], sizes = [8, 32], strides = [1, 1]} : vector<8x128xf32> to vector<8x32xf32>
    %211 = vector.extract_strided_slice %208 {offsets = [0, 32], sizes = [8, 32], strides = [1, 1]} : vector<8x128xf32> to vector<8x32xf32>
    %212 = vector.extract_strided_slice %209 {offsets = [0, 64], sizes = [8, 32], strides = [1, 1]} : vector<8x128xf32> to vector<8x32xf32>
    %213 = vector.extract_strided_slice %208 {offsets = [0, 96], sizes = [8, 32], strides = [1, 1]} : vector<8x128xf32> to vector<8x32xf32>
    %214 = arith.mulf %211, %173 : vector<8x32xf32>
    %215 = arith.mulf %210, %212 : vector<8x32xf32>
    %216 = arith.addf %214, %215 : vector<8x32xf32>
    %217 = math.tanh %216 : vector<8x32xf32>
    %218 = arith.mulf %213, %217 : vector<8x32xf32>
    %c5 = arith.constant 5 : index
    %c0_78 = arith.constant 0 : index
    %c0_79 = arith.constant 0 : index
    %219 = vector.load %arg0[%c5, %c0_78, %c0_79] : memref<6x8x128xf32, #tpu.memory_space<vmem>>, vector<1x8x128xf32>
    %220 = vector.shape_cast %219 : vector<1x8x128xf32> to vector<8x128xf32>
    %c0_80 = arith.constant 0 : index
    %c0_81 = arith.constant 0 : index
    %221 = vector.load %arg1[%c0_80, %c0_81] : memref<32x128xf32, #tpu.memory_space<vmem>>, vector<32x128xf32>
    %cst_82 = arith.constant dense<0.000000e+00> : vector<8x128xf32>
    %222 = tpu.matmul %195, %221, %cst_82 {dimension_numbers = #tpu.dot_dimension_numbers<[1], [0], [0], [1], [0, 0, 1, 1], [], []>} : vector<8x32xf32>, vector<32x128xf32>, vector<8x128xf32> -> vector<8x128xf32>
    %223 = arith.addf %220, %222 : vector<8x128xf32>
    %224 = arith.negf %223 : vector<8x128xf32>
    %225 = math.exp %224 : vector<8x128xf32>
    %cst_83 = arith.constant 1.000000e+00 : f32
    %226 = vector.broadcast %cst_83 : f32 to vector<8x128xf32>
    %227 = arith.addf %226, %225 : vector<8x128xf32>
    %228 = arith.divf %226, %227 : vector<8x128xf32>
    %229 = math.tanh %223 : vector<8x128xf32>
    %230 = vector.extract_strided_slice %228 {offsets = [0, 0], sizes = [8, 32], strides = [1, 1]} : vector<8x128xf32> to vector<8x32xf32>
    %231 = vector.extract_strided_slice %228 {offsets = [0, 32], sizes = [8, 32], strides = [1, 1]} : vector<8x128xf32> to vector<8x32xf32>
    %232 = vector.extract_strided_slice %229 {offsets = [0, 64], sizes = [8, 32], strides = [1, 1]} : vector<8x128xf32> to vector<8x32xf32>
    %233 = vector.extract_strided_slice %228 {offsets = [0, 96], sizes = [8, 32], strides = [1, 1]} : vector<8x128xf32> to vector<8x32xf32>
    %234 = arith.mulf %231, %193 : vector<8x32xf32>
    %235 = arith.mulf %230, %232 : vector<8x32xf32>
    %236 = arith.addf %234, %235 : vector<8x32xf32>
    %237 = math.tanh %236 : vector<8x32xf32>
    %238 = arith.mulf %233, %237 : vector<8x32xf32>
    %c0_84 = arith.constant 0 : index
    %c0_85 = arith.constant 0 : index
    %239 = vector.load %arg2[%c0_84, %c0_85] : memref<32x128xf32, #tpu.memory_space<vmem>>, vector<32x128xf32>
    %cst_86 = arith.constant dense<0.000000e+00> : vector<8x128xf32>
    %240 = tpu.matmul %238, %239, %cst_86 {dimension_numbers = #tpu.dot_dimension_numbers<[1], [0], [0], [1], [0, 0, 1, 1], [], []>} : vector<8x32xf32>, vector<32x128xf32>, vector<8x128xf32> -> vector<8x128xf32>
    %c0_87 = arith.constant 0 : index
    %c0_88 = arith.constant 0 : index
    %241 = vector.load %arg3[%c0_87, %c0_88] : memref<32x128xf32, #tpu.memory_space<vmem>>, vector<32x128xf32>
    %cst_89 = arith.constant dense<0.000000e+00> : vector<8x128xf32>
    %242 = tpu.matmul %218, %241, %cst_89 {dimension_numbers = #tpu.dot_dimension_numbers<[1], [0], [0], [1], [0, 0, 1, 1], [], []>} : vector<8x32xf32>, vector<32x128xf32>, vector<8x128xf32> -> vector<8x128xf32>
    %243 = arith.addf %240, %242 : vector<8x128xf32>
    %c0_90 = arith.constant 0 : index
    %c0_91 = arith.constant 0 : index
    %244 = vector.load %arg4[%c0_90, %c0_91] : memref<1x128xf32, #tpu.memory_space<vmem>>, vector<1x128xf32>
    %245 = vector.broadcast %244 : vector<1x128xf32> to vector<8x128xf32>
    %246 = arith.addf %243, %245 : vector<8x128xf32>
    %247 = arith.negf %246 : vector<8x128xf32>
    %248 = math.exp %247 : vector<8x128xf32>
    %cst_92 = arith.constant 1.000000e+00 : f32
    %249 = vector.broadcast %cst_92 : f32 to vector<8x128xf32>
    %250 = arith.addf %249, %248 : vector<8x128xf32>
    %251 = arith.divf %249, %250 : vector<8x128xf32>
    %252 = math.tanh %246 : vector<8x128xf32>
    %253 = vector.extract_strided_slice %251 {offsets = [0, 0], sizes = [8, 32], strides = [1, 1]} : vector<8x128xf32> to vector<8x32xf32>
    %254 = vector.extract_strided_slice %251 {offsets = [0, 32], sizes = [8, 32], strides = [1, 1]} : vector<8x128xf32> to vector<8x32xf32>
    %255 = vector.extract_strided_slice %252 {offsets = [0, 64], sizes = [8, 32], strides = [1, 1]} : vector<8x128xf32> to vector<8x32xf32>
    %256 = vector.extract_strided_slice %251 {offsets = [0, 96], sizes = [8, 32], strides = [1, 1]} : vector<8x128xf32> to vector<8x32xf32>
    %257 = arith.mulf %254, %216 : vector<8x32xf32>
    %258 = arith.mulf %253, %255 : vector<8x32xf32>
    %259 = arith.addf %257, %258 : vector<8x32xf32>
    %260 = math.tanh %259 : vector<8x32xf32>
    %261 = arith.mulf %256, %260 : vector<8x32xf32>
    %262 = tpu.iota {dimensions = array<i32: 1>} : vector<8x128xi32>
    %c0_i32 = arith.constant 0 : i32
    %263 = vector.broadcast %c0_i32 : i32 to vector<8x1xi32>
    %c0_93 = arith.constant 0 : index
    %264 = memref.load %arg13[%c0_93] : memref<4xi32, #tpu.memory_space<smem>>
    %c0_i32_94 = arith.constant 0 : i32
    %265 = arith.cmpi sgt, %264, %c0_i32_94 : i32
    %c0_95 = arith.constant 0 : index
    %c0_96 = arith.constant 0 : index
    %c0_97 = arith.constant 0 : index
    %266 = vector.load %arg12[%c0_95, %c0_96, %c0_97] : memref<4x8x1xi32, #tpu.memory_space<vmem>>, vector<1x8x1xi32>
    %267 = vector.shape_cast %266 : vector<1x8x1xi32> to vector<8x1xi32>
    %268 = arith.select %265, %267, %263 : vector<8x1xi32>
    %269 = vector.broadcast %268 : vector<8x1xi32> to vector<8x128xi32>
    %270 = arith.cmpi eq, %262, %269 : vector<8x128xi32>
    %271 = arith.extui %270 : vector<8x128xi1> to vector<8x128xi32>
    %272 = arith.sitofp %271 : vector<8x128xi32> to vector<8x128xf32>
    %c0_98 = arith.constant 0 : index
    %c0_99 = arith.constant 0 : index
    %273 = vector.load %arg5[%c0_98, %c0_99] : memref<128x128xf32, #tpu.memory_space<vmem>>, vector<128x128xf32>
    %cst_100 = arith.constant dense<0.000000e+00> : vector<8x128xf32>
    %274 = tpu.matmul %272, %273, %cst_100 {dimension_numbers = #tpu.dot_dimension_numbers<[1], [0], [0], [1], [0, 0, 1, 1], [], []>} : vector<8x128xf32>, vector<128x128xf32>, vector<8x128xf32> -> vector<8x128xf32>
    %c0_101 = arith.constant 0 : index
    %c0_102 = arith.constant 0 : index
    %275 = vector.load %arg6[%c0_101, %c0_102] : memref<32x128xf32, #tpu.memory_space<vmem>>, vector<32x128xf32>
    %cst_103 = arith.constant dense<0.000000e+00> : vector<8x128xf32>
    %276 = tpu.matmul %238, %275, %cst_103 {dimension_numbers = #tpu.dot_dimension_numbers<[1], [0], [0], [1], [0, 0, 1, 1], [], []>} : vector<8x32xf32>, vector<32x128xf32>, vector<8x128xf32> -> vector<8x128xf32>
    %277 = arith.addf %274, %276 : vector<8x128xf32>
    %278 = arith.negf %277 : vector<8x128xf32>
    %279 = math.exp %278 : vector<8x128xf32>
    %cst_104 = arith.constant 1.000000e+00 : f32
    %280 = vector.broadcast %cst_104 : f32 to vector<8x128xf32>
    %281 = arith.addf %280, %279 : vector<8x128xf32>
    %282 = arith.divf %280, %281 : vector<8x128xf32>
    %283 = math.tanh %277 : vector<8x128xf32>
    %284 = vector.extract_strided_slice %282 {offsets = [0, 0], sizes = [8, 32], strides = [1, 1]} : vector<8x128xf32> to vector<8x32xf32>
    %285 = vector.extract_strided_slice %282 {offsets = [0, 32], sizes = [8, 32], strides = [1, 1]} : vector<8x128xf32> to vector<8x32xf32>
    %286 = vector.extract_strided_slice %283 {offsets = [0, 64], sizes = [8, 32], strides = [1, 1]} : vector<8x128xf32> to vector<8x32xf32>
    %287 = vector.extract_strided_slice %282 {offsets = [0, 96], sizes = [8, 32], strides = [1, 1]} : vector<8x128xf32> to vector<8x32xf32>
    %288 = arith.mulf %285, %236 : vector<8x32xf32>
    %289 = arith.mulf %284, %286 : vector<8x32xf32>
    %290 = arith.addf %288, %289 : vector<8x32xf32>
    %291 = math.tanh %290 : vector<8x32xf32>
    %292 = arith.mulf %287, %291 : vector<8x32xf32>
    %c0_105 = arith.constant 0 : index
    %c0_106 = arith.constant 0 : index
    %293 = vector.load %arg7[%c0_105, %c0_106] : memref<32x128xf32, #tpu.memory_space<vmem>>, vector<32x128xf32>
    %cst_107 = arith.constant dense<0.000000e+00> : vector<8x128xf32>
    %294 = tpu.matmul %292, %293, %cst_107 {dimension_numbers = #tpu.dot_dimension_numbers<[1], [0], [0], [1], [0, 0, 1, 1], [], []>} : vector<8x32xf32>, vector<32x128xf32>, vector<8x128xf32> -> vector<8x128xf32>
    %c0_108 = arith.constant 0 : index
    %c0_109 = arith.constant 0 : index
    %295 = vector.load %arg8[%c0_108, %c0_109] : memref<32x128xf32, #tpu.memory_space<vmem>>, vector<32x128xf32>
    %cst_110 = arith.constant dense<0.000000e+00> : vector<8x128xf32>
    %296 = tpu.matmul %261, %295, %cst_110 {dimension_numbers = #tpu.dot_dimension_numbers<[1], [0], [0], [1], [0, 0, 1, 1], [], []>} : vector<8x32xf32>, vector<32x128xf32>, vector<8x128xf32> -> vector<8x128xf32>
    %297 = arith.addf %294, %296 : vector<8x128xf32>
    %c0_111 = arith.constant 0 : index
    %c0_112 = arith.constant 0 : index
    %298 = vector.load %arg9[%c0_111, %c0_112] : memref<1x128xf32, #tpu.memory_space<vmem>>, vector<1x128xf32>
    %299 = vector.broadcast %298 : vector<1x128xf32> to vector<8x128xf32>
    %300 = arith.addf %297, %299 : vector<8x128xf32>
    %301 = arith.negf %300 : vector<8x128xf32>
    %302 = math.exp %301 : vector<8x128xf32>
    %cst_113 = arith.constant 1.000000e+00 : f32
    %303 = vector.broadcast %cst_113 : f32 to vector<8x128xf32>
    %304 = arith.addf %303, %302 : vector<8x128xf32>
    %305 = arith.divf %303, %304 : vector<8x128xf32>
    %306 = math.tanh %300 : vector<8x128xf32>
    %307 = vector.extract_strided_slice %305 {offsets = [0, 0], sizes = [8, 32], strides = [1, 1]} : vector<8x128xf32> to vector<8x32xf32>
    %308 = vector.extract_strided_slice %305 {offsets = [0, 32], sizes = [8, 32], strides = [1, 1]} : vector<8x128xf32> to vector<8x32xf32>
    %309 = vector.extract_strided_slice %306 {offsets = [0, 64], sizes = [8, 32], strides = [1, 1]} : vector<8x128xf32> to vector<8x32xf32>
    %310 = vector.extract_strided_slice %305 {offsets = [0, 96], sizes = [8, 32], strides = [1, 1]} : vector<8x128xf32> to vector<8x32xf32>
    %311 = arith.mulf %308, %259 : vector<8x32xf32>
    %312 = arith.mulf %307, %309 : vector<8x32xf32>
    %313 = arith.addf %311, %312 : vector<8x32xf32>
    %314 = math.tanh %313 : vector<8x32xf32>
    %315 = arith.mulf %310, %314 : vector<8x32xf32>
    %c0_114 = arith.constant 0 : index
    %c0_115 = arith.constant 0 : index
    %316 = vector.load %arg10[%c0_114, %c0_115] : memref<32x128xf32, #tpu.memory_space<vmem>>, vector<32x128xf32>
    %cst_116 = arith.constant dense<0.000000e+00> : vector<8x128xf32>
    %317 = tpu.matmul %315, %316, %cst_116 {dimension_numbers = #tpu.dot_dimension_numbers<[1], [0], [0], [1], [0, 0, 1, 1], [], []>} : vector<8x32xf32>, vector<32x128xf32>, vector<8x128xf32> -> vector<8x128xf32>
    %c0_117 = arith.constant 0 : index
    %c0_118 = arith.constant 0 : index
    %318 = vector.load %arg11[%c0_117, %c0_118] : memref<1x128xf32, #tpu.memory_space<vmem>>, vector<1x128xf32>
    %319 = vector.broadcast %318 : vector<1x128xf32> to vector<8x128xf32>
    %320 = arith.addf %317, %319 : vector<8x128xf32>
    %c0_119 = arith.constant 0 : index
    %c0_120 = arith.constant 0 : index
    %c0_121 = arith.constant 0 : index
    %321 = vector.load %arg14[%c0_119, %c0_120, %c0_121] : memref<4x8x128xf32, #tpu.memory_space<vmem>>, vector<1x8x128xf32>
    %322 = vector.shape_cast %321 : vector<1x8x128xf32> to vector<8x128xf32>
    %323 = vector.shape_cast %320 : vector<8x128xf32> to vector<1x8x128xf32>
    tpu.vector_store %arg14[%c0_119, %c0_120, %c0_121], %323 {strides = array<i32>} : memref<4x8x128xf32, #tpu.memory_space<vmem>>, vector<1x8x128xf32>,
    %c13_i32 = arith.constant 13 : i32
    %324 = vector.broadcast %c13_i32 : i32 to vector<8x128xi32>
    %325 = arith.cmpi slt, %262, %324 : vector<8x128xi32>
    %cst_122 = arith.constant 0xFF800000 : f32
    %326 = vector.broadcast %cst_122 : f32 to vector<8x128xf32>
    %327 = arith.select %325, %320, %326 : vector<8x128xi1>, vector<8x128xf32>
    %cst_123 = arith.constant dense<0xFF800000> : vector<8xf32>
    %328 = vector.multi_reduction <maximumf>, %327, %cst_123 [1] : vector<8x128xf32> to vector<8xf32>
    %329 = vector.shape_cast %328 : vector<8xf32> to vector<8x1xf32>
    %330 = vector.broadcast %329 : vector<8x1xf32> to vector<8x128xf32>
    %331 = arith.cmpf oge, %327, %330 : vector<8x128xf32>
    %c128_i32 = arith.constant 128 : i32
    %332 = vector.broadcast %c128_i32 : i32 to vector<8x128xi32>
    %333 = arith.select %331, %262, %332 : vector<8x128xi1>, vector<8x128xi32>
    %cst_124 = arith.constant dense<2147483647> : vector<8xi32>
    %334 = vector.multi_reduction <minsi>, %333, %cst_124 [1] : vector<8x128xi32> to vector<8xi32>
    %335 = vector.shape_cast %334 : vector<8xi32> to vector<8x1xi32>
    %c1_125 = arith.constant 1 : index
    %336 = memref.load %arg13[%c1_125] : memref<4xi32, #tpu.memory_space<smem>>
    %c0_i32_126 = arith.constant 0 : i32
    %337 = arith.cmpi sgt, %336, %c0_i32_126 : i32
    %c1_127 = arith.constant 1 : index
    %c0_128 = arith.constant 0 : index
    %c0_129 = arith.constant 0 : index
    %338 = vector.load %arg12[%c1_127, %c0_128, %c0_129] : memref<4x8x1xi32, #tpu.memory_space<vmem>>, vector<1x8x1xi32>
    %339 = vector.shape_cast %338 : vector<1x8x1xi32> to vector<8x1xi32>
    %340 = arith.select %337, %339, %335 : vector<8x1xi32>
    %341 = vector.broadcast %340 : vector<8x1xi32> to vector<8x128xi32>
    %342 = arith.cmpi eq, %262, %341 : vector<8x128xi32>
    %343 = arith.extui %342 : vector<8x128xi1> to vector<8x128xi32>
    %344 = arith.sitofp %343 : vector<8x128xi32> to vector<8x128xf32>
    %c0_130 = arith.constant 0 : index
    %c0_131 = arith.constant 0 : index
    %345 = vector.load %arg5[%c0_130, %c0_131] : memref<128x128xf32, #tpu.memory_space<vmem>>, vector<128x128xf32>
    %cst_132 = arith.constant dense<0.000000e+00> : vector<8x128xf32>
    %346 = tpu.matmul %344, %345, %cst_132 {dimension_numbers = #tpu.dot_dimension_numbers<[1], [0], [0], [1], [0, 0, 1, 1], [], []>} : vector<8x128xf32>, vector<128x128xf32>, vector<8x128xf32> -> vector<8x128xf32>
    %c0_133 = arith.constant 0 : index
    %c0_134 = arith.constant 0 : index
    %347 = vector.load %arg6[%c0_133, %c0_134] : memref<32x128xf32, #tpu.memory_space<vmem>>, vector<32x128xf32>
    %cst_135 = arith.constant dense<0.000000e+00> : vector<8x128xf32>
    %348 = tpu.matmul %292, %347, %cst_135 {dimension_numbers = #tpu.dot_dimension_numbers<[1], [0], [0], [1], [0, 0, 1, 1], [], []>} : vector<8x32xf32>, vector<32x128xf32>, vector<8x128xf32> -> vector<8x128xf32>
    %349 = arith.addf %346, %348 : vector<8x128xf32>
    %350 = arith.negf %349 : vector<8x128xf32>
    %351 = math.exp %350 : vector<8x128xf32>
    %cst_136 = arith.constant 1.000000e+00 : f32
    %352 = vector.broadcast %cst_136 : f32 to vector<8x128xf32>
    %353 = arith.addf %352, %351 : vector<8x128xf32>
    %354 = arith.divf %352, %353 : vector<8x128xf32>
    %355 = math.tanh %349 : vector<8x128xf32>
    %356 = vector.extract_strided_slice %354 {offsets = [0, 0], sizes = [8, 32], strides = [1, 1]} : vector<8x128xf32> to vector<8x32xf32>
    %357 = vector.extract_strided_slice %354 {offsets = [0, 32], sizes = [8, 32], strides = [1, 1]} : vector<8x128xf32> to vector<8x32xf32>
    %358 = vector.extract_strided_slice %355 {offsets = [0, 64], sizes = [8, 32], strides = [1, 1]} : vector<8x128xf32> to vector<8x32xf32>
    %359 = vector.extract_strided_slice %354 {offsets = [0, 96], sizes = [8, 32], strides = [1, 1]} : vector<8x128xf32> to vector<8x32xf32>
    %360 = arith.mulf %357, %290 : vector<8x32xf32>
    %361 = arith.mulf %356, %358 : vector<8x32xf32>
    %362 = arith.addf %360, %361 : vector<8x32xf32>
    %363 = math.tanh %362 : vector<8x32xf32>
    %364 = arith.mulf %359, %363 : vector<8x32xf32>
    %c0_137 = arith.constant 0 : index
    %c0_138 = arith.constant 0 : index
    %365 = vector.load %arg7[%c0_137, %c0_138] : memref<32x128xf32, #tpu.memory_space<vmem>>, vector<32x128xf32>
    %cst_139 = arith.constant dense<0.000000e+00> : vector<8x128xf32>
    %366 = tpu.matmul %364, %365, %cst_139 {dimension_numbers = #tpu.dot_dimension_numbers<[1], [0], [0], [1], [0, 0, 1, 1], [], []>} : vector<8x32xf32>, vector<32x128xf32>, vector<8x128xf32> -> vector<8x128xf32>
    %c0_140 = arith.constant 0 : index
    %c0_141 = arith.constant 0 : index
    %367 = vector.load %arg8[%c0_140, %c0_141] : memref<32x128xf32, #tpu.memory_space<vmem>>, vector<32x128xf32>
    %cst_142 = arith.constant dense<0.000000e+00> : vector<8x128xf32>
    %368 = tpu.matmul %315, %367, %cst_142 {dimension_numbers = #tpu.dot_dimension_numbers<[1], [0], [0], [1], [0, 0, 1, 1], [], []>} : vector<8x32xf32>, vector<32x128xf32>, vector<8x128xf32> -> vector<8x128xf32>
    %369 = arith.addf %366, %368 : vector<8x128xf32>
    %c0_143 = arith.constant 0 : index
    %c0_144 = arith.constant 0 : index
    %370 = vector.load %arg9[%c0_143, %c0_144] : memref<1x128xf32, #tpu.memory_space<vmem>>, vector<1x128xf32>
    %371 = vector.broadcast %370 : vector<1x128xf32> to vector<8x128xf32>
    %372 = arith.addf %369, %371 : vector<8x128xf32>
    %373 = arith.negf %372 : vector<8x128xf32>
    %374 = math.exp %373 : vector<8x128xf32>
    %cst_145 = arith.constant 1.000000e+00 : f32
    %375 = vector.broadcast %cst_145 : f32 to vector<8x128xf32>
    %376 = arith.addf %375, %374 : vector<8x128xf32>
    %377 = arith.divf %375, %376 : vector<8x128xf32>
    %378 = math.tanh %372 : vector<8x128xf32>
    %379 = vector.extract_strided_slice %377 {offsets = [0, 0], sizes = [8, 32], strides = [1, 1]} : vector<8x128xf32> to vector<8x32xf32>
    %380 = vector.extract_strided_slice %377 {offsets = [0, 32], sizes = [8, 32], strides = [1, 1]} : vector<8x128xf32> to vector<8x32xf32>
    %381 = vector.extract_strided_slice %378 {offsets = [0, 64], sizes = [8, 32], strides = [1, 1]} : vector<8x128xf32> to vector<8x32xf32>
    %382 = vector.extract_strided_slice %377 {offsets = [0, 96], sizes = [8, 32], strides = [1, 1]} : vector<8x128xf32> to vector<8x32xf32>
    %383 = arith.mulf %380, %313 : vector<8x32xf32>
    %384 = arith.mulf %379, %381 : vector<8x32xf32>
    %385 = arith.addf %383, %384 : vector<8x32xf32>
    %386 = math.tanh %385 : vector<8x32xf32>
    %387 = arith.mulf %382, %386 : vector<8x32xf32>
    %c0_146 = arith.constant 0 : index
    %c0_147 = arith.constant 0 : index
    %388 = vector.load %arg10[%c0_146, %c0_147] : memref<32x128xf32, #tpu.memory_space<vmem>>, vector<32x128xf32>
    %cst_148 = arith.constant dense<0.000000e+00> : vector<8x128xf32>
    %389 = tpu.matmul %387, %388, %cst_148 {dimension_numbers = #tpu.dot_dimension_numbers<[1], [0], [0], [1], [0, 0, 1, 1], [], []>} : vector<8x32xf32>, vector<32x128xf32>, vector<8x128xf32> -> vector<8x128xf32>
    %c0_149 = arith.constant 0 : index
    %c0_150 = arith.constant 0 : index
    %390 = vector.load %arg11[%c0_149, %c0_150] : memref<1x128xf32, #tpu.memory_space<vmem>>, vector<1x128xf32>
    %391 = vector.broadcast %390 : vector<1x128xf32> to vector<8x128xf32>
    %392 = arith.addf %389, %391 : vector<8x128xf32>
    %c1_151 = arith.constant 1 : index
    %c0_152 = arith.constant 0 : index
    %c0_153 = arith.constant 0 : index
    %393 = vector.load %arg14[%c1_151, %c0_152, %c0_153] : memref<4x8x128xf32, #tpu.memory_space<vmem>>, vector<1x8x128xf32>
    %394 = vector.shape_cast %393 : vector<1x8x128xf32> to vector<8x128xf32>
    %395 = vector.shape_cast %392 : vector<8x128xf32> to vector<1x8x128xf32>
    tpu.vector_store %arg14[%c1_151, %c0_152, %c0_153], %395 {strides = array<i32>} : memref<4x8x128xf32, #tpu.memory_space<vmem>>, vector<1x8x128xf32>,
    %c13_i32_154 = arith.constant 13 : i32
    %396 = vector.broadcast %c13_i32_154 : i32 to vector<8x128xi32>
    %397 = arith.cmpi slt, %262, %396 : vector<8x128xi32>
    %cst_155 = arith.constant 0xFF800000 : f32
    %398 = vector.broadcast %cst_155 : f32 to vector<8x128xf32>
    %399 = arith.select %397, %392, %398 : vector<8x128xi1>, vector<8x128xf32>
    %cst_156 = arith.constant dense<0xFF800000> : vector<8xf32>
    %400 = vector.multi_reduction <maximumf>, %399, %cst_156 [1] : vector<8x128xf32> to vector<8xf32>
    %401 = vector.shape_cast %400 : vector<8xf32> to vector<8x1xf32>
    %402 = vector.broadcast %401 : vector<8x1xf32> to vector<8x128xf32>
    %403 = arith.cmpf oge, %399, %402 : vector<8x128xf32>
    %c128_i32_157 = arith.constant 128 : i32
    %404 = vector.broadcast %c128_i32_157 : i32 to vector<8x128xi32>
    %405 = arith.select %403, %262, %404 : vector<8x128xi1>, vector<8x128xi32>
    %cst_158 = arith.constant dense<2147483647> : vector<8xi32>
    %406 = vector.multi_reduction <minsi>, %405, %cst_158 [1] : vector<8x128xi32> to vector<8xi32>
    %407 = vector.shape_cast %406 : vector<8xi32> to vector<8x1xi32>
    %c2_159 = arith.constant 2 : index
    %408 = memref.load %arg13[%c2_159] : memref<4xi32, #tpu.memory_space<smem>>
    %c0_i32_160 = arith.constant 0 : i32
    %409 = arith.cmpi sgt, %408, %c0_i32_160 : i32
    %c2_161 = arith.constant 2 : index
    %c0_162 = arith.constant 0 : index
    %c0_163 = arith.constant 0 : index
    %410 = vector.load %arg12[%c2_161, %c0_162, %c0_163] : memref<4x8x1xi32, #tpu.memory_space<vmem>>, vector<1x8x1xi32>
    %411 = vector.shape_cast %410 : vector<1x8x1xi32> to vector<8x1xi32>
    %412 = arith.select %409, %411, %407 : vector<8x1xi32>
    %413 = vector.broadcast %412 : vector<8x1xi32> to vector<8x128xi32>
    %414 = arith.cmpi eq, %262, %413 : vector<8x128xi32>
    %415 = arith.extui %414 : vector<8x128xi1> to vector<8x128xi32>
    %416 = arith.sitofp %415 : vector<8x128xi32> to vector<8x128xf32>
    %c0_164 = arith.constant 0 : index
    %c0_165 = arith.constant 0 : index
    %417 = vector.load %arg5[%c0_164, %c0_165] : memref<128x128xf32, #tpu.memory_space<vmem>>, vector<128x128xf32>
    %cst_166 = arith.constant dense<0.000000e+00> : vector<8x128xf32>
    %418 = tpu.matmul %416, %417, %cst_166 {dimension_numbers = #tpu.dot_dimension_numbers<[1], [0], [0], [1], [0, 0, 1, 1], [], []>} : vector<8x128xf32>, vector<128x128xf32>, vector<8x128xf32> -> vector<8x128xf32>
    %c0_167 = arith.constant 0 : index
    %c0_168 = arith.constant 0 : index
    %419 = vector.load %arg6[%c0_167, %c0_168] : memref<32x128xf32, #tpu.memory_space<vmem>>, vector<32x128xf32>
    %cst_169 = arith.constant dense<0.000000e+00> : vector<8x128xf32>
    %420 = tpu.matmul %364, %419, %cst_169 {dimension_numbers = #tpu.dot_dimension_numbers<[1], [0], [0], [1], [0, 0, 1, 1], [], []>} : vector<8x32xf32>, vector<32x128xf32>, vector<8x128xf32> -> vector<8x128xf32>
    %421 = arith.addf %418, %420 : vector<8x128xf32>
    %422 = arith.negf %421 : vector<8x128xf32>
    %423 = math.exp %422 : vector<8x128xf32>
    %cst_170 = arith.constant 1.000000e+00 : f32
    %424 = vector.broadcast %cst_170 : f32 to vector<8x128xf32>
    %425 = arith.addf %424, %423 : vector<8x128xf32>
    %426 = arith.divf %424, %425 : vector<8x128xf32>
    %427 = math.tanh %421 : vector<8x128xf32>
    %428 = vector.extract_strided_slice %426 {offsets = [0, 0], sizes = [8, 32], strides = [1, 1]} : vector<8x128xf32> to vector<8x32xf32>
    %429 = vector.extract_strided_slice %426 {offsets = [0, 32], sizes = [8, 32], strides = [1, 1]} : vector<8x128xf32> to vector<8x32xf32>
    %430 = vector.extract_strided_slice %427 {offsets = [0, 64], sizes = [8, 32], strides = [1, 1]} : vector<8x128xf32> to vector<8x32xf32>
    %431 = vector.extract_strided_slice %426 {offsets = [0, 96], sizes = [8, 32], strides = [1, 1]} : vector<8x128xf32> to vector<8x32xf32>
    %432 = arith.mulf %429, %362 : vector<8x32xf32>
    %433 = arith.mulf %428, %430 : vector<8x32xf32>
    %434 = arith.addf %432, %433 : vector<8x32xf32>
    %435 = math.tanh %434 : vector<8x32xf32>
    %436 = arith.mulf %431, %435 : vector<8x32xf32>
    %c0_171 = arith.constant 0 : index
    %c0_172 = arith.constant 0 : index
    %437 = vector.load %arg7[%c0_171, %c0_172] : memref<32x128xf32, #tpu.memory_space<vmem>>, vector<32x128xf32>
    %cst_173 = arith.constant dense<0.000000e+00> : vector<8x128xf32>
    %438 = tpu.matmul %436, %437, %cst_173 {dimension_numbers = #tpu.dot_dimension_numbers<[1], [0], [0], [1], [0, 0, 1, 1], [], []>} : vector<8x32xf32>, vector<32x128xf32>, vector<8x128xf32> -> vector<8x128xf32>
    %c0_174 = arith.constant 0 : index
    %c0_175 = arith.constant 0 : index
    %439 = vector.load %arg8[%c0_174, %c0_175] : memref<32x128xf32, #tpu.memory_space<vmem>>, vector<32x128xf32>
    %cst_176 = arith.constant dense<0.000000e+00> : vector<8x128xf32>
    %440 = tpu.matmul %387, %439, %cst_176 {dimension_numbers = #tpu.dot_dimension_numbers<[1], [0], [0], [1], [0, 0, 1, 1], [], []>} : vector<8x32xf32>, vector<32x128xf32>, vector<8x128xf32> -> vector<8x128xf32>
    %441 = arith.addf %438, %440 : vector<8x128xf32>
    %c0_177 = arith.constant 0 : index
    %c0_178 = arith.constant 0 : index
    %442 = vector.load %arg9[%c0_177, %c0_178] : memref<1x128xf32, #tpu.memory_space<vmem>>, vector<1x128xf32>
    %443 = vector.broadcast %442 : vector<1x128xf32> to vector<8x128xf32>
    %444 = arith.addf %441, %443 : vector<8x128xf32>
    %445 = arith.negf %444 : vector<8x128xf32>
    %446 = math.exp %445 : vector<8x128xf32>
    %cst_179 = arith.constant 1.000000e+00 : f32
    %447 = vector.broadcast %cst_179 : f32 to vector<8x128xf32>
    %448 = arith.addf %447, %446 : vector<8x128xf32>
    %449 = arith.divf %447, %448 : vector<8x128xf32>
    %450 = math.tanh %444 : vector<8x128xf32>
    %451 = vector.extract_strided_slice %449 {offsets = [0, 0], sizes = [8, 32], strides = [1, 1]} : vector<8x128xf32> to vector<8x32xf32>
    %452 = vector.extract_strided_slice %449 {offsets = [0, 32], sizes = [8, 32], strides = [1, 1]} : vector<8x128xf32> to vector<8x32xf32>
    %453 = vector.extract_strided_slice %450 {offsets = [0, 64], sizes = [8, 32], strides = [1, 1]} : vector<8x128xf32> to vector<8x32xf32>
    %454 = vector.extract_strided_slice %449 {offsets = [0, 96], sizes = [8, 32], strides = [1, 1]} : vector<8x128xf32> to vector<8x32xf32>
    %455 = arith.mulf %452, %385 : vector<8x32xf32>
    %456 = arith.mulf %451, %453 : vector<8x32xf32>
    %457 = arith.addf %455, %456 : vector<8x32xf32>
    %458 = math.tanh %457 : vector<8x32xf32>
    %459 = arith.mulf %454, %458 : vector<8x32xf32>
    %c0_180 = arith.constant 0 : index
    %c0_181 = arith.constant 0 : index
    %460 = vector.load %arg10[%c0_180, %c0_181] : memref<32x128xf32, #tpu.memory_space<vmem>>, vector<32x128xf32>
    %cst_182 = arith.constant dense<0.000000e+00> : vector<8x128xf32>
    %461 = tpu.matmul %459, %460, %cst_182 {dimension_numbers = #tpu.dot_dimension_numbers<[1], [0], [0], [1], [0, 0, 1, 1], [], []>} : vector<8x32xf32>, vector<32x128xf32>, vector<8x128xf32> -> vector<8x128xf32>
    %c0_183 = arith.constant 0 : index
    %c0_184 = arith.constant 0 : index
    %462 = vector.load %arg11[%c0_183, %c0_184] : memref<1x128xf32, #tpu.memory_space<vmem>>, vector<1x128xf32>
    %463 = vector.broadcast %462 : vector<1x128xf32> to vector<8x128xf32>
    %464 = arith.addf %461, %463 : vector<8x128xf32>
    %c2_185 = arith.constant 2 : index
    %c0_186 = arith.constant 0 : index
    %c0_187 = arith.constant 0 : index
    %465 = vector.load %arg14[%c2_185, %c0_186, %c0_187] : memref<4x8x128xf32, #tpu.memory_space<vmem>>, vector<1x8x128xf32>
    %466 = vector.shape_cast %465 : vector<1x8x128xf32> to vector<8x128xf32>
    %467 = vector.shape_cast %464 : vector<8x128xf32> to vector<1x8x128xf32>
    tpu.vector_store %arg14[%c2_185, %c0_186, %c0_187], %467 {strides = array<i32>} : memref<4x8x128xf32, #tpu.memory_space<vmem>>, vector<1x8x128xf32>,
    %c13_i32_188 = arith.constant 13 : i32
    %468 = vector.broadcast %c13_i32_188 : i32 to vector<8x128xi32>
    %469 = arith.cmpi slt, %262, %468 : vector<8x128xi32>
    %cst_189 = arith.constant 0xFF800000 : f32
    %470 = vector.broadcast %cst_189 : f32 to vector<8x128xf32>
    %471 = arith.select %469, %464, %470 : vector<8x128xi1>, vector<8x128xf32>
    %cst_190 = arith.constant dense<0xFF800000> : vector<8xf32>
    %472 = vector.multi_reduction <maximumf>, %471, %cst_190 [1] : vector<8x128xf32> to vector<8xf32>
    %473 = vector.shape_cast %472 : vector<8xf32> to vector<8x1xf32>
    %474 = vector.broadcast %473 : vector<8x1xf32> to vector<8x128xf32>
    %475 = arith.cmpf oge, %471, %474 : vector<8x128xf32>
    %c128_i32_191 = arith.constant 128 : i32
    %476 = vector.broadcast %c128_i32_191 : i32 to vector<8x128xi32>
    %477 = arith.select %475, %262, %476 : vector<8x128xi1>, vector<8x128xi32>
    %cst_192 = arith.constant dense<2147483647> : vector<8xi32>
    %478 = vector.multi_reduction <minsi>, %477, %cst_192 [1] : vector<8x128xi32> to vector<8xi32>
    %479 = vector.shape_cast %478 : vector<8xi32> to vector<8x1xi32>
    %c3_193 = arith.constant 3 : index
    %480 = memref.load %arg13[%c3_193] : memref<4xi32, #tpu.memory_space<smem>>
    %c0_i32_194 = arith.constant 0 : i32
    %481 = arith.cmpi sgt, %480, %c0_i32_194 : i32
    %c3_195 = arith.constant 3 : index
    %c0_196 = arith.constant 0 : index
    %c0_197 = arith.constant 0 : index
    %482 = vector.load %arg12[%c3_195, %c0_196, %c0_197] : memref<4x8x1xi32, #tpu.memory_space<vmem>>, vector<1x8x1xi32>
    %483 = vector.shape_cast %482 : vector<1x8x1xi32> to vector<8x1xi32>
    %484 = arith.select %481, %483, %479 : vector<8x1xi32>
    %485 = vector.broadcast %484 : vector<8x1xi32> to vector<8x128xi32>
    %486 = arith.cmpi eq, %262, %485 : vector<8x128xi32>
    %487 = arith.extui %486 : vector<8x128xi1> to vector<8x128xi32>
    %488 = arith.sitofp %487 : vector<8x128xi32> to vector<8x128xf32>
    %c0_198 = arith.constant 0 : index
    %c0_199 = arith.constant 0 : index
    %489 = vector.load %arg5[%c0_198, %c0_199] : memref<128x128xf32, #tpu.memory_space<vmem>>, vector<128x128xf32>
    %cst_200 = arith.constant dense<0.000000e+00> : vector<8x128xf32>
    %490 = tpu.matmul %488, %489, %cst_200 {dimension_numbers = #tpu.dot_dimension_numbers<[1], [0], [0], [1], [0, 0, 1, 1], [], []>} : vector<8x128xf32>, vector<128x128xf32>, vector<8x128xf32> -> vector<8x128xf32>
    %c0_201 = arith.constant 0 : index
    %c0_202 = arith.constant 0 : index
    %491 = vector.load %arg6[%c0_201, %c0_202] : memref<32x128xf32, #tpu.memory_space<vmem>>, vector<32x128xf32>
    %cst_203 = arith.constant dense<0.000000e+00> : vector<8x128xf32>
    %492 = tpu.matmul %436, %491, %cst_203 {dimension_numbers = #tpu.dot_dimension_numbers<[1], [0], [0], [1], [0, 0, 1, 1], [], []>} : vector<8x32xf32>, vector<32x128xf32>, vector<8x128xf32> -> vector<8x128xf32>
    %493 = arith.addf %490, %492 : vector<8x128xf32>
    %494 = arith.negf %493 : vector<8x128xf32>
    %495 = math.exp %494 : vector<8x128xf32>
    %cst_204 = arith.constant 1.000000e+00 : f32
    %496 = vector.broadcast %cst_204 : f32 to vector<8x128xf32>
    %497 = arith.addf %496, %495 : vector<8x128xf32>
    %498 = arith.divf %496, %497 : vector<8x128xf32>
    %499 = math.tanh %493 : vector<8x128xf32>
    %500 = vector.extract_strided_slice %498 {offsets = [0, 0], sizes = [8, 32], strides = [1, 1]} : vector<8x128xf32> to vector<8x32xf32>
    %501 = vector.extract_strided_slice %498 {offsets = [0, 32], sizes = [8, 32], strides = [1, 1]} : vector<8x128xf32> to vector<8x32xf32>
    %502 = vector.extract_strided_slice %499 {offsets = [0, 64], sizes = [8, 32], strides = [1, 1]} : vector<8x128xf32> to vector<8x32xf32>
    %503 = vector.extract_strided_slice %498 {offsets = [0, 96], sizes = [8, 32], strides = [1, 1]} : vector<8x128xf32> to vector<8x32xf32>
    %504 = arith.mulf %501, %434 : vector<8x32xf32>
    %505 = arith.mulf %500, %502 : vector<8x32xf32>
    %506 = arith.addf %504, %505 : vector<8x32xf32>
    %507 = math.tanh %506 : vector<8x32xf32>
    %508 = arith.mulf %503, %507 : vector<8x32xf32>
    %c0_205 = arith.constant 0 : index
    %c0_206 = arith.constant 0 : index
    %509 = vector.load %arg7[%c0_205, %c0_206] : memref<32x128xf32, #tpu.memory_space<vmem>>, vector<32x128xf32>
    %cst_207 = arith.constant dense<0.000000e+00> : vector<8x128xf32>
    %510 = tpu.matmul %508, %509, %cst_207 {dimension_numbers = #tpu.dot_dimension_numbers<[1], [0], [0], [1], [0, 0, 1, 1], [], []>} : vector<8x32xf32>, vector<32x128xf32>, vector<8x128xf32> -> vector<8x128xf32>
    %c0_208 = arith.constant 0 : index
    %c0_209 = arith.constant 0 : index
    %511 = vector.load %arg8[%c0_208, %c0_209] : memref<32x128xf32, #tpu.memory_space<vmem>>, vector<32x128xf32>
    %cst_210 = arith.constant dense<0.000000e+00> : vector<8x128xf32>
    %512 = tpu.matmul %459, %511, %cst_210 {dimension_numbers = #tpu.dot_dimension_numbers<[1], [0], [0], [1], [0, 0, 1, 1], [], []>} : vector<8x32xf32>, vector<32x128xf32>, vector<8x128xf32> -> vector<8x128xf32>
    %513 = arith.addf %510, %512 : vector<8x128xf32>
    %c0_211 = arith.constant 0 : index
    %c0_212 = arith.constant 0 : index
    %514 = vector.load %arg9[%c0_211, %c0_212] : memref<1x128xf32, #tpu.memory_space<vmem>>, vector<1x128xf32>
    %515 = vector.broadcast %514 : vector<1x128xf32> to vector<8x128xf32>
    %516 = arith.addf %513, %515 : vector<8x128xf32>
    %517 = arith.negf %516 : vector<8x128xf32>
    %518 = math.exp %517 : vector<8x128xf32>
    %cst_213 = arith.constant 1.000000e+00 : f32
    %519 = vector.broadcast %cst_213 : f32 to vector<8x128xf32>
    %520 = arith.addf %519, %518 : vector<8x128xf32>
    %521 = arith.divf %519, %520 : vector<8x128xf32>
    %522 = math.tanh %516 : vector<8x128xf32>
    %523 = vector.extract_strided_slice %521 {offsets = [0, 0], sizes = [8, 32], strides = [1, 1]} : vector<8x128xf32> to vector<8x32xf32>
    %524 = vector.extract_strided_slice %521 {offsets = [0, 32], sizes = [8, 32], strides = [1, 1]} : vector<8x128xf32> to vector<8x32xf32>
    %525 = vector.extract_strided_slice %522 {offsets = [0, 64], sizes = [8, 32], strides = [1, 1]} : vector<8x128xf32> to vector<8x32xf32>
    %526 = vector.extract_strided_slice %521 {offsets = [0, 96], sizes = [8, 32], strides = [1, 1]} : vector<8x128xf32> to vector<8x32xf32>
    %527 = arith.mulf %524, %457 : vector<8x32xf32>
    %528 = arith.mulf %523, %525 : vector<8x32xf32>
    %529 = arith.addf %527, %528 : vector<8x32xf32>
    %530 = math.tanh %529 : vector<8x32xf32>
    %531 = arith.mulf %526, %530 : vector<8x32xf32>
    %c0_214 = arith.constant 0 : index
    %c0_215 = arith.constant 0 : index
    %532 = vector.load %arg10[%c0_214, %c0_215] : memref<32x128xf32, #tpu.memory_space<vmem>>, vector<32x128xf32>
    %cst_216 = arith.constant dense<0.000000e+00> : vector<8x128xf32>
    %533 = tpu.matmul %531, %532, %cst_216 {dimension_numbers = #tpu.dot_dimension_numbers<[1], [0], [0], [1], [0, 0, 1, 1], [], []>} : vector<8x32xf32>, vector<32x128xf32>, vector<8x128xf32> -> vector<8x128xf32>
    %c0_217 = arith.constant 0 : index
    %c0_218 = arith.constant 0 : index
    %534 = vector.load %arg11[%c0_217, %c0_218] : memref<1x128xf32, #tpu.memory_space<vmem>>, vector<1x128xf32>
    %535 = vector.broadcast %534 : vector<1x128xf32> to vector<8x128xf32>
    %536 = arith.addf %533, %535 : vector<8x128xf32>
    %c3_219 = arith.constant 3 : index
    %c0_220 = arith.constant 0 : index
    %c0_221 = arith.constant 0 : index
    %537 = vector.load %arg14[%c3_219, %c0_220, %c0_221] : memref<4x8x128xf32, #tpu.memory_space<vmem>>, vector<1x8x128xf32>
    %538 = vector.shape_cast %537 : vector<1x8x128xf32> to vector<8x128xf32>
    %539 = vector.shape_cast %536 : vector<8x128xf32> to vector<1x8x128xf32>
    tpu.vector_store %arg14[%c3_219, %c0_220, %c0_221], %539 {strides = array<i32>} : memref<4x8x128xf32, #tpu.memory_space<vmem>>, vector<1x8x128xf32>,
    return
  }
}

</mosaic_0001>

<llo_original>
// kernel: _seq2seq_impl.1
$region0: #{_seq2seq_impl.1}
  #allocation0 [shape = 'u32[]', space=smem, size = 0x4, offset = 0x4, fixed_abs, tag = 'smem constant byte address 0x4 - core index']
  #allocation1 [shape = 'u32[144,128]{1,0:T(1,128)}', space=vmem, size = 0x12000, scoped, tag = 'internal scratch']
  %s0 = inlined_call_operand.vmem [shape: f32[6,8,128], index: 0, kind: input, shape index: {}]
  %s1 = inlined_call_operand.vmem [shape: f32[32,128], index: 1, kind: input, shape index: {}]
  %s2 = inlined_call_operand.vmem [shape: f32[32,128], index: 2, kind: input, shape index: {}]
  %s3 = inlined_call_operand.vmem [shape: f32[32,128], index: 3, kind: input, shape index: {}]
  %s4 = inlined_call_operand.vmem [shape: f32[1,128], index: 4, kind: input, shape index: {}]
  %s5 = inlined_call_operand.vmem [shape: f32[128,128], index: 5, kind: input, shape index: {}]
  %s6 = inlined_call_operand.vmem [shape: f32[32,128], index: 6, kind: input, shape index: {}]
  %s7 = inlined_call_operand.vmem [shape: f32[32,128], index: 7, kind: input, shape index: {}]
  %s8 = inlined_call_operand.vmem [shape: f32[32,128], index: 8, kind: input, shape index: {}]
  %s9 = inlined_call_operand.vmem [shape: f32[1,128], index: 9, kind: input, shape index: {}]
  %s10 = inlined_call_operand.vmem [shape: f32[32,128], index: 10, kind: input, shape index: {}]
  %s11 = inlined_call_operand.vmem [shape: f32[1,128], index: 11, kind: input, shape index: {}]
  %s12 = inlined_call_operand.vmem [shape: s32[4,8,1], index: 12, kind: input, shape index: {}]
  %s13 = inlined_call_operand.vmem [shape: s32[4], index: 13, kind: input, shape index: {}]
  %s14 = inlined_call_operand.vmem [shape: f32[4,8,128], index: 14, kind: output, shape index: {}]
  %s15 = sld [smem:[#allocation0]]
  $region70: #{_seq2seq_impl.1} parent=0
    _
  %s17 = ssub.s32 1, %s15
  %s18 = scalar_select 0, %s17, %s15
  $region1: #{_seq2seq_impl.1} parent=0
    #allocation2 [shape = 'u8[512]{0}', space=smem, size = 0x200, scoped, tag = 'input window, operand 13, single buffered']
    #allocation3 [shape = 's32[1]{0}', space=sflag, size = 0x4, scoped, tag = 'scoped memory for _seq2seq_impl.1']
    %19 = vsyncpa [#allocation3], 0
    // Predicated region
    $region2: #{_seq2seq_impl.1} parent=1 // pred_check
      _
    $region3: #{_seq2seq_impl.1} parent=1 // pred_check_branch
      %21 = sbr.rel (0) target = $region5
    $region4: #{_seq2seq_impl.1} parent=1 // pred_region
      _
    $region5: #{_seq2seq_impl.1} parent=1 // pred_fallthru
      _
    // Predicated region
    $region6: #{_seq2seq_impl.1} parent=1 // pred_check
      _
    $region7: #{_seq2seq_impl.1} parent=1 // pred_check_branch
      %23 = sbr.rel (0) target = $region9
    $region8: #{_seq2seq_impl.1} parent=1 // pred_region
      _
    $region9: #{_seq2seq_impl.1} parent=1 // pred_fallthru
      _
    // Predicated region
    $region10: #{_seq2seq_impl.1} parent=1 // pred_check
      _
    $region11: #{_seq2seq_impl.1} parent=1 // pred_check_branch
      %25 = sbr.rel (0) target = $region13
    $region12: #{_seq2seq_impl.1} parent=1 // pred_region
      _
    $region13: #{_seq2seq_impl.1} parent=1 // pred_fallthru
      _
    // Predicated region
    $region14: #{_seq2seq_impl.1} parent=1 // pred_check
      _
    $region15: #{_seq2seq_impl.1} parent=1 // pred_check_branch
      %27 = sbr.rel (0) target = $region17
    $region16: #{_seq2seq_impl.1} parent=1 // pred_region
      _
    $region17: #{_seq2seq_impl.1} parent=1 // pred_fallthru
      _
    // Predicated region
    $region18: #{_seq2seq_impl.1} parent=1 // pred_check
      _
    $region19: #{_seq2seq_impl.1} parent=1 // pred_check_branch
      %29 = sbr.rel (0) target = $region21
    $region20: #{_seq2seq_impl.1} parent=1 // pred_region
      _
    $region21: #{_seq2seq_impl.1} parent=1 // pred_fallthru
      _
    // Predicated region
    $region22: #{_seq2seq_impl.1} parent=1 // pred_check
      _
    $region23: #{_seq2seq_impl.1} parent=1 // pred_check_branch
      %31 = sbr.rel (0) target = $region25
    $region24: #{_seq2seq_impl.1} parent=1 // pred_region
      _
    $region25: #{_seq2seq_impl.1} parent=1 // pred_fallthru
      _
    // Predicated region
    $region26: #{_seq2seq_impl.1} parent=1 // pred_check
      _
    $region27: #{_seq2seq_impl.1} parent=1 // pred_check_branch
      %33 = sbr.rel (0) target = $region29
    $region28: #{_seq2seq_impl.1} parent=1 // pred_region
      _
    $region29: #{_seq2seq_impl.1} parent=1 // pred_fallthru
      _
    // Predicated region
    $region30: #{_seq2seq_impl.1} parent=1 // pred_check
      _
    $region31: #{_seq2seq_impl.1} parent=1 // pred_check_branch
      %35 = sbr.rel (0) target = $region33
    $region32: #{_seq2seq_impl.1} parent=1 // pred_region
      _
    $region33: #{_seq2seq_impl.1} parent=1 // pred_fallthru
      _
    // Predicated region
    $region34: #{_seq2seq_impl.1} parent=1 // pred_check
      _
    $region35: #{_seq2seq_impl.1} parent=1 // pred_check_branch
      %37 = sbr.rel (0) target = $region37
    $region36: #{_seq2seq_impl.1} parent=1 // pred_region
      _
    $region37: #{_seq2seq_impl.1} parent=1 // pred_fallthru
      _
    // Predicated region
    $region38: #{_seq2seq_impl.1} parent=1 // pred_check
      _
    $region39: #{_seq2seq_impl.1} parent=1 // pred_check_branch
      %39 = sbr.rel (0) target = $region41
    $region40: #{_seq2seq_impl.1} parent=1 // pred_region
      _
    $region41: #{_seq2seq_impl.1} parent=1 // pred_fallthru
      _
    // Predicated region
    $region42: #{_seq2seq_impl.1} parent=1 // pred_check
      _
    $region43: #{_seq2seq_impl.1} parent=1 // pred_check_branch
      %41 = sbr.rel (0) target = $region45
    $region44: #{_seq2seq_impl.1} parent=1 // pred_region
      _
    $region45: #{_seq2seq_impl.1} parent=1 // pred_fallthru
      _
    // Predicated region
    $region46: #{_seq2seq_impl.1} parent=1 // pred_check
      _
    $region47: #{_seq2seq_impl.1} parent=1 // pred_check_branch
      %43 = sbr.rel (0) target = $region49
    $region48: #{_seq2seq_impl.1} parent=1 // pred_region
      _
    $region49: #{_seq2seq_impl.1} parent=1 // pred_fallthru
      _
    // Predicated region
    $region50: #{_seq2seq_impl.1} parent=1 // pred_check
      _
    $region51: #{_seq2seq_impl.1} parent=1 // pred_check_branch
      %45 = sbr.rel (0) target = $region53
    $region52: #{_seq2seq_impl.1} parent=1 // pred_region
      _
    $region53: #{_seq2seq_impl.1} parent=1 // pred_fallthru
      _
    // Predicated region
    $region54: #{_seq2seq_impl.1} parent=1 // pred_check
      _
    $region55: #{_seq2seq_impl.1} parent=1 // pred_check_branch
      %47 = sbr.rel (0) target = $region57
    $region56: #{_seq2seq_impl.1} parent=1 // pred_region
      %s49 = ssub.s32 16, 16
      %50 = vsyncadd [#allocation3], %s49
      %s52 = sshll.u32 %s13, 4
      %s53 = int_to_ptr.vmem [resolvable:$true] %s52
      %55 = dma.vmem_to_smem %s53, 16, [#allocation2], [#allocation3]
    $region57: #{_seq2seq_impl.1} parent=1 // pred_fallthru
      _
    // Predicated region
    $region58: #{_seq2seq_impl.1} parent=1 // pred_check
      _
    $region59: #{_seq2seq_impl.1} parent=1 // pred_check_branch
      %57 = sbr.rel (0) target = $region61
    $region60: #{_seq2seq_impl.1} parent=1 // pred_region
      %58 = dma.done [#allocation3], 16
    $region61: #{_seq2seq_impl.1} parent=1 // pred_fallthru
      _
    %59 = sfence
    %v60 = vld [vmem:[%s0] sm:$0xff]
    %v61 = vld [vmem:[%s1] sm:$0xff]
    %v62 = vld [vmem:[%s1 + $0x8] sm:$0xff]
    %v63 = vld [vmem:[%s1 + $0x10] sm:$0xff]
    %v64 = vld [vmem:[%s1 + $0x18] sm:$0xff]
    %vm65 = vcmask 261120
    %v67 = vsel %vm65, 0.0, 0
    %69 = vmatprep.subr.mxu0 0.0
    %70 = vmatpush1.msra.mxu0 0.0
    %71 = vmatprep.subr.mxu0 0.0
    %72 = vmatpush1.msra.mxu0 0.0
    %73 = vmatprep.subr.mxu0 0.0
    %74 = vmatpush1.msra.mxu0 0.0
    %75 = vmatprep.subr.mxu0 0.0
    %76 = vmatpush1.msra.mxu0 0.0
    %77 = vmatprep.subr.mxu0 0.0
    %78 = vmatpush1.msra.mxu0 0.0
    %79 = vmatprep.subr.mxu0 0.0
    %80 = vmatpush1.msra.mxu0 0.0
    %81 = vmatprep.subr.mxu0 0.0
    %82 = vmatpush1.msra.mxu0 0.0
    %83 = vmatprep.subr.mxu0 0.0
    %84 = vmatpush1.msra.mxu0 0.0
    %85 = vmatprep.subr.mxu0 0.0
    %86 = vmatpush1.msra.mxu0 0.0
    %87 = vmatprep.subr.mxu0 0.0
    %88 = vmatpush1.msra.mxu0 0.0
    %89 = vmatprep.subr.mxu0 0.0
    %90 = vmatpush1.msra.mxu0 0.0
    %91 = vmatprep.subr.mxu0 0.0
    %92 = vmatpush1.msra.mxu0 0.0
    %93 = vmatprep.subr.mxu0 0.0
    %94 = vmatpush1.msra.mxu0 %v64
    %95 = vmatprep.subr.mxu0 0.0
    %96 = vmatpush1.msra.mxu0 %v63
    %97 = vmatprep.subr.mxu0 0.0
    %98 = vmatpush1.msra.mxu0 %v62
    %99 = vmatprep.subr.mxu0 0.0
    %100 = vmatpush1.msra.mxu0 %v61
    %101 = vmatprep.subr.mxu0 0.0
    %102 = vmatpush2.msra.mxu0 0.0
    %103 = vmatprep.subr.mxu0 0.0
    %104 = vmatpush2.msra.mxu0 0.0
    %105 = vmatprep.subr.mxu0 0.0
    %106 = vmatpush2.msra.mxu0 0.0
    %107 = vmatprep.subr.mxu0 0.0
    %108 = vmatpush2.msra.mxu0 0.0
    %109 = vmatprep.subr.mxu0 0.0
    %110 = vmatpush2.msra.mxu0 0.0
    %111 = vmatprep.subr.mxu0 0.0
    %112 = vmatpush2.msra.mxu0 0.0
    %113 = vmatprep.subr.mxu0 0.0
    %114 = vmatpush2.msra.mxu0 0.0
    %115 = vmatprep.subr.mxu0 0.0
    %116 = vmatpush2.msra.mxu0 0.0
    %117 = vmatprep.subr.mxu0 0.0
    %118 = vmatpush2.msra.mxu0 0.0
    %119 = vmatprep.subr.mxu0 0.0
    %120 = vmatpush2.msra.mxu0 0.0
    %121 = vmatprep.subr.mxu0 0.0
    %122 = vmatpush2.msra.mxu0 0.0
    %123 = vmatprep.subr.mxu0 0.0
    %124 = vmatpush2.msra.mxu0 0.0
    %125 = vmatprep.subr.mxu0 0.0
    %126 = vmatpush2.msra.mxu0 0.0
    %127 = vmatprep.subr.mxu0 0.0
    %128 = vmatpush2.msra.mxu0 0.0
    %129 = vmatprep.subr.mxu0 0.0
    %130 = vmatpush2.msra.mxu0 0.0
    %131 = vmatprep.subr.mxu0 0.0
    %132 = vmatpush2.msra.mxu0 0.0
    %133 = vmatprep.mubr.f32.mxu0 0.0
    %134 = vmatmul.mubr.f32.gmra.mxu0 %v67
    %v135 = vpop.f32.mrf.mxu0
    %v136 = vadd.f32 0.0, %v135
    %v137 = vpop.f32.mrf.mxu0
    %138 = vdwg.mxu0
    %v139 = vadd.f32 %v60, %v136
    %v140 = vxor.u32 %v139, 2147483648
    %v141 = vmul.f32 %v140, 1.442695
    %v142 = vpow.pop %v141
    %v143 = vadd.f32 %v142, 1.0
    %v144 = vrcp.pop %v143
    %v145 = vmul.f32 1.0, %v144
    %v146 = vtanh.pop %v139
    %v147 = vmul.f32 %v145, 0.0
    %149 = vrot.lane.b32.xlu0 %v146, 64
    %v150 = vpop.permute.xlu0 %149
    %v152 = vmul.f32 %v145, %v150
    %154 = vrot.lane.b32.xlu0 %v152, 32
    %v155 = vpop.permute.xlu0 %154
    %v157 = vadd.f32 %v147, %v155
    %v158 = vtanh.pop %v157
    %160 = vrot.lane.b32.xlu0 %v158, 64
    %v161 = vpop.permute.xlu0 %160
    %v163 = vmul.f32 %v145, %v161
    %v164 = vld [vmem:[%s2] sm:$0xff]
    %v165 = vld [vmem:[%s2 + $0x8] sm:$0xff]
    %v166 = vld [vmem:[%s2 + $0x10] sm:$0xff]
    %v167 = vld [vmem:[%s2 + $0x18] sm:$0xff]
    %v168 = vld [vmem:[%s3] sm:$0xff]
    %v169 = vld [vmem:[%s3 + $0x8] sm:$0xff]
    %v170 = vld [vmem:[%s3 + $0x10] sm:$0xff]
    %v171 = vld [vmem:[%s3 + $0x18] sm:$0xff]
    %172 = vmatprep.subr.mxu0 0.0
    %173 = vmatpush1.msra.mxu0 0.0
    %174 = vmatprep.subr.mxu0 0.0
    %175 = vmatpush1.msra.mxu0 0.0
    %176 = vmatprep.subr.mxu0 0.0
    %177 = vmatpush1.msra.mxu0 0.0
    %178 = vmatprep.subr.mxu0 0.0
    %179 = vmatpush1.msra.mxu0 0.0
    %180 = vmatprep.subr.mxu0 0.0
    %181 = vmatpush1.msra.mxu0 0.0
    %182 = vmatprep.subr.mxu0 0.0
    %183 = vmatpush1.msra.mxu0 0.0
    %184 = vmatprep.subr.mxu0 0.0
    %185 = vmatpush1.msra.mxu0 0.0
    %186 = vmatprep.subr.mxu0 0.0
    %187 = vmatpush1.msra.mxu0 0.0
    %188 = vmatprep.subr.mxu0 0.0
    %189 = vmatpush1.msra.mxu0 0.0
    %190 = vmatprep.subr.mxu0 0.0
    %191 = vmatpush1.msra.mxu0 0.0
    %192 = vmatprep.subr.mxu0 0.0
    %193 = vmatpush1.msra.mxu0 0.0
    %194 = vmatprep.subr.mxu0 0.0
    %195 = vmatpush1.msra.mxu0 0.0
    %196 = vmatprep.subr.mxu0 0.0
    %197 = vmatpush1.msra.mxu0 %v171
    %198 = vmatprep.subr.mxu0 0.0
    %199 = vmatpush1.msra.mxu0 %v170
    %200 = vmatprep.subr.mxu0 0.0
    %201 = vmatpush1.msra.mxu0 %v169
    %202 = vmatprep.subr.mxu0 0.0
    %203 = vmatpush1.msra.mxu0 %v168
    %204 = vmatprep.subr.mxu0 0.0
    %205 = vmatpush2.msra.mxu0 0.0
    %206 = vmatprep.subr.mxu0 0.0
    %207 = vmatpush2.msra.mxu0 0.0
    %208 = vmatprep.subr.mxu0 0.0
    %209 = vmatpush2.msra.mxu0 0.0
    %210 = vmatprep.subr.mxu0 0.0
    %211 = vmatpush2.msra.mxu0 0.0
    %212 = vmatprep.subr.mxu0 0.0
    %213 = vmatpush2.msra.mxu0 0.0
    %214 = vmatprep.subr.mxu0 0.0
    %215 = vmatpush2.msra.mxu0 0.0
    %216 = vmatprep.subr.mxu0 0.0
    %217 = vmatpush2.msra.mxu0 0.0
    %218 = vmatprep.subr.mxu0 0.0
    %219 = vmatpush2.msra.mxu0 0.0
    %220 = vmatprep.subr.mxu0 0.0
    %221 = vmatpush2.msra.mxu0 0.0
    %222 = vmatprep.subr.mxu0 0.0
    %223 = vmatpush2.msra.mxu0 0.0
    %224 = vmatprep.subr.mxu0 0.0
    %225 = vmatpush2.msra.mxu0 0.0
    %226 = vmatprep.subr.mxu0 0.0
    %227 = vmatpush2.msra.mxu0 0.0
    %228 = vmatprep.subr.mxu0 0.0
    %229 = vmatpush2.msra.mxu0 0.0
    %230 = vmatprep.subr.mxu0 0.0
    %231 = vmatpush2.msra.mxu0 0.0
    %232 = vmatprep.subr.mxu0 0.0
    %233 = vmatpush2.msra.mxu0 0.0
    %234 = vmatprep.subr.mxu0 0.0
    %235 = vmatpush2.msra.mxu0 0.0
    %236 = vmatprep.mubr.f32.mxu0 0.0
    %237 = vmatmul.mubr.f32.gmra.mxu0 %v67
    %v238 = vpop.f32.mrf.mxu0
    %v239 = vadd.f32 0.0, %v238
    %v240 = vpop.f32.mrf.mxu0
    %241 = vdwg.mxu0
    %243 = vrot.lane.b32.xlu0 %v163, 32
    %v244 = vpop.permute.xlu0 %243
    %v245 = vsel %vm65, %v244, 0
    %247 = vmatprep.subr.mxu0 0.0
    %248 = vmatpush1.msra.mxu0 0.0
    %249 = vmatprep.subr.mxu0 0.0
    %250 = vmatpush1.msra.mxu0 0.0
    %251 = vmatprep.subr.mxu0 0.0
    %252 = vmatpush1.msra.mxu0 0.0
    %253 = vmatprep.subr.mxu0 0.0
    %254 = vmatpush1.msra.mxu0 0.0
    %255 = vmatprep.subr.mxu0 0.0
    %256 = vmatpush1.msra.mxu0 0.0
    %257 = vmatprep.subr.mxu0 0.0
    %258 = vmatpush1.msra.mxu0 0.0
    %259 = vmatprep.subr.mxu0 0.0
    %260 = vmatpush1.msra.mxu0 0.0
    %261 = vmatprep.subr.mxu0 0.0
    %262 = vmatpush1.msra.mxu0 0.0
    %263 = vmatprep.subr.mxu0 0.0
    %264 = vmatpush1.msra.mxu0 0.0
    %265 = vmatprep.subr.mxu0 0.0
    %266 = vmatpush1.msra.mxu0 0.0
    %267 = vmatprep.subr.mxu0 0.0
    %268 = vmatpush1.msra.mxu0 0.0
    %269 = vmatprep.subr.mxu0 0.0
    %270 = vmatpush1.msra.mxu0 0.0
    %271 = vmatprep.subr.mxu0 0.0
    %272 = vmatpush1.msra.mxu0 %v167
    %273 = vmatprep.subr.mxu0 0.0
    %274 = vmatpush1.msra.mxu0 %v166
    %275 = vmatprep.subr.mxu0 0.0
    %276 = vmatpush1.msra.mxu0 %v165
    %277 = vmatprep.subr.mxu0 0.0
    %278 = vmatpush1.msra.mxu0 %v164
    %279 = vmatprep.subr.mxu0 0.0
    %280 = vmatpush2.msra.mxu0 0.0
    %281 = vmatprep.subr.mxu0 0.0
    %282 = vmatpush2.msra.mxu0 0.0
    %283 = vmatprep.subr.mxu0 0.0
    %284 = vmatpush2.msra.mxu0 0.0
    %285 = vmatprep.subr.mxu0 0.0
    %286 = vmatpush2.msra.mxu0 0.0
    %287 = vmatprep.subr.mxu0 0.0
    %288 = vmatpush2.msra.mxu0 0.0
    %289 = vmatprep.subr.mxu0 0.0
    %290 = vmatpush2.msra.mxu0 0.0
    %291 = vmatprep.subr.mxu0 0.0
    %292 = vmatpush2.msra.mxu0 0.0
    %293 = vmatprep.subr.mxu0 0.0
    %294 = vmatpush2.msra.mxu0 0.0
    %295 = vmatprep.subr.mxu0 0.0
    %296 = vmatpush2.msra.mxu0 0.0
    %297 = vmatprep.subr.mxu0 0.0
    %298 = vmatpush2.msra.mxu0 0.0
    %299 = vmatprep.subr.mxu0 0.0
    %300 = vmatpush2.msra.mxu0 0.0
    %301 = vmatprep.subr.mxu0 0.0
    %302 = vmatpush2.msra.mxu0 0.0
    %303 = vmatprep.subr.mxu0 0.0
    %304 = vmatpush2.msra.mxu0 0.0
    %305 = vmatprep.subr.mxu0 0.0
    %306 = vmatpush2.msra.mxu0 0.0
    %307 = vmatprep.subr.mxu0 0.0
    %308 = vmatpush2.msra.mxu0 0.0
    %309 = vmatprep.subr.mxu0 0.0
    %310 = vmatpush2.msra.mxu0 0.0
    %311 = vmatprep.mubr.f32.mxu0 0.0
    %312 = vmatmul.mubr.f32.gmra.mxu0 %v245
    %v313 = vpop.f32.mrf.mxu0
    %v314 = vadd.f32 %v239, %v313
    %v315 = vpop.f32.mrf.mxu0
    %316 = vdwg.mxu0
    %v317 = vld [vmem:[%s4] sm:$0x1]
    %v319 = vlaneseq
    %v320 = vshrl.u32 %v319, 7
    %v321 = vsub.s32 0, %v320
    %v322 = vrot.slane %v317, %v321
    %v324 = vadd.f32 %v314, %v322
    %v325 = vxor.u32 %v324, 2147483648
    %v326 = vmul.f32 %v325, 1.442695
    %v327 = vpow.pop %v326
    %v328 = vadd.f32 %v327, 1.0
    %v329 = vrcp.pop %v328
    %v330 = vmul.f32 1.0, %v329
    %v331 = vtanh.pop %v324
    %v332 = vmul.f32 %v330, 0.0
    %334 = vrot.lane.b32.xlu0 %v331, 64
    %v335 = vpop.permute.xlu0 %334
    %v337 = vmul.f32 %v330, %v335
    %339 = vrot.lane.b32.xlu0 %v337, 32
    %v340 = vpop.permute.xlu0 %339
    %v342 = vadd.f32 %v332, %v340
    %v343 = vtanh.pop %v342
    %345 = vrot.lane.b32.xlu0 %v343, 64
    %v346 = vpop.permute.xlu0 %345
    %v348 = vmul.f32 %v330, %v346
    %s349 = scalar_lea.vmem %s0, 8
    %v350 = vld [vmem:[%s349] sm:$0xff]
    %351 = vmatprep.subr.mxu0 0.0
    %352 = vmatpush1.msra.mxu0 0.0
    %353 = vmatprep.subr.mxu0 0.0
    %354 = vmatpush1.msra.mxu0 0.0
    %355 = vmatprep.subr.mxu0 0.0
    %356 = vmatpush1.msra.mxu0 0.0
    %357 = vmatprep.subr.mxu0 0.0
    %358 = vmatpush1.msra.mxu0 0.0
    %359 = vmatprep.subr.mxu0 0.0
    %360 = vmatpush1.msra.mxu0 0.0
    %361 = vmatprep.subr.mxu0 0.0
    %362 = vmatpush1.msra.mxu0 0.0
    %363 = vmatprep.subr.mxu0 0.0
    %364 = vmatpush1.msra.mxu0 0.0
    %365 = vmatprep.subr.mxu0 0.0
    %366 = vmatpush1.msra.mxu0 0.0
    %367 = vmatprep.subr.mxu0 0.0
    %368 = vmatpush1.msra.mxu0 0.0
    %369 = vmatprep.subr.mxu0 0.0
    %370 = vmatpush1.msra.mxu0 0.0
    %371 = vmatprep.subr.mxu0 0.0
    %372 = vmatpush1.msra.mxu0 0.0
    %373 = vmatprep.subr.mxu0 0.0
    %374 = vmatpush1.msra.mxu0 0.0
    %375 = vmatprep.subr.mxu0 0.0
    %376 = vmatpush1.msra.mxu0 %v64
    %377 = vmatprep.subr.mxu0 0.0
    %378 = vmatpush1.msra.mxu0 %v63
    %379 = vmatprep.subr.mxu0 0.0
    %380 = vmatpush1.msra.mxu0 %v62
    %381 = vmatprep.subr.mxu0 0.0
    %382 = vmatpush1.msra.mxu0 %v61
    %383 = vmatprep.subr.mxu0 0.0
    %384 = vmatpush2.msra.mxu0 0.0
    %385 = vmatprep.subr.mxu0 0.0
    %386 = vmatpush2.msra.mxu0 0.0
    %387 = vmatprep.subr.mxu0 0.0
    %388 = vmatpush2.msra.mxu0 0.0
    %389 = vmatprep.subr.mxu0 0.0
    %390 = vmatpush2.msra.mxu0 0.0
    %391 = vmatprep.subr.mxu0 0.0
    %392 = vmatpush2.msra.mxu0 0.0
    %393 = vmatprep.subr.mxu0 0.0
    %394 = vmatpush2.msra.mxu0 0.0
    %395 = vmatprep.subr.mxu0 0.0
    %396 = vmatpush2.msra.mxu0 0.0
    %397 = vmatprep.subr.mxu0 0.0
    %398 = vmatpush2.msra.mxu0 0.0
    %399 = vmatprep.subr.mxu0 0.0
    %400 = vmatpush2.msra.mxu0 0.0
    %401 = vmatprep.subr.mxu0 0.0
    %402 = vmatpush2.msra.mxu0 0.0
    %403 = vmatprep.subr.mxu0 0.0
    %404 = vmatpush2.msra.mxu0 0.0
    %405 = vmatprep.subr.mxu0 0.0
    %406 = vmatpush2.msra.mxu0 0.0
    %407 = vmatprep.subr.mxu0 0.0
    %408 = vmatpush2.msra.mxu0 0.0
    %409 = vmatprep.subr.mxu0 0.0
    %410 = vmatpush2.msra.mxu0 0.0
    %411 = vmatprep.subr.mxu0 0.0
    %412 = vmatpush2.msra.mxu0 0.0
    %413 = vmatprep.subr.mxu0 0.0
    %414 = vmatpush2.msra.mxu0 0.0
    %415 = vmatprep.mubr.f32.mxu0 0.0
    %416 = vmatmul.mubr.f32.gmra.mxu0 %v245
    %v417 = vpop.f32.mrf.mxu0
    %v418 = vadd.f32 0.0, %v417
    %v419 = vpop.f32.mrf.mxu0
    %420 = vdwg.mxu0
    %v421 = vadd.f32 %v350, %v418
    %v422 = vxor.u32 %v421, 2147483648
    %v423 = vmul.f32 %v422, 1.442695
    %v424 = vpow.pop %v423
    %v425 = vadd.f32 %v424, 1.0
    %v426 = vrcp.pop %v425
    %v427 = vmul.f32 1.0, %v426
    %v428 = vtanh.pop %v421
    %v429 = vmul.f32 %v427, %v157
    %431 = vrot.lane.b32.xlu0 %v428, 64
    %v432 = vpop.permute.xlu0 %431
    %v434 = vmul.f32 %v427, %v432
    %436 = vrot.lane.b32.xlu0 %v434, 32
    %v437 = vpop.permute.xlu0 %436
    %v439 = vadd.f32 %v429, %v437
    %v440 = vtanh.pop %v439
    %442 = vrot.lane.b32.xlu0 %v440, 64
    %v443 = vpop.permute.xlu0 %442
    %v445 = vmul.f32 %v427, %v443
    %447 = vrot.lane.b32.xlu0 %v348, 32
    %v448 = vpop.permute.xlu0 %447
    %v449 = vsel %vm65, %v448, 0
    %451 = vmatprep.subr.mxu0 0.0
    %452 = vmatpush1.msra.mxu0 0.0
    %453 = vmatprep.subr.mxu0 0.0
    %454 = vmatpush1.msra.mxu0 0.0
    %455 = vmatprep.subr.mxu0 0.0
    %456 = vmatpush1.msra.mxu0 0.0
    %457 = vmatprep.subr.mxu0 0.0
    %458 = vmatpush1.msra.mxu0 0.0
    %459 = vmatprep.subr.mxu0 0.0
    %460 = vmatpush1.msra.mxu0 0.0
    %461 = vmatprep.subr.mxu0 0.0
    %462 = vmatpush1.msra.mxu0 0.0
    %463 = vmatprep.subr.mxu0 0.0
    %464 = vmatpush1.msra.mxu0 0.0
    %465 = vmatprep.subr.mxu0 0.0
    %466 = vmatpush1.msra.mxu0 0.0
    %467 = vmatprep.subr.mxu0 0.0
    %468 = vmatpush1.msra.mxu0 0.0
    %469 = vmatprep.subr.mxu0 0.0
    %470 = vmatpush1.msra.mxu0 0.0
    %471 = vmatprep.subr.mxu0 0.0
    %472 = vmatpush1.msra.mxu0 0.0
    %473 = vmatprep.subr.mxu0 0.0
    %474 = vmatpush1.msra.mxu0 0.0
    %475 = vmatprep.subr.mxu0 0.0
    %476 = vmatpush1.msra.mxu0 %v171
    %477 = vmatprep.subr.mxu0 0.0
    %478 = vmatpush1.msra.mxu0 %v170
    %479 = vmatprep.subr.mxu0 0.0
    %480 = vmatpush1.msra.mxu0 %v169
    %481 = vmatprep.subr.mxu0 0.0
    %482 = vmatpush1.msra.mxu0 %v168
    %483 = vmatprep.subr.mxu0 0.0
    %484 = vmatpush2.msra.mxu0 0.0
    %485 = vmatprep.subr.mxu0 0.0
    %486 = vmatpush2.msra.mxu0 0.0
    %487 = vmatprep.subr.mxu0 0.0
    %488 = vmatpush2.msra.mxu0 0.0
    %489 = vmatprep.subr.mxu0 0.0
    %490 = vmatpush2.msra.mxu0 0.0
    %491 = vmatprep.subr.mxu0 0.0
    %492 = vmatpush2.msra.mxu0 0.0
    %493 = vmatprep.subr.mxu0 0.0
    %494 = vmatpush2.msra.mxu0 0.0
    %495 = vmatprep.subr.mxu0 0.0
    %496 = vmatpush2.msra.mxu0 0.0
    %497 = vmatprep.subr.mxu0 0.0
    %498 = vmatpush2.msra.mxu0 0.0
    %499 = vmatprep.subr.mxu0 0.0
    %500 = vmatpush2.msra.mxu0 0.0
    %501 = vmatprep.subr.mxu0 0.0
    %502 = vmatpush2.msra.mxu0 0.0
    %503 = vmatprep.subr.mxu0 0.0
    %504 = vmatpush2.msra.mxu0 0.0
    %505 = vmatprep.subr.mxu0 0.0
    %506 = vmatpush2.msra.mxu0 0.0
    %507 = vmatprep.subr.mxu0 0.0
    %508 = vmatpush2.msra.mxu0 0.0
    %509 = vmatprep.subr.mxu0 0.0
    %510 = vmatpush2.msra.mxu0 0.0
    %511 = vmatprep.subr.mxu0 0.0
    %512 = vmatpush2.msra.mxu0 0.0
    %513 = vmatprep.subr.mxu0 0.0
    %514 = vmatpush2.msra.mxu0 0.0
    %515 = vmatprep.mubr.f32.mxu0 0.0
    %516 = vmatmul.mubr.f32.gmra.mxu0 %v449
    %v517 = vpop.f32.mrf.mxu0
    %v518 = vadd.f32 0.0, %v517
    %v519 = vpop.f32.mrf.mxu0
    %520 = vdwg.mxu0
    %522 = vrot.lane.b32.xlu0 %v445, 32
    %v523 = vpop.permute.xlu0 %522
    %v524 = vsel %vm65, %v523, 0
    %526 = vmatprep.subr.mxu0 0.0
    %527 = vmatpush1.msra.mxu0 0.0
    %528 = vmatprep.subr.mxu0 0.0
    %529 = vmatpush1.msra.mxu0 0.0
    %530 = vmatprep.subr.mxu0 0.0
    %531 = vmatpush1.msra.mxu0 0.0
    %532 = vmatprep.subr.mxu0 0.0
    %533 = vmatpush1.msra.mxu0 0.0
    %534 = vmatprep.subr.mxu0 0.0
    %535 = vmatpush1.msra.mxu0 0.0
    %536 = vmatprep.subr.mxu0 0.0
    %537 = vmatpush1.msra.mxu0 0.0
    %538 = vmatprep.subr.mxu0 0.0
    %539 = vmatpush1.msra.mxu0 0.0
    %540 = vmatprep.subr.mxu0 0.0
    %541 = vmatpush1.msra.mxu0 0.0
    %542 = vmatprep.subr.mxu0 0.0
    %543 = vmatpush1.msra.mxu0 0.0
    %544 = vmatprep.subr.mxu0 0.0
    %545 = vmatpush1.msra.mxu0 0.0
    %546 = vmatprep.subr.mxu0 0.0
    %547 = vmatpush1.msra.mxu0 0.0
    %548 = vmatprep.subr.mxu0 0.0
    %549 = vmatpush1.msra.mxu0 0.0
    %550 = vmatprep.subr.mxu0 0.0
    %551 = vmatpush1.msra.mxu0 %v167
    %552 = vmatprep.subr.mxu0 0.0
    %553 = vmatpush1.msra.mxu0 %v166
    %554 = vmatprep.subr.mxu0 0.0
    %555 = vmatpush1.msra.mxu0 %v165
    %556 = vmatprep.subr.mxu0 0.0
    %557 = vmatpush1.msra.mxu0 %v164
    %558 = vmatprep.subr.mxu0 0.0
    %559 = vmatpush2.msra.mxu0 0.0
    %560 = vmatprep.subr.mxu0 0.0
    %561 = vmatpush2.msra.mxu0 0.0
    %562 = vmatprep.subr.mxu0 0.0
    %563 = vmatpush2.msra.mxu0 0.0
    %564 = vmatprep.subr.mxu0 0.0
    %565 = vmatpush2.msra.mxu0 0.0
    %566 = vmatprep.subr.mxu0 0.0
    %567 = vmatpush2.msra.mxu0 0.0
    %568 = vmatprep.subr.mxu0 0.0
    %569 = vmatpush2.msra.mxu0 0.0
    %570 = vmatprep.subr.mxu0 0.0
    %571 = vmatpush2.msra.mxu0 0.0
    %572 = vmatprep.subr.mxu0 0.0
    %573 = vmatpush2.msra.mxu0 0.0
    %574 = vmatprep.subr.mxu0 0.0
    %575 = vmatpush2.msra.mxu0 0.0
    %576 = vmatprep.subr.mxu0 0.0
    %577 = vmatpush2.msra.mxu0 0.0
    %578 = vmatprep.subr.mxu0 0.0
    %579 = vmatpush2.msra.mxu0 0.0
    %580 = vmatprep.subr.mxu0 0.0
    %581 = vmatpush2.msra.mxu0 0.0
    %582 = vmatprep.subr.mxu0 0.0
    %583 = vmatpush2.msra.mxu0 0.0
    %584 = vmatprep.subr.mxu0 0.0
    %585 = vmatpush2.msra.mxu0 0.0
    %586 = vmatprep.subr.mxu0 0.0
    %587 = vmatpush2.msra.mxu0 0.0
    %588 = vmatprep.subr.mxu0 0.0
    %589 = vmatpush2.msra.mxu0 0.0
    %590 = vmatprep.mubr.f32.mxu0 0.0
    %591 = vmatmul.mubr.f32.gmra.mxu0 %v524
    %v592 = vpop.f32.mrf.mxu0
    %v593 = vadd.f32 %v518, %v592
    %v594 = vpop.f32.mrf.mxu0
    %595 = vdwg.mxu0
    %v596 = vadd.f32 %v593, %v322
    %v597 = vxor.u32 %v596, 2147483648
    %v598 = vmul.f32 %v597, 1.442695
    %v599 = vpow.pop %v598
    %v600 = vadd.f32 %v599, 1.0
    %v601 = vrcp.pop %v600
    %v602 = vmul.f32 1.0, %v601
    %v603 = vtanh.pop %v596
    %v604 = vmul.f32 %v602, %v342
    %606 = vrot.lane.b32.xlu0 %v603, 64
    %v607 = vpop.permute.xlu0 %606
    %v609 = vmul.f32 %v602, %v607
    %611 = vrot.lane.b32.xlu0 %v609, 32
    %v612 = vpop.permute.xlu0 %611
    %v614 = vadd.f32 %v604, %v612
    %v615 = vtanh.pop %v614
    %617 = vrot.lane.b32.xlu0 %v615, 64
    %v618 = vpop.permute.xlu0 %617
    %v620 = vmul.f32 %v602, %v618
    %s621 = scalar_lea.vmem %s0, 16
    %v622 = vld [vmem:[%s621] sm:$0xff]
    %623 = vmatprep.subr.mxu0 0.0
    %624 = vmatpush1.msra.mxu0 0.0
    %625 = vmatprep.subr.mxu0 0.0
    %626 = vmatpush1.msra.mxu0 0.0
    %627 = vmatprep.subr.mxu0 0.0
    %628 = vmatpush1.msra.mxu0 0.0
    %629 = vmatprep.subr.mxu0 0.0
    %630 = vmatpush1.msra.mxu0 0.0
    %631 = vmatprep.subr.mxu0 0.0
    %632 = vmatpush1.msra.mxu0 0.0
    %633 = vmatprep.subr.mxu0 0.0
    %634 = vmatpush1.msra.mxu0 0.0
    %635 = vmatprep.subr.mxu0 0.0
    %636 = vmatpush1.msra.mxu0 0.0
    %637 = vmatprep.subr.mxu0 0.0
    %638 = vmatpush1.msra.mxu0 0.0
    %639 = vmatprep.subr.mxu0 0.0
    %640 = vmatpush1.msra.mxu0 0.0
    %641 = vmatprep.subr.mxu0 0.0
    %642 = vmatpush1.msra.mxu0 0.0
    %643 = vmatprep.subr.mxu0 0.0
    %644 = vmatpush1.msra.mxu0 0.0
    %645 = vmatprep.subr.mxu0 0.0
    %646 = vmatpush1.msra.mxu0 0.0
    %647 = vmatprep.subr.mxu0 0.0
    %648 = vmatpush1.msra.mxu0 %v64
    %649 = vmatprep.subr.mxu0 0.0
    %650 = vmatpush1.msra.mxu0 %v63
    %651 = vmatprep.subr.mxu0 0.0
    %652 = vmatpush1.msra.mxu0 %v62
    %653 = vmatprep.subr.mxu0 0.0
    %654 = vmatpush1.msra.mxu0 %v61
    %655 = vmatprep.subr.mxu0 0.0
    %656 = vmatpush2.msra.mxu0 0.0
    %657 = vmatprep.subr.mxu0 0.0
    %658 = vmatpush2.msra.mxu0 0.0
    %659 = vmatprep.subr.mxu0 0.0
    %660 = vmatpush2.msra.mxu0 0.0
    %661 = vmatprep.subr.mxu0 0.0
    %662 = vmatpush2.msra.mxu0 0.0
    %663 = vmatprep.subr.mxu0 0.0
    %664 = vmatpush2.msra.mxu0 0.0
    %665 = vmatprep.subr.mxu0 0.0
    %666 = vmatpush2.msra.mxu0 0.0
    %667 = vmatprep.subr.mxu0 0.0
    %668 = vmatpush2.msra.mxu0 0.0
    %669 = vmatprep.subr.mxu0 0.0
    %670 = vmatpush2.msra.mxu0 0.0
    %671 = vmatprep.subr.mxu0 0.0
    %672 = vmatpush2.msra.mxu0 0.0
    %673 = vmatprep.subr.mxu0 0.0
    %674 = vmatpush2.msra.mxu0 0.0
    %675 = vmatprep.subr.mxu0 0.0
    %676 = vmatpush2.msra.mxu0 0.0
    %677 = vmatprep.subr.mxu0 0.0
    %678 = vmatpush2.msra.mxu0 0.0
    %679 = vmatprep.subr.mxu0 0.0
    %680 = vmatpush2.msra.mxu0 0.0
    %681 = vmatprep.subr.mxu0 0.0
    %682 = vmatpush2.msra.mxu0 0.0
    %683 = vmatprep.subr.mxu0 0.0
    %684 = vmatpush2.msra.mxu0 0.0
    %685 = vmatprep.subr.mxu0 0.0
    %686 = vmatpush2.msra.mxu0 0.0
    %687 = vmatprep.mubr.f32.mxu0 0.0
    %688 = vmatmul.mubr.f32.gmra.mxu0 %v524
    %v689 = vpop.f32.mrf.mxu0
    %v690 = vadd.f32 0.0, %v689
    %v691 = vpop.f32.mrf.mxu0
    %692 = vdwg.mxu0
    %v693 = vadd.f32 %v622, %v690
    %v694 = vxor.u32 %v693, 2147483648
    %v695 = vmul.f32 %v694, 1.442695
    %v696 = vpow.pop %v695
    %v697 = vadd.f32 %v696, 1.0
    %v698 = vrcp.pop %v697
    %v699 = vmul.f32 1.0, %v698
    %v700 = vtanh.pop %v693
    %v701 = vmul.f32 %v699, %v439
    %703 = vrot.lane.b32.xlu0 %v700, 64
    %v704 = vpop.permute.xlu0 %703
    %v706 = vmul.f32 %v699, %v704
    %708 = vrot.lane.b32.xlu0 %v706, 32
    %v709 = vpop.permute.xlu0 %708
    %v711 = vadd.f32 %v701, %v709
    %v712 = vtanh.pop %v711
    %714 = vrot.lane.b32.xlu0 %v712, 64
    %v715 = vpop.permute.xlu0 %714
    %v717 = vmul.f32 %v699, %v715
    %719 = vrot.lane.b32.xlu0 %v620, 32
    %v720 = vpop.permute.xlu0 %719
    %v721 = vsel %vm65, %v720, 0
    %723 = vmatprep.subr.mxu0 0.0
    %724 = vmatpush1.msra.mxu0 0.0
    %725 = vmatprep.subr.mxu0 0.0
    %726 = vmatpush1.msra.mxu0 0.0
    %727 = vmatprep.subr.mxu0 0.0
    %728 = vmatpush1.msra.mxu0 0.0
    %729 = vmatprep.subr.mxu0 0.0
    %730 = vmatpush1.msra.mxu0 0.0
    %731 = vmatprep.subr.mxu0 0.0
    %732 = vmatpush1.msra.mxu0 0.0
    %733 = vmatprep.subr.mxu0 0.0
    %734 = vmatpush1.msra.mxu0 0.0
    %735 = vmatprep.subr.mxu0 0.0
    %736 = vmatpush1.msra.mxu0 0.0
    %737 = vmatprep.subr.mxu0 0.0
    %738 = vmatpush1.msra.mxu0 0.0
    %739 = vmatprep.subr.mxu0 0.0
    %740 = vmatpush1.msra.mxu0 0.0
    %741 = vmatprep.subr.mxu0 0.0
    %742 = vmatpush1.msra.mxu0 0.0
    %743 = vmatprep.subr.mxu0 0.0
    %744 = vmatpush1.msra.mxu0 0.0
    %745 = vmatprep.subr.mxu0 0.0
    %746 = vmatpush1.msra.mxu0 0.0
    %747 = vmatprep.subr.mxu0 0.0
    %748 = vmatpush1.msra.mxu0 %v171
    %749 = vmatprep.subr.mxu0 0.0
    %750 = vmatpush1.msra.mxu0 %v170
    %751 = vmatprep.subr.mxu0 0.0
    %752 = vmatpush1.msra.mxu0 %v169
    %753 = vmatprep.subr.mxu0 0.0
    %754 = vmatpush1.msra.mxu0 %v168
    %755 = vmatprep.subr.mxu0 0.0
    %756 = vmatpush2.msra.mxu0 0.0
    %757 = vmatprep.subr.mxu0 0.0
    %758 = vmatpush2.msra.mxu0 0.0
    %759 = vmatprep.subr.mxu0 0.0
    %760 = vmatpush2.msra.mxu0 0.0
    %761 = vmatprep.subr.mxu0 0.0
    %762 = vmatpush2.msra.mxu0 0.0
    %763 = vmatprep.subr.mxu0 0.0
    %764 = vmatpush2.msra.mxu0 0.0
    %765 = vmatprep.subr.mxu0 0.0
    %766 = vmatpush2.msra.mxu0 0.0
    %767 = vmatprep.subr.mxu0 0.0
    %768 = vmatpush2.msra.mxu0 0.0
    %769 = vmatprep.subr.mxu0 0.0
    %770 = vmatpush2.msra.mxu0 0.0
    %771 = vmatprep.subr.mxu0 0.0
    %772 = vmatpush2.msra.mxu0 0.0
    %773 = vmatprep.subr.mxu0 0.0
    %774 = vmatpush2.msra.mxu0 0.0
    %775 = vmatprep.subr.mxu0 0.0
    %776 = vmatpush2.msra.mxu0 0.0
    %777 = vmatprep.subr.mxu0 0.0
    %778 = vmatpush2.msra.mxu0 0.0
    %779 = vmatprep.subr.mxu0 0.0
    %780 = vmatpush2.msra.mxu0 0.0
    %781 = vmatprep.subr.mxu0 0.0
    %782 = vmatpush2.msra.mxu0 0.0
    %783 = vmatprep.subr.mxu0 0.0
    %784 = vmatpush2.msra.mxu0 0.0
    %785 = vmatprep.subr.mxu0 0.0
    %786 = vmatpush2.msra.mxu0 0.0
    %787 = vmatprep.mubr.f32.mxu0 0.0
    %788 = vmatmul.mubr.f32.gmra.mxu0 %v721
    %v789 = vpop.f32.mrf.mxu0
    %v790 = vadd.f32 0.0, %v789
    %v791 = vpop.f32.mrf.mxu0
    %792 = vdwg.mxu0
    %794 = vrot.lane.b32.xlu0 %v717, 32
    %v795 = vpop.permute.xlu0 %794
    %v796 = vsel %vm65, %v795, 0
    %798 = vmatprep.subr.mxu0 0.0
    %799 = vmatpush1.msra.mxu0 0.0
    %800 = vmatprep.subr.mxu0 0.0
    %801 = vmatpush1.msra.mxu0 0.0
    %802 = vmatprep.subr.mxu0 0.0
    %803 = vmatpush1.msra.mxu0 0.0
    %804 = vmatprep.subr.mxu0 0.0
    %805 = vmatpush1.msra.mxu0 0.0
    %806 = vmatprep.subr.mxu0 0.0
    %807 = vmatpush1.msra.mxu0 0.0
    %808 = vmatprep.subr.mxu0 0.0
    %809 = vmatpush1.msra.mxu0 0.0
    %810 = vmatprep.subr.mxu0 0.0
    %811 = vmatpush1.msra.mxu0 0.0
    %812 = vmatprep.subr.mxu0 0.0
    %813 = vmatpush1.msra.mxu0 0.0
    %814 = vmatprep.subr.mxu0 0.0
    %815 = vmatpush1.msra.mxu0 0.0
    %816 = vmatprep.subr.mxu0 0.0
    %817 = vmatpush1.msra.mxu0 0.0
    %818 = vmatprep.subr.mxu0 0.0
    %819 = vmatpush1.msra.mxu0 0.0
    %820 = vmatprep.subr.mxu0 0.0
    %821 = vmatpush1.msra.mxu0 0.0
    %822 = vmatprep.subr.mxu0 0.0
    %823 = vmatpush1.msra.mxu0 %v167
    %824 = vmatprep.subr.mxu0 0.0
    %825 = vmatpush1.msra.mxu0 %v166
    %826 = vmatprep.subr.mxu0 0.0
    %827 = vmatpush1.msra.mxu0 %v165
    %828 = vmatprep.subr.mxu0 0.0
    %829 = vmatpush1.msra.mxu0 %v164
    %830 = vmatprep.subr.mxu0 0.0
    %831 = vmatpush2.msra.mxu0 0.0
    %832 = vmatprep.subr.mxu0 0.0
    %833 = vmatpush2.msra.mxu0 0.0
    %834 = vmatprep.subr.mxu0 0.0
    %835 = vmatpush2.msra.mxu0 0.0
    %836 = vmatprep.subr.mxu0 0.0
    %837 = vmatpush2.msra.mxu0 0.0
    %838 = vmatprep.subr.mxu0 0.0
    %839 = vmatpush2.msra.mxu0 0.0
    %840 = vmatprep.subr.mxu0 0.0
    %841 = vmatpush2.msra.mxu0 0.0
    %842 = vmatprep.subr.mxu0 0.0
    %843 = vmatpush2.msra.mxu0 0.0
    %844 = vmatprep.subr.mxu0 0.0
    %845 = vmatpush2.msra.mxu0 0.0
    %846 = vmatprep.subr.mxu0 0.0
    %847 = vmatpush2.msra.mxu0 0.0
    %848 = vmatprep.subr.mxu0 0.0
    %849 = vmatpush2.msra.mxu0 0.0
    %850 = vmatprep.subr.mxu0 0.0
    %851 = vmatpush2.msra.mxu0 0.0
    %852 = vmatprep.subr.mxu0 0.0
    %853 = vmatpush2.msra.mxu0 0.0
    %854 = vmatprep.subr.mxu0 0.0
    %855 = vmatpush2.msra.mxu0 0.0
    %856 = vmatprep.subr.mxu0 0.0
    %857 = vmatpush2.msra.mxu0 0.0
    %858 = vmatprep.subr.mxu0 0.0
    %859 = vmatpush2.msra.mxu0 0.0
    %860 = vmatprep.subr.mxu0 0.0
    %861 = vmatpush2.msra.mxu0 0.0
    %862 = vmatprep.mubr.f32.mxu0 0.0
    %863 = vmatmul.mubr.f32.gmra.mxu0 %v796
    %v864 = vpop.f32.mrf.mxu0
    %v865 = vadd.f32 %v790, %v864
    %v866 = vpop.f32.mrf.mxu0
    %867 = vdwg.mxu0
    %v868 = vadd.f32 %v865, %v322
    %v869 = vxor.u32 %v868, 2147483648
    %v870 = vmul.f32 %v869, 1.442695
    %v871 = vpow.pop %v870
    %v872 = vadd.f32 %v871, 1.0
    %v873 = vrcp.pop %v872
    %v874 = vmul.f32 1.0, %v873
    %v875 = vtanh.pop %v868
    %v876 = vmul.f32 %v874, %v614
    %878 = vrot.lane.b32.xlu0 %v875, 64
    %v879 = vpop.permute.xlu0 %878
    %v881 = vmul.f32 %v874, %v879
    %883 = vrot.lane.b32.xlu0 %v881, 32
    %v884 = vpop.permute.xlu0 %883
    %v886 = vadd.f32 %v876, %v884
    %v887 = vtanh.pop %v886
    %889 = vrot.lane.b32.xlu0 %v887, 64
    %v890 = vpop.permute.xlu0 %889
    %v892 = vmul.f32 %v874, %v890
    %s893 = scalar_lea.vmem %s0, 24
    %v894 = vld [vmem:[%s893] sm:$0xff]
    %895 = vmatprep.subr.mxu0 0.0
    %896 = vmatpush1.msra.mxu0 0.0
    %897 = vmatprep.subr.mxu0 0.0
    %898 = vmatpush1.msra.mxu0 0.0
    %899 = vmatprep.subr.mxu0 0.0
    %900 = vmatpush1.msra.mxu0 0.0
    %901 = vmatprep.subr.mxu0 0.0
    %902 = vmatpush1.msra.mxu0 0.0
    %903 = vmatprep.subr.mxu0 0.0
    %904 = vmatpush1.msra.mxu0 0.0
    %905 = vmatprep.subr.mxu0 0.0
    %906 = vmatpush1.msra.mxu0 0.0
    %907 = vmatprep.subr.mxu0 0.0
    %908 = vmatpush1.msra.mxu0 0.0
    %909 = vmatprep.subr.mxu0 0.0
    %910 = vmatpush1.msra.mxu0 0.0
    %911 = vmatprep.subr.mxu0 0.0
    %912 = vmatpush1.msra.mxu0 0.0
    %913 = vmatprep.subr.mxu0 0.0
    %914 = vmatpush1.msra.mxu0 0.0
    %915 = vmatprep.subr.mxu0 0.0
    %916 = vmatpush1.msra.mxu0 0.0
    %917 = vmatprep.subr.mxu0 0.0
    %918 = vmatpush1.msra.mxu0 0.0
    %919 = vmatprep.subr.mxu0 0.0
    %920 = vmatpush1.msra.mxu0 %v64
    %921 = vmatprep.subr.mxu0 0.0
    %922 = vmatpush1.msra.mxu0 %v63
    %923 = vmatprep.subr.mxu0 0.0
    %924 = vmatpush1.msra.mxu0 %v62
    %925 = vmatprep.subr.mxu0 0.0
    %926 = vmatpush1.msra.mxu0 %v61
    %927 = vmatprep.subr.mxu0 0.0
    %928 = vmatpush2.msra.mxu0 0.0
    %929 = vmatprep.subr.mxu0 0.0
    %930 = vmatpush2.msra.mxu0 0.0
    %931 = vmatprep.subr.mxu0 0.0
    %932 = vmatpush2.msra.mxu0 0.0
    %933 = vmatprep.subr.mxu0 0.0
    %934 = vmatpush2.msra.mxu0 0.0
    %935 = vmatprep.subr.mxu0 0.0
    %936 = vmatpush2.msra.mxu0 0.0
    %937 = vmatprep.subr.mxu0 0.0
    %938 = vmatpush2.msra.mxu0 0.0
    %939 = vmatprep.subr.mxu0 0.0
    %940 = vmatpush2.msra.mxu0 0.0
    %941 = vmatprep.subr.mxu0 0.0
    %942 = vmatpush2.msra.mxu0 0.0
    %943 = vmatprep.subr.mxu0 0.0
    %944 = vmatpush2.msra.mxu0 0.0
    %945 = vmatprep.subr.mxu0 0.0
    %946 = vmatpush2.msra.mxu0 0.0
    %947 = vmatprep.subr.mxu0 0.0
    %948 = vmatpush2.msra.mxu0 0.0
    %949 = vmatprep.subr.mxu0 0.0
    %950 = vmatpush2.msra.mxu0 0.0
    %951 = vmatprep.subr.mxu0 0.0
    %952 = vmatpush2.msra.mxu0 0.0
    %953 = vmatprep.subr.mxu0 0.0
    %954 = vmatpush2.msra.mxu0 0.0
    %955 = vmatprep.subr.mxu0 0.0
    %956 = vmatpush2.msra.mxu0 0.0
    %957 = vmatprep.subr.mxu0 0.0
    %958 = vmatpush2.msra.mxu0 0.0
    %959 = vmatprep.mubr.f32.mxu0 0.0
    %960 = vmatmul.mubr.f32.gmra.mxu0 %v796
    %v961 = vpop.f32.mrf.mxu0
    %v962 = vadd.f32 0.0, %v961
    %v963 = vpop.f32.mrf.mxu0
    %964 = vdwg.mxu0
    %v965 = vadd.f32 %v894, %v962
    %v966 = vxor.u32 %v965, 2147483648
    %v967 = vmul.f32 %v966, 1.442695
    %v968 = vpow.pop %v967
    %v969 = vadd.f32 %v968, 1.0
    %v970 = vrcp.pop %v969
    %v971 = vmul.f32 1.0, %v970
    %v972 = vtanh.pop %v965
    %v973 = vmul.f32 %v971, %v711
    %975 = vrot.lane.b32.xlu0 %v972, 64
    %v976 = vpop.permute.xlu0 %975
    %v978 = vmul.f32 %v971, %v976
    %980 = vrot.lane.b32.xlu0 %v978, 32
    %v981 = vpop.permute.xlu0 %980
    %v983 = vadd.f32 %v973, %v981
    %v984 = vtanh.pop %v983
    %986 = vrot.lane.b32.xlu0 %v984, 64
    %v987 = vpop.permute.xlu0 %986
    %v989 = vmul.f32 %v971, %v987
    %991 = vrot.lane.b32.xlu0 %v892, 32
    %v992 = vpop.permute.xlu0 %991
    %v993 = vsel %vm65, %v992, 0
    %995 = vmatprep.subr.mxu0 0.0
    %996 = vmatpush1.msra.mxu0 0.0
    %997 = vmatprep.subr.mxu0 0.0
    %998 = vmatpush1.msra.mxu0 0.0
    %999 = vmatprep.subr.mxu0 0.0
    %1000 = vmatpush1.msra.mxu0 0.0
    %1001 = vmatprep.subr.mxu0 0.0
    %1002 = vmatpush1.msra.mxu0 0.0
    %1003 = vmatprep.subr.mxu0 0.0
    %1004 = vmatpush1.msra.mxu0 0.0
    %1005 = vmatprep.subr.mxu0 0.0
    %1006 = vmatpush1.msra.mxu0 0.0
    %1007 = vmatprep.subr.mxu0 0.0
    %1008 = vmatpush1.msra.mxu0 0.0
    %1009 = vmatprep.subr.mxu0 0.0
    %1010 = vmatpush1.msra.mxu0 0.0
    %1011 = vmatprep.subr.mxu0 0.0
    %1012 = vmatpush1.msra.mxu0 0.0
    %1013 = vmatprep.subr.mxu0 0.0
    %1014 = vmatpush1.msra.mxu0 0.0
    %1015 = vmatprep.subr.mxu0 0.0
    %1016 = vmatpush1.msra.mxu0 0.0
    %1017 = vmatprep.subr.mxu0 0.0
    %1018 = vmatpush1.msra.mxu0 0.0
    %1019 = vmatprep.subr.mxu0 0.0
    %1020 = vmatpush1.msra.mxu0 %v171
    %1021 = vmatprep.subr.mxu0 0.0
    %1022 = vmatpush1.msra.mxu0 %v170
    %1023 = vmatprep.subr.mxu0 0.0
    %1024 = vmatpush1.msra.mxu0 %v169
    %1025 = vmatprep.subr.mxu0 0.0
    %1026 = vmatpush1.msra.mxu0 %v168
    %1027 = vmatprep.subr.mxu0 0.0
    %1028 = vmatpush2.msra.mxu0 0.0
    %1029 = vmatprep.subr.mxu0 0.0
    %1030 = vmatpush2.msra.mxu0 0.0
    %1031 = vmatprep.subr.mxu0 0.0
    %1032 = vmatpush2.msra.mxu0 0.0
    %1033 = vmatprep.subr.mxu0 0.0
    %1034 = vmatpush2.msra.mxu0 0.0
    %1035 = vmatprep.subr.mxu0 0.0
    %1036 = vmatpush2.msra.mxu0 0.0
    %1037 = vmatprep.subr.mxu0 0.0
    %1038 = vmatpush2.msra.mxu0 0.0
    %1039 = vmatprep.subr.mxu0 0.0
    %1040 = vmatpush2.msra.mxu0 0.0
    %1041 = vmatprep.subr.mxu0 0.0
    %1042 = vmatpush2.msra.mxu0 0.0
    %1043 = vmatprep.subr.mxu0 0.0
    %1044 = vmatpush2.msra.mxu0 0.0
    %1045 = vmatprep.subr.mxu0 0.0
    %1046 = vmatpush2.msra.mxu0 0.0
    %1047 = vmatprep.subr.mxu0 0.0
    %1048 = vmatpush2.msra.mxu0 0.0
    %1049 = vmatprep.subr.mxu0 0.0
    %1050 = vmatpush2.msra.mxu0 0.0
    %1051 = vmatprep.subr.mxu0 0.0
    %1052 = vmatpush2.msra.mxu0 0.0
    %1053 = vmatprep.subr.mxu0 0.0
    %1054 = vmatpush2.msra.mxu0 0.0
    %1055 = vmatprep.subr.mxu0 0.0
    %1056 = vmatpush2.msra.mxu0 0.0
    %1057 = vmatprep.subr.mxu0 0.0
    %1058 = vmatpush2.msra.mxu0 0.0
    %1059 = vmatprep.mubr.f32.mxu0 0.0
    %1060 = vmatmul.mubr.f32.gmra.mxu0 %v993
    %v1061 = vpop.f32.mrf.mxu0
    %v1062 = vadd.f32 0.0, %v1061
    %v1063 = vpop.f32.mrf.mxu0
    %1064 = vdwg.mxu0
    %1066 = vrot.lane.b32.xlu0 %v989, 32
    %v1067 = vpop.permute.xlu0 %1066
    %v1068 = vsel %vm65, %v1067, 0
    %1070 = vmatprep.subr.mxu0 0.0
    %1071 = vmatpush1.msra.mxu0 0.0
    %1072 = vmatprep.subr.mxu0 0.0
    %1073 = vmatpush1.msra.mxu0 0.0
    %1074 = vmatprep.subr.mxu0 0.0
    %1075 = vmatpush1.msra.mxu0 0.0
    %1076 = vmatprep.subr.mxu0 0.0
    %1077 = vmatpush1.msra.mxu0 0.0
    %1078 = vmatprep.subr.mxu0 0.0
    %1079 = vmatpush1.msra.mxu0 0.0
    %1080 = vmatprep.subr.mxu0 0.0
    %1081 = vmatpush1.msra.mxu0 0.0
    %1082 = vmatprep.subr.mxu0 0.0
    %1083 = vmatpush1.msra.mxu0 0.0
    %1084 = vmatprep.subr.mxu0 0.0
    %1085 = vmatpush1.msra.mxu0 0.0
    %1086 = vmatprep.subr.mxu0 0.0
    %1087 = vmatpush1.msra.mxu0 0.0
    %1088 = vmatprep.subr.mxu0 0.0
    %1089 = vmatpush1.msra.mxu0 0.0
    %1090 = vmatprep.subr.mxu0 0.0
    %1091 = vmatpush1.msra.mxu0 0.0
    %1092 = vmatprep.subr.mxu0 0.0
    %1093 = vmatpush1.msra.mxu0 0.0
    %1094 = vmatprep.subr.mxu0 0.0
    %1095 = vmatpush1.msra.mxu0 %v167
    %1096 = vmatprep.subr.mxu0 0.0
    %1097 = vmatpush1.msra.mxu0 %v166
    %1098 = vmatprep.subr.mxu0 0.0
    %1099 = vmatpush1.msra.mxu0 %v165
    %1100 = vmatprep.subr.mxu0 0.0
    %1101 = vmatpush1.msra.mxu0 %v164
    %1102 = vmatprep.subr.mxu0 0.0
    %1103 = vmatpush2.msra.mxu0 0.0
    %1104 = vmatprep.subr.mxu0 0.0
    %1105 = vmatpush2.msra.mxu0 0.0
    %1106 = vmatprep.subr.mxu0 0.0
    %1107 = vmatpush2.msra.mxu0 0.0
    %1108 = vmatprep.subr.mxu0 0.0
    %1109 = vmatpush2.msra.mxu0 0.0
    %1110 = vmatprep.subr.mxu0 0.0
    %1111 = vmatpush2.msra.mxu0 0.0
    %1112 = vmatprep.subr.mxu0 0.0
    %1113 = vmatpush2.msra.mxu0 0.0
    %1114 = vmatprep.subr.mxu0 0.0
    %1115 = vmatpush2.msra.mxu0 0.0
    %1116 = vmatprep.subr.mxu0 0.0
    %1117 = vmatpush2.msra.mxu0 0.0
    %1118 = vmatprep.subr.mxu0 0.0
    %1119 = vmatpush2.msra.mxu0 0.0
    %1120 = vmatprep.subr.mxu0 0.0
    %1121 = vmatpush2.msra.mxu0 0.0
    %1122 = vmatprep.subr.mxu0 0.0
    %1123 = vmatpush2.msra.mxu0 0.0
    %1124 = vmatprep.subr.mxu0 0.0
    %1125 = vmatpush2.msra.mxu0 0.0
    %1126 = vmatprep.subr.mxu0 0.0
    %1127 = vmatpush2.msra.mxu0 0.0
    %1128 = vmatprep.subr.mxu0 0.0
    %1129 = vmatpush2.msra.mxu0 0.0
    %1130 = vmatprep.subr.mxu0 0.0
    %1131 = vmatpush2.msra.mxu0 0.0
    %1132 = vmatprep.subr.mxu0 0.0
    %1133 = vmatpush2.msra.mxu0 0.0
    %1134 = vmatprep.mubr.f32.mxu0 0.0
    %1135 = vmatmul.mubr.f32.gmra.mxu0 %v1068
    %v1136 = vpop.f32.mrf.mxu0
    %v1137 = vadd.f32 %v1062, %v1136
    %v1138 = vpop.f32.mrf.mxu0
    %1139 = vdwg.mxu0
    %v1140 = vadd.f32 %v1137, %v322
    %v1141 = vxor.u32 %v1140, 2147483648
    %v1142 = vmul.f32 %v1141, 1.442695
    %v1143 = vpow.pop %v1142
    %v1144 = vadd.f32 %v1143, 1.0
    %v1145 = vrcp.pop %v1144
    %v1146 = vmul.f32 1.0, %v1145
    %v1147 = vtanh.pop %v1140
    %v1148 = vmul.f32 %v1146, %v886
    %1150 = vrot.lane.b32.xlu0 %v1147, 64
    %v1151 = vpop.permute.xlu0 %1150
    %v1153 = vmul.f32 %v1146, %v1151
    %1155 = vrot.lane.b32.xlu0 %v1153, 32
    %v1156 = vpop.permute.xlu0 %1155
    %v1158 = vadd.f32 %v1148, %v1156
    %v1159 = vtanh.pop %v1158
    %1161 = vrot.lane.b32.xlu0 %v1159, 64
    %v1162 = vpop.permute.xlu0 %1161
    %v1164 = vmul.f32 %v1146, %v1162
    %s1165 = scalar_lea.vmem %s0, 32
    %v1166 = vld [vmem:[%s1165] sm:$0xff]
    %1167 = vmatprep.subr.mxu0 0.0
    %1168 = vmatpush1.msra.mxu0 0.0
    %1169 = vmatprep.subr.mxu0 0.0
    %1170 = vmatpush1.msra.mxu0 0.0
    %1171 = vmatprep.subr.mxu0 0.0
    %1172 = vmatpush1.msra.mxu0 0.0
    %1173 = vmatprep.subr.mxu0 0.0
    %1174 = vmatpush1.msra.mxu0 0.0
    %1175 = vmatprep.subr.mxu0 0.0
    %1176 = vmatpush1.msra.mxu0 0.0
    %1177 = vmatprep.subr.mxu0 0.0
    %1178 = vmatpush1.msra.mxu0 0.0
    %1179 = vmatprep.subr.mxu0 0.0
    %1180 = vmatpush1.msra.mxu0 0.0
    %1181 = vmatprep.subr.mxu0 0.0
    %1182 = vmatpush1.msra.mxu0 0.0
    %1183 = vmatprep.subr.mxu0 0.0
    %1184 = vmatpush1.msra.mxu0 0.0
    %1185 = vmatprep.subr.mxu0 0.0
    %1186 = vmatpush1.msra.mxu0 0.0
    %1187 = vmatprep.subr.mxu0 0.0
    %1188 = vmatpush1.msra.mxu0 0.0
    %1189 = vmatprep.subr.mxu0 0.0
    %1190 = vmatpush1.msra.mxu0 0.0
    %1191 = vmatprep.subr.mxu0 0.0
    %1192 = vmatpush1.msra.mxu0 %v64
    %1193 = vmatprep.subr.mxu0 0.0
    %1194 = vmatpush1.msra.mxu0 %v63
    %1195 = vmatprep.subr.mxu0 0.0
    %1196 = vmatpush1.msra.mxu0 %v62
    %1197 = vmatprep.subr.mxu0 0.0
    %1198 = vmatpush1.msra.mxu0 %v61
    %1199 = vmatprep.subr.mxu0 0.0
    %1200 = vmatpush2.msra.mxu0 0.0
    %1201 = vmatprep.subr.mxu0 0.0
    %1202 = vmatpush2.msra.mxu0 0.0
    %1203 = vmatprep.subr.mxu0 0.0
    %1204 = vmatpush2.msra.mxu0 0.0
    %1205 = vmatprep.subr.mxu0 0.0
    %1206 = vmatpush2.msra.mxu0 0.0
    %1207 = vmatprep.subr.mxu0 0.0
    %1208 = vmatpush2.msra.mxu0 0.0
    %1209 = vmatprep.subr.mxu0 0.0
    %1210 = vmatpush2.msra.mxu0 0.0
    %1211 = vmatprep.subr.mxu0 0.0
    %1212 = vmatpush2.msra.mxu0 0.0
    %1213 = vmatprep.subr.mxu0 0.0
    %1214 = vmatpush2.msra.mxu0 0.0
    %1215 = vmatprep.subr.mxu0 0.0
    %1216 = vmatpush2.msra.mxu0 0.0
    %1217 = vmatprep.subr.mxu0 0.0
    %1218 = vmatpush2.msra.mxu0 0.0
    %1219 = vmatprep.subr.mxu0 0.0
    %1220 = vmatpush2.msra.mxu0 0.0
    %1221 = vmatprep.subr.mxu0 0.0
    %1222 = vmatpush2.msra.mxu0 0.0
    %1223 = vmatprep.subr.mxu0 0.0
    %1224 = vmatpush2.msra.mxu0 0.0
    %1225 = vmatprep.subr.mxu0 0.0
    %1226 = vmatpush2.msra.mxu0 0.0
    %1227 = vmatprep.subr.mxu0 0.0
    %1228 = vmatpush2.msra.mxu0 0.0
    %1229 = vmatprep.subr.mxu0 0.0
    %1230 = vmatpush2.msra.mxu0 0.0
    %1231 = vmatprep.mubr.f32.mxu0 0.0
    %1232 = vmatmul.mubr.f32.gmra.mxu0 %v1068
    %v1233 = vpop.f32.mrf.mxu0
    %v1234 = vadd.f32 0.0, %v1233
    %v1235 = vpop.f32.mrf.mxu0
    %1236 = vdwg.mxu0
    %v1237 = vadd.f32 %v1166, %v1234
    %v1238 = vxor.u32 %v1237, 2147483648
    %v1239 = vmul.f32 %v1238, 1.442695
    %v1240 = vpow.pop %v1239
    %v1241 = vadd.f32 %v1240, 1.0
    %v1242 = vrcp.pop %v1241
    %v1243 = vmul.f32 1.0, %v1242
    %v1244 = vtanh.pop %v1237
    %v1245 = vmul.f32 %v1243, %v983
    %1247 = vrot.lane.b32.xlu0 %v1244, 64
    %v1248 = vpop.permute.xlu0 %1247
    %v1250 = vmul.f32 %v1243, %v1248
    %1252 = vrot.lane.b32.xlu0 %v1250, 32
    %v1253 = vpop.permute.xlu0 %1252
    %v1255 = vadd.f32 %v1245, %v1253
    %v1256 = vtanh.pop %v1255
    %1258 = vrot.lane.b32.xlu0 %v1256, 64
    %v1259 = vpop.permute.xlu0 %1258
    %v1261 = vmul.f32 %v1243, %v1259
    %1263 = vrot.lane.b32.xlu0 %v1164, 32
    %v1264 = vpop.permute.xlu0 %1263
    %v1265 = vsel %vm65, %v1264, 0
    %1267 = vmatprep.subr.mxu0 0.0
    %1268 = vmatpush1.msra.mxu0 0.0
    %1269 = vmatprep.subr.mxu0 0.0
    %1270 = vmatpush1.msra.mxu0 0.0
    %1271 = vmatprep.subr.mxu0 0.0
    %1272 = vmatpush1.msra.mxu0 0.0
    %1273 = vmatprep.subr.mxu0 0.0
    %1274 = vmatpush1.msra.mxu0 0.0
    %1275 = vmatprep.subr.mxu0 0.0
    %1276 = vmatpush1.msra.mxu0 0.0
    %1277 = vmatprep.subr.mxu0 0.0
    %1278 = vmatpush1.msra.mxu0 0.0
    %1279 = vmatprep.subr.mxu0 0.0
    %1280 = vmatpush1.msra.mxu0 0.0
    %1281 = vmatprep.subr.mxu0 0.0
    %1282 = vmatpush1.msra.mxu0 0.0
    %1283 = vmatprep.subr.mxu0 0.0
    %1284 = vmatpush1.msra.mxu0 0.0
    %1285 = vmatprep.subr.mxu0 0.0
    %1286 = vmatpush1.msra.mxu0 0.0
    %1287 = vmatprep.subr.mxu0 0.0
    %1288 = vmatpush1.msra.mxu0 0.0
    %1289 = vmatprep.subr.mxu0 0.0
    %1290 = vmatpush1.msra.mxu0 0.0
    %1291 = vmatprep.subr.mxu0 0.0
    %1292 = vmatpush1.msra.mxu0 %v171
    %1293 = vmatprep.subr.mxu0 0.0
    %1294 = vmatpush1.msra.mxu0 %v170
    %1295 = vmatprep.subr.mxu0 0.0
    %1296 = vmatpush1.msra.mxu0 %v169
    %1297 = vmatprep.subr.mxu0 0.0
    %1298 = vmatpush1.msra.mxu0 %v168
    %1299 = vmatprep.subr.mxu0 0.0
    %1300 = vmatpush2.msra.mxu0 0.0
    %1301 = vmatprep.subr.mxu0 0.0
    %1302 = vmatpush2.msra.mxu0 0.0
    %1303 = vmatprep.subr.mxu0 0.0
    %1304 = vmatpush2.msra.mxu0 0.0
    %1305 = vmatprep.subr.mxu0 0.0
    %1306 = vmatpush2.msra.mxu0 0.0
    %1307 = vmatprep.subr.mxu0 0.0
    %1308 = vmatpush2.msra.mxu0 0.0
    %1309 = vmatprep.subr.mxu0 0.0
    %1310 = vmatpush2.msra.mxu0 0.0
    %1311 = vmatprep.subr.mxu0 0.0
    %1312 = vmatpush2.msra.mxu0 0.0
    %1313 = vmatprep.subr.mxu0 0.0
    %1314 = vmatpush2.msra.mxu0 0.0
    %1315 = vmatprep.subr.mxu0 0.0
    %1316 = vmatpush2.msra.mxu0 0.0
    %1317 = vmatprep.subr.mxu0 0.0
    %1318 = vmatpush2.msra.mxu0 0.0
    %1319 = vmatprep.subr.mxu0 0.0
    %1320 = vmatpush2.msra.mxu0 0.0
    %1321 = vmatprep.subr.mxu0 0.0
    %1322 = vmatpush2.msra.mxu0 0.0
    %1323 = vmatprep.subr.mxu0 0.0
    %1324 = vmatpush2.msra.mxu0 0.0
    %1325 = vmatprep.subr.mxu0 0.0
    %1326 = vmatpush2.msra.mxu0 0.0
    %1327 = vmatprep.subr.mxu0 0.0
    %1328 = vmatpush2.msra.mxu0 0.0
    %1329 = vmatprep.subr.mxu0 0.0
    %1330 = vmatpush2.msra.mxu0 0.0
    %1331 = vmatprep.mubr.f32.mxu0 0.0
    %1332 = vmatmul.mubr.f32.gmra.mxu0 %v1265
    %v1333 = vpop.f32.mrf.mxu0
    %v1334 = vadd.f32 0.0, %v1333
    %v1335 = vpop.f32.mrf.mxu0
    %1336 = vdwg.mxu0
    %1338 = vrot.lane.b32.xlu0 %v1261, 32
    %v1339 = vpop.permute.xlu0 %1338
    %v1340 = vsel %vm65, %v1339, 0
    %1342 = vmatprep.subr.mxu0 0.0
    %1343 = vmatpush1.msra.mxu0 0.0
    %1344 = vmatprep.subr.mxu0 0.0
    %1345 = vmatpush1.msra.mxu0 0.0
    %1346 = vmatprep.subr.mxu0 0.0
    %1347 = vmatpush1.msra.mxu0 0.0
    %1348 = vmatprep.subr.mxu0 0.0
    %1349 = vmatpush1.msra.mxu0 0.0
    %1350 = vmatprep.subr.mxu0 0.0
    %1351 = vmatpush1.msra.mxu0 0.0
    %1352 = vmatprep.subr.mxu0 0.0
    %1353 = vmatpush1.msra.mxu0 0.0
    %1354 = vmatprep.subr.mxu0 0.0
    %1355 = vmatpush1.msra.mxu0 0.0
    %1356 = vmatprep.subr.mxu0 0.0
    %1357 = vmatpush1.msra.mxu0 0.0
    %1358 = vmatprep.subr.mxu0 0.0
    %1359 = vmatpush1.msra.mxu0 0.0
    %1360 = vmatprep.subr.mxu0 0.0
    %1361 = vmatpush1.msra.mxu0 0.0
    %1362 = vmatprep.subr.mxu0 0.0
    %1363 = vmatpush1.msra.mxu0 0.0
    %1364 = vmatprep.subr.mxu0 0.0
    %1365 = vmatpush1.msra.mxu0 0.0
    %1366 = vmatprep.subr.mxu0 0.0
    %1367 = vmatpush1.msra.mxu0 %v167
    %1368 = vmatprep.subr.mxu0 0.0
    %1369 = vmatpush1.msra.mxu0 %v166
    %1370 = vmatprep.subr.mxu0 0.0
    %1371 = vmatpush1.msra.mxu0 %v165
    %1372 = vmatprep.subr.mxu0 0.0
    %1373 = vmatpush1.msra.mxu0 %v164
    %1374 = vmatprep.subr.mxu0 0.0
    %1375 = vmatpush2.msra.mxu0 0.0
    %1376 = vmatprep.subr.mxu0 0.0
    %1377 = vmatpush2.msra.mxu0 0.0
    %1378 = vmatprep.subr.mxu0 0.0
    %1379 = vmatpush2.msra.mxu0 0.0
    %1380 = vmatprep.subr.mxu0 0.0
    %1381 = vmatpush2.msra.mxu0 0.0
    %1382 = vmatprep.subr.mxu0 0.0
    %1383 = vmatpush2.msra.mxu0 0.0
    %1384 = vmatprep.subr.mxu0 0.0
    %1385 = vmatpush2.msra.mxu0 0.0
    %1386 = vmatprep.subr.mxu0 0.0
    %1387 = vmatpush2.msra.mxu0 0.0
    %1388 = vmatprep.subr.mxu0 0.0
    %1389 = vmatpush2.msra.mxu0 0.0
    %1390 = vmatprep.subr.mxu0 0.0
    %1391 = vmatpush2.msra.mxu0 0.0
    %1392 = vmatprep.subr.mxu0 0.0
    %1393 = vmatpush2.msra.mxu0 0.0
    %1394 = vmatprep.subr.mxu0 0.0
    %1395 = vmatpush2.msra.mxu0 0.0
    %1396 = vmatprep.subr.mxu0 0.0
    %1397 = vmatpush2.msra.mxu0 0.0
    %1398 = vmatprep.subr.mxu0 0.0
    %1399 = vmatpush2.msra.mxu0 0.0
    %1400 = vmatprep.subr.mxu0 0.0
    %1401 = vmatpush2.msra.mxu0 0.0
    %1402 = vmatprep.subr.mxu0 0.0
    %1403 = vmatpush2.msra.mxu0 0.0
    %1404 = vmatprep.subr.mxu0 0.0
    %1405 = vmatpush2.msra.mxu0 0.0
    %1406 = vmatprep.mubr.f32.mxu0 0.0
    %1407 = vmatmul.mubr.f32.gmra.mxu0 %v1340
    %v1408 = vpop.f32.mrf.mxu0
    %v1409 = vadd.f32 %v1334, %v1408
    %v1410 = vpop.f32.mrf.mxu0
    %1411 = vdwg.mxu0
    %v1412 = vadd.f32 %v1409, %v322
    %v1413 = vxor.u32 %v1412, 2147483648
    %v1414 = vmul.f32 %v1413, 1.442695
    %v1415 = vpow.pop %v1414
    %v1416 = vadd.f32 %v1415, 1.0
    %v1417 = vrcp.pop %v1416
    %v1418 = vmul.f32 1.0, %v1417
    %v1419 = vtanh.pop %v1412
    %v1420 = vmul.f32 %v1418, %v1158
    %1422 = vrot.lane.b32.xlu0 %v1419, 64
    %v1423 = vpop.permute.xlu0 %1422
    %v1425 = vmul.f32 %v1418, %v1423
    %1427 = vrot.lane.b32.xlu0 %v1425, 32
    %v1428 = vpop.permute.xlu0 %1427
    %v1430 = vadd.f32 %v1420, %v1428
    %v1431 = vtanh.pop %v1430
    %1433 = vrot.lane.b32.xlu0 %v1431, 64
    %v1434 = vpop.permute.xlu0 %1433
    %v1436 = vmul.f32 %v1418, %v1434
    %s1437 = scalar_lea.vmem %s0, 40
    %v1438 = vld [vmem:[%s1437] sm:$0xff]
    %1439 = vmatprep.subr.mxu0 0.0
    %1440 = vmatpush1.msra.mxu0 0.0
    %1441 = vmatprep.subr.mxu0 0.0
    %1442 = vmatpush1.msra.mxu0 0.0
    %1443 = vmatprep.subr.mxu0 0.0
    %1444 = vmatpush1.msra.mxu0 0.0
    %1445 = vmatprep.subr.mxu0 0.0
    %1446 = vmatpush1.msra.mxu0 0.0
    %1447 = vmatprep.subr.mxu0 0.0
    %1448 = vmatpush1.msra.mxu0 0.0
    %1449 = vmatprep.subr.mxu0 0.0
    %1450 = vmatpush1.msra.mxu0 0.0
    %1451 = vmatprep.subr.mxu0 0.0
    %1452 = vmatpush1.msra.mxu0 0.0
    %1453 = vmatprep.subr.mxu0 0.0
    %1454 = vmatpush1.msra.mxu0 0.0
    %1455 = vmatprep.subr.mxu0 0.0
    %1456 = vmatpush1.msra.mxu0 0.0
    %1457 = vmatprep.subr.mxu0 0.0
    %1458 = vmatpush1.msra.mxu0 0.0
    %1459 = vmatprep.subr.mxu0 0.0
    %1460 = vmatpush1.msra.mxu0 0.0
    %1461 = vmatprep.subr.mxu0 0.0
    %1462 = vmatpush1.msra.mxu0 0.0
    %1463 = vmatprep.subr.mxu0 0.0
    %1464 = vmatpush1.msra.mxu0 %v64
    %1465 = vmatprep.subr.mxu0 0.0
    %1466 = vmatpush1.msra.mxu0 %v63
    %1467 = vmatprep.subr.mxu0 0.0
    %1468 = vmatpush1.msra.mxu0 %v62
    %1469 = vmatprep.subr.mxu0 0.0
    %1470 = vmatpush1.msra.mxu0 %v61
    %1471 = vmatprep.subr.mxu0 0.0
    %1472 = vmatpush2.msra.mxu0 0.0
    %1473 = vmatprep.subr.mxu0 0.0
    %1474 = vmatpush2.msra.mxu0 0.0
    %1475 = vmatprep.subr.mxu0 0.0
    %1476 = vmatpush2.msra.mxu0 0.0
    %1477 = vmatprep.subr.mxu0 0.0
    %1478 = vmatpush2.msra.mxu0 0.0
    %1479 = vmatprep.subr.mxu0 0.0
    %1480 = vmatpush2.msra.mxu0 0.0
    %1481 = vmatprep.subr.mxu0 0.0
    %1482 = vmatpush2.msra.mxu0 0.0
    %1483 = vmatprep.subr.mxu0 0.0
    %1484 = vmatpush2.msra.mxu0 0.0
    %1485 = vmatprep.subr.mxu0 0.0
    %1486 = vmatpush2.msra.mxu0 0.0
    %1487 = vmatprep.subr.mxu0 0.0
    %1488 = vmatpush2.msra.mxu0 0.0
    %1489 = vmatprep.subr.mxu0 0.0
    %1490 = vmatpush2.msra.mxu0 0.0
    %1491 = vmatprep.subr.mxu0 0.0
    %1492 = vmatpush2.msra.mxu0 0.0
    %1493 = vmatprep.subr.mxu0 0.0
    %1494 = vmatpush2.msra.mxu0 0.0
    %1495 = vmatprep.subr.mxu0 0.0
    %1496 = vmatpush2.msra.mxu0 0.0
    %1497 = vmatprep.subr.mxu0 0.0
    %1498 = vmatpush2.msra.mxu0 0.0
    %1499 = vmatprep.subr.mxu0 0.0
    %1500 = vmatpush2.msra.mxu0 0.0
    %1501 = vmatprep.subr.mxu0 0.0
    %1502 = vmatpush2.msra.mxu0 0.0
    %1503 = vmatprep.mubr.f32.mxu0 0.0
    %1504 = vmatmul.mubr.f32.gmra.mxu0 %v1340
    %v1505 = vpop.f32.mrf.mxu0
    %v1506 = vadd.f32 0.0, %v1505
    %v1507 = vpop.f32.mrf.mxu0
    %1508 = vdwg.mxu0
    %v1509 = vadd.f32 %v1438, %v1506
    %v1510 = vxor.u32 %v1509, 2147483648
    %v1511 = vmul.f32 %v1510, 1.442695
    %v1512 = vpow.pop %v1511
    %v1513 = vadd.f32 %v1512, 1.0
    %v1514 = vrcp.pop %v1513
    %v1515 = vmul.f32 1.0, %v1514
    %v1516 = vtanh.pop %v1509
    %v1517 = vmul.f32 %v1515, %v1255
    %1519 = vrot.lane.b32.xlu0 %v1516, 64
    %v1520 = vpop.permute.xlu0 %1519
    %v1522 = vmul.f32 %v1515, %v1520
    %1524 = vrot.lane.b32.xlu0 %v1522, 32
    %v1525 = vpop.permute.xlu0 %1524
    %v1527 = vadd.f32 %v1517, %v1525
    %v1528 = vtanh.pop %v1527
    %1530 = vrot.lane.b32.xlu0 %v1528, 64
    %v1531 = vpop.permute.xlu0 %1530
    %v1533 = vmul.f32 %v1515, %v1531
    %1535 = vrot.lane.b32.xlu0 %v1436, 32
    %v1536 = vpop.permute.xlu0 %1535
    %v1537 = vsel %vm65, %v1536, 0
    %1539 = vmatprep.subr.mxu0 0.0
    %1540 = vmatpush1.msra.mxu0 0.0
    %1541 = vmatprep.subr.mxu0 0.0
    %1542 = vmatpush1.msra.mxu0 0.0
    %1543 = vmatprep.subr.mxu0 0.0
    %1544 = vmatpush1.msra.mxu0 0.0
    %1545 = vmatprep.subr.mxu0 0.0
    %1546 = vmatpush1.msra.mxu0 0.0
    %1547 = vmatprep.subr.mxu0 0.0
    %1548 = vmatpush1.msra.mxu0 0.0
    %1549 = vmatprep.subr.mxu0 0.0
    %1550 = vmatpush1.msra.mxu0 0.0
    %1551 = vmatprep.subr.mxu0 0.0
    %1552 = vmatpush1.msra.mxu0 0.0
    %1553 = vmatprep.subr.mxu0 0.0
    %1554 = vmatpush1.msra.mxu0 0.0
    %1555 = vmatprep.subr.mxu0 0.0
    %1556 = vmatpush1.msra.mxu0 0.0
    %1557 = vmatprep.subr.mxu0 0.0
    %1558 = vmatpush1.msra.mxu0 0.0
    %1559 = vmatprep.subr.mxu0 0.0
    %1560 = vmatpush1.msra.mxu0 0.0
    %1561 = vmatprep.subr.mxu0 0.0
    %1562 = vmatpush1.msra.mxu0 0.0
    %1563 = vmatprep.subr.mxu0 0.0
    %1564 = vmatpush1.msra.mxu0 %v171
    %1565 = vmatprep.subr.mxu0 0.0
    %1566 = vmatpush1.msra.mxu0 %v170
    %1567 = vmatprep.subr.mxu0 0.0
    %1568 = vmatpush1.msra.mxu0 %v169
    %1569 = vmatprep.subr.mxu0 0.0
    %1570 = vmatpush1.msra.mxu0 %v168
    %1571 = vmatprep.subr.mxu0 0.0
    %1572 = vmatpush2.msra.mxu0 0.0
    %1573 = vmatprep.subr.mxu0 0.0
    %1574 = vmatpush2.msra.mxu0 0.0
    %1575 = vmatprep.subr.mxu0 0.0
    %1576 = vmatpush2.msra.mxu0 0.0
    %1577 = vmatprep.subr.mxu0 0.0
    %1578 = vmatpush2.msra.mxu0 0.0
    %1579 = vmatprep.subr.mxu0 0.0
    %1580 = vmatpush2.msra.mxu0 0.0
    %1581 = vmatprep.subr.mxu0 0.0
    %1582 = vmatpush2.msra.mxu0 0.0
    %1583 = vmatprep.subr.mxu0 0.0
    %1584 = vmatpush2.msra.mxu0 0.0
    %1585 = vmatprep.subr.mxu0 0.0
    %1586 = vmatpush2.msra.mxu0 0.0
    %1587 = vmatprep.subr.mxu0 0.0
    %1588 = vmatpush2.msra.mxu0 0.0
    %1589 = vmatprep.subr.mxu0 0.0
    %1590 = vmatpush2.msra.mxu0 0.0
    %1591 = vmatprep.subr.mxu0 0.0
    %1592 = vmatpush2.msra.mxu0 0.0
    %1593 = vmatprep.subr.mxu0 0.0
    %1594 = vmatpush2.msra.mxu0 0.0
    %1595 = vmatprep.subr.mxu0 0.0
    %1596 = vmatpush2.msra.mxu0 0.0
    %1597 = vmatprep.subr.mxu0 0.0
    %1598 = vmatpush2.msra.mxu0 0.0
    %1599 = vmatprep.subr.mxu0 0.0
    %1600 = vmatpush2.msra.mxu0 0.0
    %1601 = vmatprep.subr.mxu0 0.0
    %1602 = vmatpush2.msra.mxu0 0.0
    %1603 = vmatprep.mubr.f32.mxu0 0.0
    %1604 = vmatmul.mubr.f32.gmra.mxu0 %v1537
    %v1605 = vpop.f32.mrf.mxu0
    %v1606 = vadd.f32 0.0, %v1605
    %v1607 = vpop.f32.mrf.mxu0
    %1608 = vdwg.mxu0
    %1610 = vrot.lane.b32.xlu0 %v1533, 32
    %v1611 = vpop.permute.xlu0 %1610
    %v1612 = vsel %vm65, %v1611, 0
    %1614 = vmatprep.subr.mxu0 0.0
    %1615 = vmatpush1.msra.mxu0 0.0
    %1616 = vmatprep.subr.mxu0 0.0
    %1617 = vmatpush1.msra.mxu0 0.0
    %1618 = vmatprep.subr.mxu0 0.0
    %1619 = vmatpush1.msra.mxu0 0.0
    %1620 = vmatprep.subr.mxu0 0.0
    %1621 = vmatpush1.msra.mxu0 0.0
    %1622 = vmatprep.subr.mxu0 0.0
    %1623 = vmatpush1.msra.mxu0 0.0
    %1624 = vmatprep.subr.mxu0 0.0
    %1625 = vmatpush1.msra.mxu0 0.0
    %1626 = vmatprep.subr.mxu0 0.0
    %1627 = vmatpush1.msra.mxu0 0.0
    %1628 = vmatprep.subr.mxu0 0.0
    %1629 = vmatpush1.msra.mxu0 0.0
    %1630 = vmatprep.subr.mxu0 0.0
    %1631 = vmatpush1.msra.mxu0 0.0
    %1632 = vmatprep.subr.mxu0 0.0
    %1633 = vmatpush1.msra.mxu0 0.0
    %1634 = vmatprep.subr.mxu0 0.0
    %1635 = vmatpush1.msra.mxu0 0.0
    %1636 = vmatprep.subr.mxu0 0.0
    %1637 = vmatpush1.msra.mxu0 0.0
    %1638 = vmatprep.subr.mxu0 0.0
    %1639 = vmatpush1.msra.mxu0 %v167
    %1640 = vmatprep.subr.mxu0 0.0
    %1641 = vmatpush1.msra.mxu0 %v166
    %1642 = vmatprep.subr.mxu0 0.0
    %1643 = vmatpush1.msra.mxu0 %v165
    %1644 = vmatprep.subr.mxu0 0.0
    %1645 = vmatpush1.msra.mxu0 %v164
    %1646 = vmatprep.subr.mxu0 0.0
    %1647 = vmatpush2.msra.mxu0 0.0
    %1648 = vmatprep.subr.mxu0 0.0
    %1649 = vmatpush2.msra.mxu0 0.0
    %1650 = vmatprep.subr.mxu0 0.0
    %1651 = vmatpush2.msra.mxu0 0.0
    %1652 = vmatprep.subr.mxu0 0.0
    %1653 = vmatpush2.msra.mxu0 0.0
    %1654 = vmatprep.subr.mxu0 0.0
    %1655 = vmatpush2.msra.mxu0 0.0
    %1656 = vmatprep.subr.mxu0 0.0
    %1657 = vmatpush2.msra.mxu0 0.0
    %1658 = vmatprep.subr.mxu0 0.0
    %1659 = vmatpush2.msra.mxu0 0.0
    %1660 = vmatprep.subr.mxu0 0.0
    %1661 = vmatpush2.msra.mxu0 0.0
    %1662 = vmatprep.subr.mxu0 0.0
    %1663 = vmatpush2.msra.mxu0 0.0
    %1664 = vmatprep.subr.mxu0 0.0
    %1665 = vmatpush2.msra.mxu0 0.0
    %1666 = vmatprep.subr.mxu0 0.0
    %1667 = vmatpush2.msra.mxu0 0.0
    %1668 = vmatprep.subr.mxu0 0.0
    %1669 = vmatpush2.msra.mxu0 0.0
    %1670 = vmatprep.subr.mxu0 0.0
    %1671 = vmatpush2.msra.mxu0 0.0
    %1672 = vmatprep.subr.mxu0 0.0
    %1673 = vmatpush2.msra.mxu0 0.0
    %1674 = vmatprep.subr.mxu0 0.0
    %1675 = vmatpush2.msra.mxu0 0.0
    %1676 = vmatprep.subr.mxu0 0.0
    %1677 = vmatpush2.msra.mxu0 0.0
    %1678 = vmatprep.mubr.f32.mxu0 0.0
    %1679 = vmatmul.mubr.f32.gmra.mxu0 %v1612
    %v1680 = vpop.f32.mrf.mxu0
    %v1681 = vadd.f32 %v1606, %v1680
    %v1682 = vpop.f32.mrf.mxu0
    %1683 = vdwg.mxu0
    %v1684 = vadd.f32 %v1681, %v322
    %v1685 = vxor.u32 %v1684, 2147483648
    %v1686 = vmul.f32 %v1685, 1.442695
    %v1687 = vpow.pop %v1686
    %v1688 = vadd.f32 %v1687, 1.0
    %v1689 = vrcp.pop %v1688
    %v1690 = vmul.f32 1.0, %v1689
    %v1691 = vtanh.pop %v1684
    %v1692 = vmul.f32 %v1690, %v1430
    %1694 = vrot.lane.b32.xlu0 %v1691, 64
    %v1695 = vpop.permute.xlu0 %1694
    %v1697 = vmul.f32 %v1690, %v1695
    %1699 = vrot.lane.b32.xlu0 %v1697, 32
    %v1700 = vpop.permute.xlu0 %1699
    %v1702 = vadd.f32 %v1692, %v1700
    %v1703 = vtanh.pop %v1702
    %1705 = vrot.lane.b32.xlu0 %v1703, 64
    %v1706 = vpop.permute.xlu0 %1705
    %v1708 = vmul.f32 %v1690, %v1706
    %v1709 = vlaneseq
    %v1710 = vand.u32 %v1709, 127
    %s1711 = sld [smem:[#allocation2]]
    %p1712 = scmp.gt.s32.totalorder %s1711, 0
    %v1713 = vld [vmem:[%s12] sm:$0xff]
    %s1714 = scalar_select %p1712, 1, 0
    %v1715 = vstv %s1714
    %vm1716 = vcmp.eq.s32.totalorder %v1715, 1
    %v1717 = vsel %vm1716, %v1713, 0
    %1718 = vset.pattern.permute.xlu0 0
    %1719 = vperm.xlu0 %1718, %v1717
    %v1720 = vpop.permute.xlu0 %1719
    %vm1721 = vcmp.eq.s32.totalorder %v1710, %v1720
    %v1722 = vsel %vm1721, 1, 0
    %v1723 = vcvt.s32.f32 %v1722
    %v1724 = vld [vmem:[%s5] sm:$0xff]
    %v1725 = vld [vmem:[%s5 + $0x8] sm:$0xff]
    %v1726 = vld [vmem:[%s5 + $0x10] sm:$0xff]
    %v1727 = vld [vmem:[%s5 + $0x18] sm:$0xff]
    %v1728 = vld [vmem:[%s5 + $0x20] sm:$0xff]
    %v1729 = vld [vmem:[%s5 + $0x28] sm:$0xff]
    %v1730 = vld [vmem:[%s5 + $0x30] sm:$0xff]
    %v1731 = vld [vmem:[%s5 + $0x38] sm:$0xff]
    %v1732 = vld [vmem:[%s5 + $0x40] sm:$0xff]
    %v1733 = vld [vmem:[%s5 + $0x48] sm:$0xff]
    %v1734 = vld [vmem:[%s5 + $0x50] sm:$0xff]
    %v1735 = vld [vmem:[%s5 + $0x58] sm:$0xff]
    %v1736 = vld [vmem:[%s5 + $0x60] sm:$0xff]
    %v1737 = vld [vmem:[%s5 + $0x68] sm:$0xff]
    %v1738 = vld [vmem:[%s5 + $0x70] sm:$0xff]
    %v1739 = vld [vmem:[%s5 + $0x78] sm:$0xff]
    %v1740 = vld [vmem:[%s6] sm:$0xff]
    %v1741 = vld [vmem:[%s6 + $0x8] sm:$0xff]
    %v1742 = vld [vmem:[%s6 + $0x10] sm:$0xff]
    %v1743 = vld [vmem:[%s6 + $0x18] sm:$0xff]
    %1744 = vmatprep.subr.mxu0 0.0
    %1745 = vmatpush1.msra.mxu0 0.0
    %1746 = vmatprep.subr.mxu0 0.0
    %1747 = vmatpush1.msra.mxu0 0.0
    %1748 = vmatprep.subr.mxu0 0.0
    %1749 = vmatpush1.msra.mxu0 0.0
    %1750 = vmatprep.subr.mxu0 0.0
    %1751 = vmatpush1.msra.mxu0 0.0
    %1752 = vmatprep.subr.mxu0 0.0
    %1753 = vmatpush1.msra.mxu0 0.0
    %1754 = vmatprep.subr.mxu0 0.0
    %1755 = vmatpush1.msra.mxu0 0.0
    %1756 = vmatprep.subr.mxu0 0.0
    %1757 = vmatpush1.msra.mxu0 0.0
    %1758 = vmatprep.subr.mxu0 0.0
    %1759 = vmatpush1.msra.mxu0 0.0
    %1760 = vmatprep.subr.mxu0 0.0
    %1761 = vmatpush1.msra.mxu0 0.0
    %1762 = vmatprep.subr.mxu0 0.0
    %1763 = vmatpush1.msra.mxu0 0.0
    %1764 = vmatprep.subr.mxu0 0.0
    %1765 = vmatpush1.msra.mxu0 0.0
    %1766 = vmatprep.subr.mxu0 0.0
    %1767 = vmatpush1.msra.mxu0 0.0
    %1768 = vmatprep.subr.mxu0 0.0
    %1769 = vmatpush1.msra.mxu0 %v1743
    %1770 = vmatprep.subr.mxu0 0.0
    %1771 = vmatpush1.msra.mxu0 %v1742
    %1772 = vmatprep.subr.mxu0 0.0
    %1773 = vmatpush1.msra.mxu0 %v1741
    %1774 = vmatprep.subr.mxu0 0.0
    %1775 = vmatpush1.msra.mxu0 %v1740
    %1776 = vmatprep.subr.mxu0 0.0
    %1777 = vmatpush2.msra.mxu0 0.0
    %1778 = vmatprep.subr.mxu0 0.0
    %1779 = vmatpush2.msra.mxu0 0.0
    %1780 = vmatprep.subr.mxu0 0.0
    %1781 = vmatpush2.msra.mxu0 0.0
    %1782 = vmatprep.subr.mxu0 0.0
    %1783 = vmatpush2.msra.mxu0 0.0
    %1784 = vmatprep.subr.mxu0 0.0
    %1785 = vmatpush2.msra.mxu0 0.0
    %1786 = vmatprep.subr.mxu0 0.0
    %1787 = vmatpush2.msra.mxu0 0.0
    %1788 = vmatprep.subr.mxu0 0.0
    %1789 = vmatpush2.msra.mxu0 0.0
    %1790 = vmatprep.subr.mxu0 0.0
    %1791 = vmatpush2.msra.mxu0 0.0
    %1792 = vmatprep.subr.mxu0 0.0
    %1793 = vmatpush2.msra.mxu0 0.0
    %1794 = vmatprep.subr.mxu0 0.0
    %1795 = vmatpush2.msra.mxu0 0.0
    %1796 = vmatprep.subr.mxu0 0.0
    %1797 = vmatpush2.msra.mxu0 0.0
    %1798 = vmatprep.subr.mxu0 0.0
    %1799 = vmatpush2.msra.mxu0 0.0
    %1800 = vmatprep.subr.mxu0 0.0
    %1801 = vmatpush2.msra.mxu0 0.0
    %1802 = vmatprep.subr.mxu0 0.0
    %1803 = vmatpush2.msra.mxu0 0.0
    %1804 = vmatprep.subr.mxu0 0.0
    %1805 = vmatpush2.msra.mxu0 0.0
    %1806 = vmatprep.subr.mxu0 0.0
    %1807 = vmatpush2.msra.mxu0 0.0
    %1808 = vmatprep.mubr.f32.mxu0 0.0
    %1809 = vmatmul.mubr.f32.gmra.mxu0 %v1612
    %v1810 = vpop.f32.mrf.mxu0
    %v1811 = vadd.f32 0.0, %v1810
    %v1812 = vpop.f32.mrf.mxu0
    %1813 = vdwg.mxu0
    %1814 = vmatprep.subr.mxu0 0.0
    %1815 = vmatpush1.msra.mxu0 %v1739
    %1816 = vmatprep.subr.mxu0 0.0
    %1817 = vmatpush1.msra.mxu0 %v1738
    %1818 = vmatprep.subr.mxu0 0.0
    %1819 = vmatpush1.msra.mxu0 %v1737
    %1820 = vmatprep.subr.mxu0 0.0
    %1821 = vmatpush1.msra.mxu0 %v1736
    %1822 = vmatprep.subr.mxu0 0.0
    %1823 = vmatpush1.msra.mxu0 %v1735
    %1824 = vmatprep.subr.mxu0 0.0
    %1825 = vmatpush1.msra.mxu0 %v1734
    %1826 = vmatprep.subr.mxu0 0.0
    %1827 = vmatpush1.msra.mxu0 %v1733
    %1828 = vmatprep.subr.mxu0 0.0
    %1829 = vmatpush1.msra.mxu0 %v1732
    %1830 = vmatprep.subr.mxu0 0.0
    %1831 = vmatpush1.msra.mxu0 %v1731
    %1832 = vmatprep.subr.mxu0 0.0
    %1833 = vmatpush1.msra.mxu0 %v1730
    %1834 = vmatprep.subr.mxu0 0.0
    %1835 = vmatpush1.msra.mxu0 %v1729
    %1836 = vmatprep.subr.mxu0 0.0
    %1837 = vmatpush1.msra.mxu0 %v1728
    %1838 = vmatprep.subr.mxu0 0.0
    %1839 = vmatpush1.msra.mxu0 %v1727
    %1840 = vmatprep.subr.mxu0 0.0
    %1841 = vmatpush1.msra.mxu0 %v1726
    %1842 = vmatprep.subr.mxu0 0.0
    %1843 = vmatpush1.msra.mxu0 %v1725
    %1844 = vmatprep.subr.mxu0 0.0
    %1845 = vmatpush1.msra.mxu0 %v1724
    %1846 = vmatprep.subr.mxu0 0.0
    %1847 = vmatpush2.msra.mxu0 0.0
    %1848 = vmatprep.subr.mxu0 0.0
    %1849 = vmatpush2.msra.mxu0 0.0
    %1850 = vmatprep.subr.mxu0 0.0
    %1851 = vmatpush2.msra.mxu0 0.0
    %1852 = vmatprep.subr.mxu0 0.0
    %1853 = vmatpush2.msra.mxu0 0.0
    %1854 = vmatprep.subr.mxu0 0.0
    %1855 = vmatpush2.msra.mxu0 0.0
    %1856 = vmatprep.subr.mxu0 0.0
    %1857 = vmatpush2.msra.mxu0 0.0
    %1858 = vmatprep.subr.mxu0 0.0
    %1859 = vmatpush2.msra.mxu0 0.0
    %1860 = vmatprep.subr.mxu0 0.0
    %1861 = vmatpush2.msra.mxu0 0.0
    %1862 = vmatprep.subr.mxu0 0.0
    %1863 = vmatpush2.msra.mxu0 0.0
    %1864 = vmatprep.subr.mxu0 0.0
    %1865 = vmatpush2.msra.mxu0 0.0
    %1866 = vmatprep.subr.mxu0 0.0
    %1867 = vmatpush2.msra.mxu0 0.0
    %1868 = vmatprep.subr.mxu0 0.0
    %1869 = vmatpush2.msra.mxu0 0.0
    %1870 = vmatprep.subr.mxu0 0.0
    %1871 = vmatpush2.msra.mxu0 0.0
    %1872 = vmatprep.subr.mxu0 0.0
    %1873 = vmatpush2.msra.mxu0 0.0
    %1874 = vmatprep.subr.mxu0 0.0
    %1875 = vmatpush2.msra.mxu0 0.0
    %1876 = vmatprep.subr.mxu0 0.0
    %1877 = vmatpush2.msra.mxu0 0.0
    %1878 = vmatprep.mubr.f32.mxu0 0.0
    %1879 = vmatmul.mubr.f32.gmra.mxu0 %v1723
    %v1880 = vpop.f32.mrf.mxu0
    %v1881 = vadd.f32 %v1811, %v1880
    %v1882 = vpop.f32.mrf.mxu0
    %1883 = vdwg.mxu0
    %v1884 = vxor.u32 %v1881, 2147483648
    %v1885 = vmul.f32 %v1884, 1.442695
    %v1886 = vpow.pop %v1885
    %v1887 = vadd.f32 %v1886, 1.0
    %v1888 = vrcp.pop %v1887
    %v1889 = vmul.f32 1.0, %v1888
    %v1890 = vtanh.pop %v1881
    %v1891 = vmul.f32 %v1889, %v1527
    %1893 = vrot.lane.b32.xlu0 %v1890, 64
    %v1894 = vpop.permute.xlu0 %1893
    %v1896 = vmul.f32 %v1889, %v1894
    %1898 = vrot.lane.b32.xlu0 %v1896, 32
    %v1899 = vpop.permute.xlu0 %1898
    %v1901 = vadd.f32 %v1891, %v1899
    %v1902 = vtanh.pop %v1901
    %1904 = vrot.lane.b32.xlu0 %v1902, 64
    %v1905 = vpop.permute.xlu0 %1904
    %v1907 = vmul.f32 %v1889, %v1905
    %v1908 = vld [vmem:[%s7] sm:$0xff]
    %v1909 = vld [vmem:[%s7 + $0x8] sm:$0xff]
    %v1910 = vld [vmem:[%s7 + $0x10] sm:$0xff]
    %v1911 = vld [vmem:[%s7 + $0x18] sm:$0xff]
    %v1912 = vld [vmem:[%s8] sm:$0xff]
    %v1913 = vld [vmem:[%s8 + $0x8] sm:$0xff]
    %v1914 = vld [vmem:[%s8 + $0x10] sm:$0xff]
    %v1915 = vld [vmem:[%s8 + $0x18] sm:$0xff]
    %1917 = vrot.lane.b32.xlu0 %v1708, 32
    %v1918 = vpop.permute.xlu0 %1917
    %v1919 = vsel %vm65, %v1918, 0
    %1921 = vmatprep.subr.mxu0 0.0
    %1922 = vmatpush1.msra.mxu0 0.0
    %1923 = vmatprep.subr.mxu0 0.0
    %1924 = vmatpush1.msra.mxu0 0.0
    %1925 = vmatprep.subr.mxu0 0.0
    %1926 = vmatpush1.msra.mxu0 0.0
    %1927 = vmatprep.subr.mxu0 0.0
    %1928 = vmatpush1.msra.mxu0 0.0
    %1929 = vmatprep.subr.mxu0 0.0
    %1930 = vmatpush1.msra.mxu0 0.0
    %1931 = vmatprep.subr.mxu0 0.0
    %1932 = vmatpush1.msra.mxu0 0.0
    %1933 = vmatprep.subr.mxu0 0.0
    %1934 = vmatpush1.msra.mxu0 0.0
    %1935 = vmatprep.subr.mxu0 0.0
    %1936 = vmatpush1.msra.mxu0 0.0
    %1937 = vmatprep.subr.mxu0 0.0
    %1938 = vmatpush1.msra.mxu0 0.0
    %1939 = vmatprep.subr.mxu0 0.0
    %1940 = vmatpush1.msra.mxu0 0.0
    %1941 = vmatprep.subr.mxu0 0.0
    %1942 = vmatpush1.msra.mxu0 0.0
    %1943 = vmatprep.subr.mxu0 0.0
    %1944 = vmatpush1.msra.mxu0 0.0
    %1945 = vmatprep.subr.mxu0 0.0
    %1946 = vmatpush1.msra.mxu0 %v1915
    %1947 = vmatprep.subr.mxu0 0.0
    %1948 = vmatpush1.msra.mxu0 %v1914
    %1949 = vmatprep.subr.mxu0 0.0
    %1950 = vmatpush1.msra.mxu0 %v1913
    %1951 = vmatprep.subr.mxu0 0.0
    %1952 = vmatpush1.msra.mxu0 %v1912
    %1953 = vmatprep.subr.mxu0 0.0
    %1954 = vmatpush2.msra.mxu0 0.0
    %1955 = vmatprep.subr.mxu0 0.0
    %1956 = vmatpush2.msra.mxu0 0.0
    %1957 = vmatprep.subr.mxu0 0.0
    %1958 = vmatpush2.msra.mxu0 0.0
    %1959 = vmatprep.subr.mxu0 0.0
    %1960 = vmatpush2.msra.mxu0 0.0
    %1961 = vmatprep.subr.mxu0 0.0
    %1962 = vmatpush2.msra.mxu0 0.0
    %1963 = vmatprep.subr.mxu0 0.0
    %1964 = vmatpush2.msra.mxu0 0.0
    %1965 = vmatprep.subr.mxu0 0.0
    %1966 = vmatpush2.msra.mxu0 0.0
    %1967 = vmatprep.subr.mxu0 0.0
    %1968 = vmatpush2.msra.mxu0 0.0
    %1969 = vmatprep.subr.mxu0 0.0
    %1970 = vmatpush2.msra.mxu0 0.0
    %1971 = vmatprep.subr.mxu0 0.0
    %1972 = vmatpush2.msra.mxu0 0.0
    %1973 = vmatprep.subr.mxu0 0.0
    %1974 = vmatpush2.msra.mxu0 0.0
    %1975 = vmatprep.subr.mxu0 0.0
    %1976 = vmatpush2.msra.mxu0 0.0
    %1977 = vmatprep.subr.mxu0 0.0
    %1978 = vmatpush2.msra.mxu0 0.0
    %1979 = vmatprep.subr.mxu0 0.0
    %1980 = vmatpush2.msra.mxu0 0.0
    %1981 = vmatprep.subr.mxu0 0.0
    %1982 = vmatpush2.msra.mxu0 0.0
    %1983 = vmatprep.subr.mxu0 0.0
    %1984 = vmatpush2.msra.mxu0 0.0
    %1985 = vmatprep.mubr.f32.mxu0 0.0
    %1986 = vmatmul.mubr.f32.gmra.mxu0 %v1919
    %v1987 = vpop.f32.mrf.mxu0
    %v1988 = vadd.f32 0.0, %v1987
    %v1989 = vpop.f32.mrf.mxu0
    %1990 = vdwg.mxu0
    %1992 = vrot.lane.b32.xlu0 %v1907, 32
    %v1993 = vpop.permute.xlu0 %1992
    %v1994 = vsel %vm65, %v1993, 0
    %1996 = vmatprep.subr.mxu0 0.0
    %1997 = vmatpush1.msra.mxu0 0.0
    %1998 = vmatprep.subr.mxu0 0.0
    %1999 = vmatpush1.msra.mxu0 0.0
    %2000 = vmatprep.subr.mxu0 0.0
    %2001 = vmatpush1.msra.mxu0 0.0
    %2002 = vmatprep.subr.mxu0 0.0
    %2003 = vmatpush1.msra.mxu0 0.0
    %2004 = vmatprep.subr.mxu0 0.0
    %2005 = vmatpush1.msra.mxu0 0.0
    %2006 = vmatprep.subr.mxu0 0.0
    %2007 = vmatpush1.msra.mxu0 0.0
    %2008 = vmatprep.subr.mxu0 0.0
    %2009 = vmatpush1.msra.mxu0 0.0
    %2010 = vmatprep.subr.mxu0 0.0
    %2011 = vmatpush1.msra.mxu0 0.0
    %2012 = vmatprep.subr.mxu0 0.0
    %2013 = vmatpush1.msra.mxu0 0.0
    %2014 = vmatprep.subr.mxu0 0.0
    %2015 = vmatpush1.msra.mxu0 0.0
    %2016 = vmatprep.subr.mxu0 0.0
    %2017 = vmatpush1.msra.mxu0 0.0
    %2018 = vmatprep.subr.mxu0 0.0
    %2019 = vmatpush1.msra.mxu0 0.0
    %2020 = vmatprep.subr.mxu0 0.0
    %2021 = vmatpush1.msra.mxu0 %v1911
    %2022 = vmatprep.subr.mxu0 0.0
    %2023 = vmatpush1.msra.mxu0 %v1910
    %2024 = vmatprep.subr.mxu0 0.0
    %2025 = vmatpush1.msra.mxu0 %v1909
    %2026 = vmatprep.subr.mxu0 0.0
    %2027 = vmatpush1.msra.mxu0 %v1908
    %2028 = vmatprep.subr.mxu0 0.0
    %2029 = vmatpush2.msra.mxu0 0.0
    %2030 = vmatprep.subr.mxu0 0.0
    %2031 = vmatpush2.msra.mxu0 0.0
    %2032 = vmatprep.subr.mxu0 0.0
    %2033 = vmatpush2.msra.mxu0 0.0
    %2034 = vmatprep.subr.mxu0 0.0
    %2035 = vmatpush2.msra.mxu0 0.0
    %2036 = vmatprep.subr.mxu0 0.0
    %2037 = vmatpush2.msra.mxu0 0.0
    %2038 = vmatprep.subr.mxu0 0.0
    %2039 = vmatpush2.msra.mxu0 0.0
    %2040 = vmatprep.subr.mxu0 0.0
    %2041 = vmatpush2.msra.mxu0 0.0
    %2042 = vmatprep.subr.mxu0 0.0
    %2043 = vmatpush2.msra.mxu0 0.0
    %2044 = vmatprep.subr.mxu0 0.0
    %2045 = vmatpush2.msra.mxu0 0.0
    %2046 = vmatprep.subr.mxu0 0.0
    %2047 = vmatpush2.msra.mxu0 0.0
    %2048 = vmatprep.subr.mxu0 0.0
    %2049 = vmatpush2.msra.mxu0 0.0
    %2050 = vmatprep.subr.mxu0 0.0
    %2051 = vmatpush2.msra.mxu0 0.0
    %2052 = vmatprep.subr.mxu0 0.0
    %2053 = vmatpush2.msra.mxu0 0.0
    %2054 = vmatprep.subr.mxu0 0.0
    %2055 = vmatpush2.msra.mxu0 0.0
    %2056 = vmatprep.subr.mxu0 0.0
    %2057 = vmatpush2.msra.mxu0 0.0
    %2058 = vmatprep.subr.mxu0 0.0
    %2059 = vmatpush2.msra.mxu0 0.0
    %2060 = vmatprep.mubr.f32.mxu0 0.0
    %2061 = vmatmul.mubr.f32.gmra.mxu0 %v1994
    %v2062 = vpop.f32.mrf.mxu0
    %v2063 = vadd.f32 %v1988, %v2062
    %v2064 = vpop.f32.mrf.mxu0
    %2065 = vdwg.mxu0
    %v2066 = vld [vmem:[%s9] sm:$0x1]
    %v2068 = vlaneseq
    %v2069 = vshrl.u32 %v2068, 7
    %v2070 = vsub.s32 0, %v2069
    %v2071 = vrot.slane %v2066, %v2070
    %v2073 = vadd.f32 %v2063, %v2071
    %v2074 = vxor.u32 %v2073, 2147483648
    %v2075 = vmul.f32 %v2074, 1.442695
    %v2076 = vpow.pop %v2075
    %v2077 = vadd.f32 %v2076, 1.0
    %v2078 = vrcp.pop %v2077
    %v2079 = vmul.f32 1.0, %v2078
    %v2080 = vtanh.pop %v2073
    %v2081 = vmul.f32 %v2079, %v1702
    %2083 = vrot.lane.b32.xlu0 %v2080, 64
    %v2084 = vpop.permute.xlu0 %2083
    %v2086 = vmul.f32 %v2079, %v2084
    %2088 = vrot.lane.b32.xlu0 %v2086, 32
    %v2089 = vpop.permute.xlu0 %2088
    %v2091 = vadd.f32 %v2081, %v2089
    %v2092 = vtanh.pop %v2091
    %2094 = vrot.lane.b32.xlu0 %v2092, 64
    %v2095 = vpop.permute.xlu0 %2094
    %v2097 = vmul.f32 %v2079, %v2095
    %v2098 = vld [vmem:[%s10] sm:$0xff]
    %v2099 = vld [vmem:[%s10 + $0x8] sm:$0xff]
    %v2100 = vld [vmem:[%s10 + $0x10] sm:$0xff]
    %v2101 = vld [vmem:[%s10 + $0x18] sm:$0xff]
    %v2102 = vld [vmem:[%s11] sm:$0x1]
    %v2104 = vlaneseq
    %v2105 = vshrl.u32 %v2104, 7
    %v2106 = vsub.s32 0, %v2105
    %v2107 = vrot.slane %v2102, %v2106
    %2110 = vrot.lane.b32.xlu0 %v2097, 32
    %v2111 = vpop.permute.xlu0 %2110
    %v2112 = vsel %vm65, %v2111, 0
    %2114 = vmatprep.subr.mxu0 0.0
    %2115 = vmatpush1.msra.mxu0 0.0
    %2116 = vmatprep.subr.mxu0 0.0
    %2117 = vmatpush1.msra.mxu0 0.0
    %2118 = vmatprep.subr.mxu0 0.0
    %2119 = vmatpush1.msra.mxu0 0.0
    %2120 = vmatprep.subr.mxu0 0.0
    %2121 = vmatpush1.msra.mxu0 0.0
    %2122 = vmatprep.subr.mxu0 0.0
    %2123 = vmatpush1.msra.mxu0 0.0
    %2124 = vmatprep.subr.mxu0 0.0
    %2125 = vmatpush1.msra.mxu0 0.0
    %2126 = vmatprep.subr.mxu0 0.0
    %2127 = vmatpush1.msra.mxu0 0.0
    %2128 = vmatprep.subr.mxu0 0.0
    %2129 = vmatpush1.msra.mxu0 0.0
    %2130 = vmatprep.subr.mxu0 0.0
    %2131 = vmatpush1.msra.mxu0 0.0
    %2132 = vmatprep.subr.mxu0 0.0
    %2133 = vmatpush1.msra.mxu0 0.0
    %2134 = vmatprep.subr.mxu0 0.0
    %2135 = vmatpush1.msra.mxu0 0.0
    %2136 = vmatprep.subr.mxu0 0.0
    %2137 = vmatpush1.msra.mxu0 0.0
    %2138 = vmatprep.subr.mxu0 0.0
    %2139 = vmatpush1.msra.mxu0 %v2101
    %2140 = vmatprep.subr.mxu0 0.0
    %2141 = vmatpush1.msra.mxu0 %v2100
    %2142 = vmatprep.subr.mxu0 0.0
    %2143 = vmatpush1.msra.mxu0 %v2099
    %2144 = vmatprep.subr.mxu0 0.0
    %2145 = vmatpush1.msra.mxu0 %v2098
    %2146 = vmatprep.subr.mxu0 0.0
    %2147 = vmatpush2.msra.mxu0 0.0
    %2148 = vmatprep.subr.mxu0 0.0
    %2149 = vmatpush2.msra.mxu0 0.0
    %2150 = vmatprep.subr.mxu0 0.0
    %2151 = vmatpush2.msra.mxu0 0.0
    %2152 = vmatprep.subr.mxu0 0.0
    %2153 = vmatpush2.msra.mxu0 0.0
    %2154 = vmatprep.subr.mxu0 0.0
    %2155 = vmatpush2.msra.mxu0 0.0
    %2156 = vmatprep.subr.mxu0 0.0
    %2157 = vmatpush2.msra.mxu0 0.0
    %2158 = vmatprep.subr.mxu0 0.0
    %2159 = vmatpush2.msra.mxu0 0.0
    %2160 = vmatprep.subr.mxu0 0.0
    %2161 = vmatpush2.msra.mxu0 0.0
    %2162 = vmatprep.subr.mxu0 0.0
    %2163 = vmatpush2.msra.mxu0 0.0
    %2164 = vmatprep.subr.mxu0 0.0
    %2165 = vmatpush2.msra.mxu0 0.0
    %2166 = vmatprep.subr.mxu0 0.0
    %2167 = vmatpush2.msra.mxu0 0.0
    %2168 = vmatprep.subr.mxu0 0.0
    %2169 = vmatpush2.msra.mxu0 0.0
    %2170 = vmatprep.subr.mxu0 0.0
    %2171 = vmatpush2.msra.mxu0 0.0
    %2172 = vmatprep.subr.mxu0 0.0
    %2173 = vmatpush2.msra.mxu0 0.0
    %2174 = vmatprep.subr.mxu0 0.0
    %2175 = vmatpush2.msra.mxu0 0.0
    %2176 = vmatprep.subr.mxu0 0.0
    %2177 = vmatpush2.msra.mxu0 0.0
    %2178 = vmatprep.mubr.f32.mxu0 0.0
    %2179 = vmatmul.mubr.f32.gmra.mxu0 %v2112
    %v2180 = vpop.f32.mrf.mxu0
    %v2181 = vadd.f32 %v2107, %v2180
    %v2182 = vpop.f32.mrf.mxu0
    %2183 = vdwg.mxu0
    %2184 = vst [vmem:[%s14] sm:$0xff] %v2181
    %vm2185 = vcmp.lt.s32.totalorder %v1710, 13
    %v2186 = vsel %vm2185, %v2181, -inf
    %2187 = vmax.xlane.f32.xlu0 %v2186
    %v2188 = vpop.xlane.xlu0 %2187
    %vm2189 = vcmp.ge.f32.partialorder %v2186, %v2188
    %v2190 = vsel %vm2189, %v1710, 128
    %v2191 = vand.u32 %v2190, 65535
    %v2192 = vshra.s32 %v2190, 16
    %v2193 = vcvt.s32.f32 %v2191
    %v2194 = vcvt.s32.f32 %v2192
    %2195 = vmin.xlane.f32.xlu0 %v2194
    %v2196 = vpop.xlane.xlu0 %2195
    %vm2197 = vcmp.eq.f32.partialorder %v2194, %v2196
    %v2198 = vsel %vm2197, %v2193, inf
    %2199 = vmin.xlane.f32.xlu0 %v2198
    %v2200 = vpop.xlane.xlu0 %2199
    %v2201 = vcvt.f32.s32 %v2200
    %v2202 = vcvt.f32.s32 %v2196
    %v2203 = vshll.u32 %v2202, 16
    %v2204 = vadd.s32 %v2203, %v2201
    %s2205 = sld [smem:[#allocation2 + $0x1]]
    %p2206 = scmp.gt.s32.totalorder %s2205, 0
    %s2207 = scalar_lea.vmem %s12, 8
    %v2208 = vld [vmem:[%s2207] sm:$0xff]
    %s2209 = scalar_select %p2206, 1, 0
    %v2210 = vstv %s2209
    %vm2211 = vcmp.eq.s32.totalorder %v2210, 1
    %v2212 = vsel %vm2211, %v2208, %v2204
    %2213 = vset.pattern.permute.xlu0 0
    %2214 = vperm.xlu0 %2213, %v2212
    %v2215 = vpop.permute.xlu0 %2214
    %vm2216 = vcmp.eq.s32.totalorder %v1710, %v2215
    %v2217 = vsel %vm2216, 1, 0
    %v2218 = vcvt.s32.f32 %v2217
    %v2219 = vld [vmem:[%s5] sm:$0xff]
    %v2220 = vld [vmem:[%s5 + $0x8] sm:$0xff]
    %v2221 = vld [vmem:[%s5 + $0x10] sm:$0xff]
    %v2222 = vld [vmem:[%s5 + $0x18] sm:$0xff]
    %v2223 = vld [vmem:[%s5 + $0x20] sm:$0xff]
    %v2224 = vld [vmem:[%s5 + $0x28] sm:$0xff]
    %v2225 = vld [vmem:[%s5 + $0x30] sm:$0xff]
    %v2226 = vld [vmem:[%s5 + $0x38] sm:$0xff]
    %v2227 = vld [vmem:[%s5 + $0x40] sm:$0xff]
    %v2228 = vld [vmem:[%s5 + $0x48] sm:$0xff]
    %v2229 = vld [vmem:[%s5 + $0x50] sm:$0xff]
    %v2230 = vld [vmem:[%s5 + $0x58] sm:$0xff]
    %v2231 = vld [vmem:[%s5 + $0x60] sm:$0xff]
    %v2232 = vld [vmem:[%s5 + $0x68] sm:$0xff]
    %v2233 = vld [vmem:[%s5 + $0x70] sm:$0xff]
    %v2234 = vld [vmem:[%s5 + $0x78] sm:$0xff]
    %v2235 = vld [vmem:[%s6] sm:$0xff]
    %v2236 = vld [vmem:[%s6 + $0x8] sm:$0xff]
    %v2237 = vld [vmem:[%s6 + $0x10] sm:$0xff]
    %v2238 = vld [vmem:[%s6 + $0x18] sm:$0xff]
    %2239 = vmatprep.subr.mxu0 0.0
    %2240 = vmatpush1.msra.mxu0 0.0
    %2241 = vmatprep.subr.mxu0 0.0
    %2242 = vmatpush1.msra.mxu0 0.0
    %2243 = vmatprep.subr.mxu0 0.0
    %2244 = vmatpush1.msra.mxu0 0.0
    %2245 = vmatprep.subr.mxu0 0.0
    %2246 = vmatpush1.msra.mxu0 0.0
    %2247 = vmatprep.subr.mxu0 0.0
    %2248 = vmatpush1.msra.mxu0 0.0
    %2249 = vmatprep.subr.mxu0 0.0
    %2250 = vmatpush1.msra.mxu0 0.0
    %2251 = vmatprep.subr.mxu0 0.0
    %2252 = vmatpush1.msra.mxu0 0.0
    %2253 = vmatprep.subr.mxu0 0.0
    %2254 = vmatpush1.msra.mxu0 0.0
    %2255 = vmatprep.subr.mxu0 0.0
    %2256 = vmatpush1.msra.mxu0 0.0
    %2257 = vmatprep.subr.mxu0 0.0
    %2258 = vmatpush1.msra.mxu0 0.0
    %2259 = vmatprep.subr.mxu0 0.0
    %2260 = vmatpush1.msra.mxu0 0.0
    %2261 = vmatprep.subr.mxu0 0.0
    %2262 = vmatpush1.msra.mxu0 0.0
    %2263 = vmatprep.subr.mxu0 0.0
    %2264 = vmatpush1.msra.mxu0 %v2238
    %2265 = vmatprep.subr.mxu0 0.0
    %2266 = vmatpush1.msra.mxu0 %v2237
    %2267 = vmatprep.subr.mxu0 0.0
    %2268 = vmatpush1.msra.mxu0 %v2236
    %2269 = vmatprep.subr.mxu0 0.0
    %2270 = vmatpush1.msra.mxu0 %v2235
    %2271 = vmatprep.subr.mxu0 0.0
    %2272 = vmatpush2.msra.mxu0 0.0
    %2273 = vmatprep.subr.mxu0 0.0
    %2274 = vmatpush2.msra.mxu0 0.0
    %2275 = vmatprep.subr.mxu0 0.0
    %2276 = vmatpush2.msra.mxu0 0.0
    %2277 = vmatprep.subr.mxu0 0.0
    %2278 = vmatpush2.msra.mxu0 0.0
    %2279 = vmatprep.subr.mxu0 0.0
    %2280 = vmatpush2.msra.mxu0 0.0
    %2281 = vmatprep.subr.mxu0 0.0
    %2282 = vmatpush2.msra.mxu0 0.0
    %2283 = vmatprep.subr.mxu0 0.0
    %2284 = vmatpush2.msra.mxu0 0.0
    %2285 = vmatprep.subr.mxu0 0.0
    %2286 = vmatpush2.msra.mxu0 0.0
    %2287 = vmatprep.subr.mxu0 0.0
    %2288 = vmatpush2.msra.mxu0 0.0
    %2289 = vmatprep.subr.mxu0 0.0
    %2290 = vmatpush2.msra.mxu0 0.0
    %2291 = vmatprep.subr.mxu0 0.0
    %2292 = vmatpush2.msra.mxu0 0.0
    %2293 = vmatprep.subr.mxu0 0.0
    %2294 = vmatpush2.msra.mxu0 0.0
    %2295 = vmatprep.subr.mxu0 0.0
    %2296 = vmatpush2.msra.mxu0 0.0
    %2297 = vmatprep.subr.mxu0 0.0
    %2298 = vmatpush2.msra.mxu0 0.0
    %2299 = vmatprep.subr.mxu0 0.0
    %2300 = vmatpush2.msra.mxu0 0.0
    %2301 = vmatprep.subr.mxu0 0.0
    %2302 = vmatpush2.msra.mxu0 0.0
    %2303 = vmatprep.mubr.f32.mxu0 0.0
    %2304 = vmatmul.mubr.f32.gmra.mxu0 %v1994
    %v2305 = vpop.f32.mrf.mxu0
    %v2306 = vadd.f32 0.0, %v2305
    %v2307 = vpop.f32.mrf.mxu0
    %2308 = vdwg.mxu0
    %2309 = vmatprep.subr.mxu0 0.0
    %2310 = vmatpush1.msra.mxu0 %v2234
    %2311 = vmatprep.subr.mxu0 0.0
    %2312 = vmatpush1.msra.mxu0 %v2233
    %2313 = vmatprep.subr.mxu0 0.0
    %2314 = vmatpush1.msra.mxu0 %v2232
    %2315 = vmatprep.subr.mxu0 0.0
    %2316 = vmatpush1.msra.mxu0 %v2231
    %2317 = vmatprep.subr.mxu0 0.0
    %2318 = vmatpush1.msra.mxu0 %v2230
    %2319 = vmatprep.subr.mxu0 0.0
    %2320 = vmatpush1.msra.mxu0 %v2229
    %2321 = vmatprep.subr.mxu0 0.0
    %2322 = vmatpush1.msra.mxu0 %v2228
    %2323 = vmatprep.subr.mxu0 0.0
    %2324 = vmatpush1.msra.mxu0 %v2227
    %2325 = vmatprep.subr.mxu0 0.0
    %2326 = vmatpush1.msra.mxu0 %v2226
    %2327 = vmatprep.subr.mxu0 0.0
    %2328 = vmatpush1.msra.mxu0 %v2225
    %2329 = vmatprep.subr.mxu0 0.0
    %2330 = vmatpush1.msra.mxu0 %v2224
    %2331 = vmatprep.subr.mxu0 0.0
    %2332 = vmatpush1.msra.mxu0 %v2223
    %2333 = vmatprep.subr.mxu0 0.0
    %2334 = vmatpush1.msra.mxu0 %v2222
    %2335 = vmatprep.subr.mxu0 0.0
    %2336 = vmatpush1.msra.mxu0 %v2221
    %2337 = vmatprep.subr.mxu0 0.0
    %2338 = vmatpush1.msra.mxu0 %v2220
    %2339 = vmatprep.subr.mxu0 0.0
    %2340 = vmatpush1.msra.mxu0 %v2219
    %2341 = vmatprep.subr.mxu0 0.0
    %2342 = vmatpush2.msra.mxu0 0.0
    %2343 = vmatprep.subr.mxu0 0.0
    %2344 = vmatpush2.msra.mxu0 0.0
    %2345 = vmatprep.subr.mxu0 0.0
    %2346 = vmatpush2.msra.mxu0 0.0
    %2347 = vmatprep.subr.mxu0 0.0
    %2348 = vmatpush2.msra.mxu0 0.0
    %2349 = vmatprep.subr.mxu0 0.0
    %2350 = vmatpush2.msra.mxu0 0.0
    %2351 = vmatprep.subr.mxu0 0.0
    %2352 = vmatpush2.msra.mxu0 0.0
    %2353 = vmatprep.subr.mxu0 0.0
    %2354 = vmatpush2.msra.mxu0 0.0
    %2355 = vmatprep.subr.mxu0 0.0
    %2356 = vmatpush2.msra.mxu0 0.0
    %2357 = vmatprep.subr.mxu0 0.0
    %2358 = vmatpush2.msra.mxu0 0.0
    %2359 = vmatprep.subr.mxu0 0.0
    %2360 = vmatpush2.msra.mxu0 0.0
    %2361 = vmatprep.subr.mxu0 0.0
    %2362 = vmatpush2.msra.mxu0 0.0
    %2363 = vmatprep.subr.mxu0 0.0
    %2364 = vmatpush2.msra.mxu0 0.0
    %2365 = vmatprep.subr.mxu0 0.0
    %2366 = vmatpush2.msra.mxu0 0.0
    %2367 = vmatprep.subr.mxu0 0.0
    %2368 = vmatpush2.msra.mxu0 0.0
    %2369 = vmatprep.subr.mxu0 0.0
    %2370 = vmatpush2.msra.mxu0 0.0
    %2371 = vmatprep.subr.mxu0 0.0
    %2372 = vmatpush2.msra.mxu0 0.0
    %2373 = vmatprep.mubr.f32.mxu0 0.0
    %2374 = vmatmul.mubr.f32.gmra.mxu0 %v2218
    %v2375 = vpop.f32.mrf.mxu0
    %v2376 = vadd.f32 %v2306, %v2375
    %v2377 = vpop.f32.mrf.mxu0
    %2378 = vdwg.mxu0
    %v2379 = vxor.u32 %v2376, 2147483648
    %v2380 = vmul.f32 %v2379, 1.442695
    %v2381 = vpow.pop %v2380
    %v2382 = vadd.f32 %v2381, 1.0
    %v2383 = vrcp.pop %v2382
    %v2384 = vmul.f32 1.0, %v2383
    %v2385 = vtanh.pop %v2376
    %v2386 = vmul.f32 %v2384, %v1901
    %2388 = vrot.lane.b32.xlu0 %v2385, 64
    %v2389 = vpop.permute.xlu0 %2388
    %v2391 = vmul.f32 %v2384, %v2389
    %2393 = vrot.lane.b32.xlu0 %v2391, 32
    %v2394 = vpop.permute.xlu0 %2393
    %v2396 = vadd.f32 %v2386, %v2394
    %v2397 = vtanh.pop %v2396
    %2399 = vrot.lane.b32.xlu0 %v2397, 64
    %v2400 = vpop.permute.xlu0 %2399
    %v2402 = vmul.f32 %v2384, %v2400
    %v2403 = vld [vmem:[%s7] sm:$0xff]
    %v2404 = vld [vmem:[%s7 + $0x8] sm:$0xff]
    %v2405 = vld [vmem:[%s7 + $0x10] sm:$0xff]
    %v2406 = vld [vmem:[%s7 + $0x18] sm:$0xff]
    %v2407 = vld [vmem:[%s8] sm:$0xff]
    %v2408 = vld [vmem:[%s8 + $0x8] sm:$0xff]
    %v2409 = vld [vmem:[%s8 + $0x10] sm:$0xff]
    %v2410 = vld [vmem:[%s8 + $0x18] sm:$0xff]
    %2411 = vmatprep.subr.mxu0 0.0
    %2412 = vmatpush1.msra.mxu0 0.0
    %2413 = vmatprep.subr.mxu0 0.0
    %2414 = vmatpush1.msra.mxu0 0.0
    %2415 = vmatprep.subr.mxu0 0.0
    %2416 = vmatpush1.msra.mxu0 0.0
    %2417 = vmatprep.subr.mxu0 0.0
    %2418 = vmatpush1.msra.mxu0 0.0
    %2419 = vmatprep.subr.mxu0 0.0
    %2420 = vmatpush1.msra.mxu0 0.0
    %2421 = vmatprep.subr.mxu0 0.0
    %2422 = vmatpush1.msra.mxu0 0.0
    %2423 = vmatprep.subr.mxu0 0.0
    %2424 = vmatpush1.msra.mxu0 0.0
    %2425 = vmatprep.subr.mxu0 0.0
    %2426 = vmatpush1.msra.mxu0 0.0
    %2427 = vmatprep.subr.mxu0 0.0
    %2428 = vmatpush1.msra.mxu0 0.0
    %2429 = vmatprep.subr.mxu0 0.0
    %2430 = vmatpush1.msra.mxu0 0.0
    %2431 = vmatprep.subr.mxu0 0.0
    %2432 = vmatpush1.msra.mxu0 0.0
    %2433 = vmatprep.subr.mxu0 0.0
    %2434 = vmatpush1.msra.mxu0 0.0
    %2435 = vmatprep.subr.mxu0 0.0
    %2436 = vmatpush1.msra.mxu0 %v2410
    %2437 = vmatprep.subr.mxu0 0.0
    %2438 = vmatpush1.msra.mxu0 %v2409
    %2439 = vmatprep.subr.mxu0 0.0
    %2440 = vmatpush1.msra.mxu0 %v2408
    %2441 = vmatprep.subr.mxu0 0.0
    %2442 = vmatpush1.msra.mxu0 %v2407
    %2443 = vmatprep.subr.mxu0 0.0
    %2444 = vmatpush2.msra.mxu0 0.0
    %2445 = vmatprep.subr.mxu0 0.0
    %2446 = vmatpush2.msra.mxu0 0.0
    %2447 = vmatprep.subr.mxu0 0.0
    %2448 = vmatpush2.msra.mxu0 0.0
    %2449 = vmatprep.subr.mxu0 0.0
    %2450 = vmatpush2.msra.mxu0 0.0
    %2451 = vmatprep.subr.mxu0 0.0
    %2452 = vmatpush2.msra.mxu0 0.0
    %2453 = vmatprep.subr.mxu0 0.0
    %2454 = vmatpush2.msra.mxu0 0.0
    %2455 = vmatprep.subr.mxu0 0.0
    %2456 = vmatpush2.msra.mxu0 0.0
    %2457 = vmatprep.subr.mxu0 0.0
    %2458 = vmatpush2.msra.mxu0 0.0
    %2459 = vmatprep.subr.mxu0 0.0
    %2460 = vmatpush2.msra.mxu0 0.0
    %2461 = vmatprep.subr.mxu0 0.0
    %2462 = vmatpush2.msra.mxu0 0.0
    %2463 = vmatprep.subr.mxu0 0.0
    %2464 = vmatpush2.msra.mxu0 0.0
    %2465 = vmatprep.subr.mxu0 0.0
    %2466 = vmatpush2.msra.mxu0 0.0
    %2467 = vmatprep.subr.mxu0 0.0
    %2468 = vmatpush2.msra.mxu0 0.0
    %2469 = vmatprep.subr.mxu0 0.0
    %2470 = vmatpush2.msra.mxu0 0.0
    %2471 = vmatprep.subr.mxu0 0.0
    %2472 = vmatpush2.msra.mxu0 0.0
    %2473 = vmatprep.subr.mxu0 0.0
    %2474 = vmatpush2.msra.mxu0 0.0
    %2475 = vmatprep.mubr.f32.mxu0 0.0
    %2476 = vmatmul.mubr.f32.gmra.mxu0 %v2112
    %v2477 = vpop.f32.mrf.mxu0
    %v2478 = vadd.f32 0.0, %v2477
    %v2479 = vpop.f32.mrf.mxu0
    %2480 = vdwg.mxu0
    %2482 = vrot.lane.b32.xlu0 %v2402, 32
    %v2483 = vpop.permute.xlu0 %2482
    %v2484 = vsel %vm65, %v2483, 0
    %2486 = vmatprep.subr.mxu0 0.0
    %2487 = vmatpush1.msra.mxu0 0.0
    %2488 = vmatprep.subr.mxu0 0.0
    %2489 = vmatpush1.msra.mxu0 0.0
    %2490 = vmatprep.subr.mxu0 0.0
    %2491 = vmatpush1.msra.mxu0 0.0
    %2492 = vmatprep.subr.mxu0 0.0
    %2493 = vmatpush1.msra.mxu0 0.0
    %2494 = vmatprep.subr.mxu0 0.0
    %2495 = vmatpush1.msra.mxu0 0.0
    %2496 = vmatprep.subr.mxu0 0.0
    %2497 = vmatpush1.msra.mxu0 0.0
    %2498 = vmatprep.subr.mxu0 0.0
    %2499 = vmatpush1.msra.mxu0 0.0
    %2500 = vmatprep.subr.mxu0 0.0
    %2501 = vmatpush1.msra.mxu0 0.0
    %2502 = vmatprep.subr.mxu0 0.0
    %2503 = vmatpush1.msra.mxu0 0.0
    %2504 = vmatprep.subr.mxu0 0.0
    %2505 = vmatpush1.msra.mxu0 0.0
    %2506 = vmatprep.subr.mxu0 0.0
    %2507 = vmatpush1.msra.mxu0 0.0
    %2508 = vmatprep.subr.mxu0 0.0
    %2509 = vmatpush1.msra.mxu0 0.0
    %2510 = vmatprep.subr.mxu0 0.0
    %2511 = vmatpush1.msra.mxu0 %v2406
    %2512 = vmatprep.subr.mxu0 0.0
    %2513 = vmatpush1.msra.mxu0 %v2405
    %2514 = vmatprep.subr.mxu0 0.0
    %2515 = vmatpush1.msra.mxu0 %v2404
    %2516 = vmatprep.subr.mxu0 0.0
    %2517 = vmatpush1.msra.mxu0 %v2403
    %2518 = vmatprep.subr.mxu0 0.0
    %2519 = vmatpush2.msra.mxu0 0.0
    %2520 = vmatprep.subr.mxu0 0.0
    %2521 = vmatpush2.msra.mxu0 0.0
    %2522 = vmatprep.subr.mxu0 0.0
    %2523 = vmatpush2.msra.mxu0 0.0
    %2524 = vmatprep.subr.mxu0 0.0
    %2525 = vmatpush2.msra.mxu0 0.0
    %2526 = vmatprep.subr.mxu0 0.0
    %2527 = vmatpush2.msra.mxu0 0.0
    %2528 = vmatprep.subr.mxu0 0.0
    %2529 = vmatpush2.msra.mxu0 0.0
    %2530 = vmatprep.subr.mxu0 0.0
    %2531 = vmatpush2.msra.mxu0 0.0
    %2532 = vmatprep.subr.mxu0 0.0
    %2533 = vmatpush2.msra.mxu0 0.0
    %2534 = vmatprep.subr.mxu0 0.0
    %2535 = vmatpush2.msra.mxu0 0.0
    %2536 = vmatprep.subr.mxu0 0.0
    %2537 = vmatpush2.msra.mxu0 0.0
    %2538 = vmatprep.subr.mxu0 0.0
    %2539 = vmatpush2.msra.mxu0 0.0
    %2540 = vmatprep.subr.mxu0 0.0
    %2541 = vmatpush2.msra.mxu0 0.0
    %2542 = vmatprep.subr.mxu0 0.0
    %2543 = vmatpush2.msra.mxu0 0.0
    %2544 = vmatprep.subr.mxu0 0.0
    %2545 = vmatpush2.msra.mxu0 0.0
    %2546 = vmatprep.subr.mxu0 0.0
    %2547 = vmatpush2.msra.mxu0 0.0
    %2548 = vmatprep.subr.mxu0 0.0
    %2549 = vmatpush2.msra.mxu0 0.0
    %2550 = vmatprep.mubr.f32.mxu0 0.0
    %2551 = vmatmul.mubr.f32.gmra.mxu0 %v2484
    %v2552 = vpop.f32.mrf.mxu0
    %v2553 = vadd.f32 %v2478, %v2552
    %v2554 = vpop.f32.mrf.mxu0
    %2555 = vdwg.mxu0
    %v2556 = vld [vmem:[%s9] sm:$0x1]
    %v2558 = vlaneseq
    %v2559 = vshrl.u32 %v2558, 7
    %v2560 = vsub.s32 0, %v2559
    %v2561 = vrot.slane %v2556, %v2560
    %v2563 = vadd.f32 %v2553, %v2561
    %v2564 = vxor.u32 %v2563, 2147483648
    %v2565 = vmul.f32 %v2564, 1.442695
    %v2566 = vpow.pop %v2565
    %v2567 = vadd.f32 %v2566, 1.0
    %v2568 = vrcp.pop %v2567
    %v2569 = vmul.f32 1.0, %v2568
    %v2570 = vtanh.pop %v2563
    %v2571 = vmul.f32 %v2569, %v2091
    %2573 = vrot.lane.b32.xlu0 %v2570, 64
    %v2574 = vpop.permute.xlu0 %2573
    %v2576 = vmul.f32 %v2569, %v2574
    %2578 = vrot.lane.b32.xlu0 %v2576, 32
    %v2579 = vpop.permute.xlu0 %2578
    %v2581 = vadd.f32 %v2571, %v2579
    %v2582 = vtanh.pop %v2581
    %2584 = vrot.lane.b32.xlu0 %v2582, 64
    %v2585 = vpop.permute.xlu0 %2584
    %v2587 = vmul.f32 %v2569, %v2585
    %v2588 = vld [vmem:[%s10] sm:$0xff]
    %v2589 = vld [vmem:[%s10 + $0x8] sm:$0xff]
    %v2590 = vld [vmem:[%s10 + $0x10] sm:$0xff]
    %v2591 = vld [vmem:[%s10 + $0x18] sm:$0xff]
    %v2592 = vld [vmem:[%s11] sm:$0x1]
    %v2594 = vlaneseq
    %v2595 = vshrl.u32 %v2594, 7
    %v2596 = vsub.s32 0, %v2595
    %v2597 = vrot.slane %v2592, %v2596
    %2600 = vrot.lane.b32.xlu0 %v2587, 32
    %v2601 = vpop.permute.xlu0 %2600
    %v2602 = vsel %vm65, %v2601, 0
    %2604 = vmatprep.subr.mxu0 0.0
    %2605 = vmatpush1.msra.mxu0 0.0
    %2606 = vmatprep.subr.mxu0 0.0
    %2607 = vmatpush1.msra.mxu0 0.0
    %2608 = vmatprep.subr.mxu0 0.0
    %2609 = vmatpush1.msra.mxu0 0.0
    %2610 = vmatprep.subr.mxu0 0.0
    %2611 = vmatpush1.msra.mxu0 0.0
    %2612 = vmatprep.subr.mxu0 0.0
    %2613 = vmatpush1.msra.mxu0 0.0
    %2614 = vmatprep.subr.mxu0 0.0
    %2615 = vmatpush1.msra.mxu0 0.0
    %2616 = vmatprep.subr.mxu0 0.0
    %2617 = vmatpush1.msra.mxu0 0.0
    %2618 = vmatprep.subr.mxu0 0.0
    %2619 = vmatpush1.msra.mxu0 0.0
    %2620 = vmatprep.subr.mxu0 0.0
    %2621 = vmatpush1.msra.mxu0 0.0
    %2622 = vmatprep.subr.mxu0 0.0
    %2623 = vmatpush1.msra.mxu0 0.0
    %2624 = vmatprep.subr.mxu0 0.0
    %2625 = vmatpush1.msra.mxu0 0.0
    %2626 = vmatprep.subr.mxu0 0.0
    %2627 = vmatpush1.msra.mxu0 0.0
    %2628 = vmatprep.subr.mxu0 0.0
    %2629 = vmatpush1.msra.mxu0 %v2591
    %2630 = vmatprep.subr.mxu0 0.0
    %2631 = vmatpush1.msra.mxu0 %v2590
    %2632 = vmatprep.subr.mxu0 0.0
    %2633 = vmatpush1.msra.mxu0 %v2589
    %2634 = vmatprep.subr.mxu0 0.0
    %2635 = vmatpush1.msra.mxu0 %v2588
    %2636 = vmatprep.subr.mxu0 0.0
    %2637 = vmatpush2.msra.mxu0 0.0
    %2638 = vmatprep.subr.mxu0 0.0
    %2639 = vmatpush2.msra.mxu0 0.0
    %2640 = vmatprep.subr.mxu0 0.0
    %2641 = vmatpush2.msra.mxu0 0.0
    %2642 = vmatprep.subr.mxu0 0.0
    %2643 = vmatpush2.msra.mxu0 0.0
    %2644 = vmatprep.subr.mxu0 0.0
    %2645 = vmatpush2.msra.mxu0 0.0
    %2646 = vmatprep.subr.mxu0 0.0
    %2647 = vmatpush2.msra.mxu0 0.0
    %2648 = vmatprep.subr.mxu0 0.0
    %2649 = vmatpush2.msra.mxu0 0.0
    %2650 = vmatprep.subr.mxu0 0.0
    %2651 = vmatpush2.msra.mxu0 0.0
    %2652 = vmatprep.subr.mxu0 0.0
    %2653 = vmatpush2.msra.mxu0 0.0
    %2654 = vmatprep.subr.mxu0 0.0
    %2655 = vmatpush2.msra.mxu0 0.0
    %2656 = vmatprep.subr.mxu0 0.0
    %2657 = vmatpush2.msra.mxu0 0.0
    %2658 = vmatprep.subr.mxu0 0.0
    %2659 = vmatpush2.msra.mxu0 0.0
    %2660 = vmatprep.subr.mxu0 0.0
    %2661 = vmatpush2.msra.mxu0 0.0
    %2662 = vmatprep.subr.mxu0 0.0
    %2663 = vmatpush2.msra.mxu0 0.0
    %2664 = vmatprep.subr.mxu0 0.0
    %2665 = vmatpush2.msra.mxu0 0.0
    %2666 = vmatprep.subr.mxu0 0.0
    %2667 = vmatpush2.msra.mxu0 0.0
    %2668 = vmatprep.mubr.f32.mxu0 0.0
    %2669 = vmatmul.mubr.f32.gmra.mxu0 %v2602
    %v2670 = vpop.f32.mrf.mxu0
    %v2671 = vadd.f32 %v2597, %v2670
    %v2672 = vpop.f32.mrf.mxu0
    %2673 = vdwg.mxu0
    %s2674 = scalar_lea.vmem %s14, 8
    %2675 = vst [vmem:[%s2674] sm:$0xff] %v2671
    %v2676 = vsel %vm2185, %v2671, -inf
    %2677 = vmax.xlane.f32.xlu0 %v2676
    %v2678 = vpop.xlane.xlu0 %2677
    %vm2679 = vcmp.ge.f32.partialorder %v2676, %v2678
    %v2680 = vsel %vm2679, %v1710, 128
    %v2681 = vand.u32 %v2680, 65535
    %v2682 = vshra.s32 %v2680, 16
    %v2683 = vcvt.s32.f32 %v2681
    %v2684 = vcvt.s32.f32 %v2682
    %2685 = vmin.xlane.f32.xlu0 %v2684
    %v2686 = vpop.xlane.xlu0 %2685
    %vm2687 = vcmp.eq.f32.partialorder %v2684, %v2686
    %v2688 = vsel %vm2687, %v2683, inf
    %2689 = vmin.xlane.f32.xlu0 %v2688
    %v2690 = vpop.xlane.xlu0 %2689
    %v2691 = vcvt.f32.s32 %v2690
    %v2692 = vcvt.f32.s32 %v2686
    %v2693 = vshll.u32 %v2692, 16
    %v2694 = vadd.s32 %v2693, %v2691
    %s2695 = sld [smem:[#allocation2 + $0x2]]
    %p2696 = scmp.gt.s32.totalorder %s2695, 0
    %s2697 = scalar_lea.vmem %s12, 16
    %v2698 = vld [vmem:[%s2697] sm:$0xff]
    %s2699 = scalar_select %p2696, 1, 0
    %v2700 = vstv %s2699
    %vm2701 = vcmp.eq.s32.totalorder %v2700, 1
    %v2702 = vsel %vm2701, %v2698, %v2694
    %2703 = vset.pattern.permute.xlu0 0
    %2704 = vperm.xlu0 %2703, %v2702
    %v2705 = vpop.permute.xlu0 %2704
    %vm2706 = vcmp.eq.s32.totalorder %v1710, %v2705
    %v2707 = vsel %vm2706, 1, 0
    %v2708 = vcvt.s32.f32 %v2707
    %v2709 = vld [vmem:[%s5] sm:$0xff]
    %v2710 = vld [vmem:[%s5 + $0x8] sm:$0xff]
    %v2711 = vld [vmem:[%s5 + $0x10] sm:$0xff]
    %v2712 = vld [vmem:[%s5 + $0x18] sm:$0xff]
    %v2713 = vld [vmem:[%s5 + $0x20] sm:$0xff]
    %v2714 = vld [vmem:[%s5 + $0x28] sm:$0xff]
    %v2715 = vld [vmem:[%s5 + $0x30] sm:$0xff]
    %v2716 = vld [vmem:[%s5 + $0x38] sm:$0xff]
    %v2717 = vld [vmem:[%s5 + $0x40] sm:$0xff]
    %v2718 = vld [vmem:[%s5 + $0x48] sm:$0xff]
    %v2719 = vld [vmem:[%s5 + $0x50] sm:$0xff]
    %v2720 = vld [vmem:[%s5 + $0x58] sm:$0xff]
    %v2721 = vld [vmem:[%s5 + $0x60] sm:$0xff]
    %v2722 = vld [vmem:[%s5 + $0x68] sm:$0xff]
    %v2723 = vld [vmem:[%s5 + $0x70] sm:$0xff]
    %v2724 = vld [vmem:[%s5 + $0x78] sm:$0xff]
    %v2725 = vld [vmem:[%s6] sm:$0xff]
    %v2726 = vld [vmem:[%s6 + $0x8] sm:$0xff]
    %v2727 = vld [vmem:[%s6 + $0x10] sm:$0xff]
    %v2728 = vld [vmem:[%s6 + $0x18] sm:$0xff]
    %2729 = vmatprep.subr.mxu0 0.0
    %2730 = vmatpush1.msra.mxu0 0.0
    %2731 = vmatprep.subr.mxu0 0.0
    %2732 = vmatpush1.msra.mxu0 0.0
    %2733 = vmatprep.subr.mxu0 0.0
    %2734 = vmatpush1.msra.mxu0 0.0
    %2735 = vmatprep.subr.mxu0 0.0
    %2736 = vmatpush1.msra.mxu0 0.0
    %2737 = vmatprep.subr.mxu0 0.0
    %2738 = vmatpush1.msra.mxu0 0.0
    %2739 = vmatprep.subr.mxu0 0.0
    %2740 = vmatpush1.msra.mxu0 0.0
    %2741 = vmatprep.subr.mxu0 0.0
    %2742 = vmatpush1.msra.mxu0 0.0
    %2743 = vmatprep.subr.mxu0 0.0
    %2744 = vmatpush1.msra.mxu0 0.0
    %2745 = vmatprep.subr.mxu0 0.0
    %2746 = vmatpush1.msra.mxu0 0.0
    %2747 = vmatprep.subr.mxu0 0.0
    %2748 = vmatpush1.msra.mxu0 0.0
    %2749 = vmatprep.subr.mxu0 0.0
    %2750 = vmatpush1.msra.mxu0 0.0
    %2751 = vmatprep.subr.mxu0 0.0
    %2752 = vmatpush1.msra.mxu0 0.0
    %2753 = vmatprep.subr.mxu0 0.0
    %2754 = vmatpush1.msra.mxu0 %v2728
    %2755 = vmatprep.subr.mxu0 0.0
    %2756 = vmatpush1.msra.mxu0 %v2727
    %2757 = vmatprep.subr.mxu0 0.0
    %2758 = vmatpush1.msra.mxu0 %v2726
    %2759 = vmatprep.subr.mxu0 0.0
    %2760 = vmatpush1.msra.mxu0 %v2725
    %2761 = vmatprep.subr.mxu0 0.0
    %2762 = vmatpush2.msra.mxu0 0.0
    %2763 = vmatprep.subr.mxu0 0.0
    %2764 = vmatpush2.msra.mxu0 0.0
    %2765 = vmatprep.subr.mxu0 0.0
    %2766 = vmatpush2.msra.mxu0 0.0
    %2767 = vmatprep.subr.mxu0 0.0
    %2768 = vmatpush2.msra.mxu0 0.0
    %2769 = vmatprep.subr.mxu0 0.0
    %2770 = vmatpush2.msra.mxu0 0.0
    %2771 = vmatprep.subr.mxu0 0.0
    %2772 = vmatpush2.msra.mxu0 0.0
    %2773 = vmatprep.subr.mxu0 0.0
    %2774 = vmatpush2.msra.mxu0 0.0
    %2775 = vmatprep.subr.mxu0 0.0
    %2776 = vmatpush2.msra.mxu0 0.0
    %2777 = vmatprep.subr.mxu0 0.0
    %2778 = vmatpush2.msra.mxu0 0.0
    %2779 = vmatprep.subr.mxu0 0.0
    %2780 = vmatpush2.msra.mxu0 0.0
    %2781 = vmatprep.subr.mxu0 0.0
    %2782 = vmatpush2.msra.mxu0 0.0
    %2783 = vmatprep.subr.mxu0 0.0
    %2784 = vmatpush2.msra.mxu0 0.0
    %2785 = vmatprep.subr.mxu0 0.0
    %2786 = vmatpush2.msra.mxu0 0.0
    %2787 = vmatprep.subr.mxu0 0.0
    %2788 = vmatpush2.msra.mxu0 0.0
    %2789 = vmatprep.subr.mxu0 0.0
    %2790 = vmatpush2.msra.mxu0 0.0
    %2791 = vmatprep.subr.mxu0 0.0
    %2792 = vmatpush2.msra.mxu0 0.0
    %2793 = vmatprep.mubr.f32.mxu0 0.0
    %2794 = vmatmul.mubr.f32.gmra.mxu0 %v2484
    %v2795 = vpop.f32.mrf.mxu0
    %v2796 = vadd.f32 0.0, %v2795
    %v2797 = vpop.f32.mrf.mxu0
    %2798 = vdwg.mxu0
    %2799 = vmatprep.subr.mxu0 0.0
    %2800 = vmatpush1.msra.mxu0 %v2724
    %2801 = vmatprep.subr.mxu0 0.0
    %2802 = vmatpush1.msra.mxu0 %v2723
    %2803 = vmatprep.subr.mxu0 0.0
    %2804 = vmatpush1.msra.mxu0 %v2722
    %2805 = vmatprep.subr.mxu0 0.0
    %2806 = vmatpush1.msra.mxu0 %v2721
    %2807 = vmatprep.subr.mxu0 0.0
    %2808 = vmatpush1.msra.mxu0 %v2720
    %2809 = vmatprep.subr.mxu0 0.0
    %2810 = vmatpush1.msra.mxu0 %v2719
    %2811 = vmatprep.subr.mxu0 0.0
    %2812 = vmatpush1.msra.mxu0 %v2718
    %2813 = vmatprep.subr.mxu0 0.0
    %2814 = vmatpush1.msra.mxu0 %v2717
    %2815 = vmatprep.subr.mxu0 0.0
    %2816 = vmatpush1.msra.mxu0 %v2716
    %2817 = vmatprep.subr.mxu0 0.0
    %2818 = vmatpush1.msra.mxu0 %v2715
    %2819 = vmatprep.subr.mxu0 0.0
    %2820 = vmatpush1.msra.mxu0 %v2714
    %2821 = vmatprep.subr.mxu0 0.0
    %2822 = vmatpush1.msra.mxu0 %v2713
    %2823 = vmatprep.subr.mxu0 0.0
    %2824 = vmatpush1.msra.mxu0 %v2712
    %2825 = vmatprep.subr.mxu0 0.0
    %2826 = vmatpush1.msra.mxu0 %v2711
    %2827 = vmatprep.subr.mxu0 0.0
    %2828 = vmatpush1.msra.mxu0 %v2710
    %2829 = vmatprep.subr.mxu0 0.0
    %2830 = vmatpush1.msra.mxu0 %v2709
    %2831 = vmatprep.subr.mxu0 0.0
    %2832 = vmatpush2.msra.mxu0 0.0
    %2833 = vmatprep.subr.mxu0 0.0
    %2834 = vmatpush2.msra.mxu0 0.0
    %2835 = vmatprep.subr.mxu0 0.0
    %2836 = vmatpush2.msra.mxu0 0.0
    %2837 = vmatprep.subr.mxu0 0.0
    %2838 = vmatpush2.msra.mxu0 0.0
    %2839 = vmatprep.subr.mxu0 0.0
    %2840 = vmatpush2.msra.mxu0 0.0
    %2841 = vmatprep.subr.mxu0 0.0
    %2842 = vmatpush2.msra.mxu0 0.0
    %2843 = vmatprep.subr.mxu0 0.0
    %2844 = vmatpush2.msra.mxu0 0.0
    %2845 = vmatprep.subr.mxu0 0.0
    %2846 = vmatpush2.msra.mxu0 0.0
    %2847 = vmatprep.subr.mxu0 0.0
    %2848 = vmatpush2.msra.mxu0 0.0
    %2849 = vmatprep.subr.mxu0 0.0
    %2850 = vmatpush2.msra.mxu0 0.0
    %2851 = vmatprep.subr.mxu0 0.0
    %2852 = vmatpush2.msra.mxu0 0.0
    %2853 = vmatprep.subr.mxu0 0.0
    %2854 = vmatpush2.msra.mxu0 0.0
    %2855 = vmatprep.subr.mxu0 0.0
    %2856 = vmatpush2.msra.mxu0 0.0
    %2857 = vmatprep.subr.mxu0 0.0
    %2858 = vmatpush2.msra.mxu0 0.0
    %2859 = vmatprep.subr.mxu0 0.0
    %2860 = vmatpush2.msra.mxu0 0.0
    %2861 = vmatprep.subr.mxu0 0.0
    %2862 = vmatpush2.msra.mxu0 0.0
    %2863 = vmatprep.mubr.f32.mxu0 0.0
    %2864 = vmatmul.mubr.f32.gmra.mxu0 %v2708
    %v2865 = vpop.f32.mrf.mxu0
    %v2866 = vadd.f32 %v2796, %v2865
    %v2867 = vpop.f32.mrf.mxu0
    %2868 = vdwg.mxu0
    %v2869 = vxor.u32 %v2866, 2147483648
    %v2870 = vmul.f32 %v2869, 1.442695
    %v2871 = vpow.pop %v2870
    %v2872 = vadd.f32 %v2871, 1.0
    %v2873 = vrcp.pop %v2872
    %v2874 = vmul.f32 1.0, %v2873
    %v2875 = vtanh.pop %v2866
    %v2876 = vmul.f32 %v2874, %v2396
    %2878 = vrot.lane.b32.xlu0 %v2875, 64
    %v2879 = vpop.permute.xlu0 %2878
    %v2881 = vmul.f32 %v2874, %v2879
    %2883 = vrot.lane.b32.xlu0 %v2881, 32
    %v2884 = vpop.permute.xlu0 %2883
    %v2886 = vadd.f32 %v2876, %v2884
    %v2887 = vtanh.pop %v2886
    %2889 = vrot.lane.b32.xlu0 %v2887, 64
    %v2890 = vpop.permute.xlu0 %2889
    %v2892 = vmul.f32 %v2874, %v2890
    %v2893 = vld [vmem:[%s7] sm:$0xff]
    %v2894 = vld [vmem:[%s7 + $0x8] sm:$0xff]
    %v2895 = vld [vmem:[%s7 + $0x10] sm:$0xff]
    %v2896 = vld [vmem:[%s7 + $0x18] sm:$0xff]
    %v2897 = vld [vmem:[%s8] sm:$0xff]
    %v2898 = vld [vmem:[%s8 + $0x8] sm:$0xff]
    %v2899 = vld [vmem:[%s8 + $0x10] sm:$0xff]
    %v2900 = vld [vmem:[%s8 + $0x18] sm:$0xff]
    %2901 = vmatprep.subr.mxu0 0.0
    %2902 = vmatpush1.msra.mxu0 0.0
    %2903 = vmatprep.subr.mxu0 0.0
    %2904 = vmatpush1.msra.mxu0 0.0
    %2905 = vmatprep.subr.mxu0 0.0
    %2906 = vmatpush1.msra.mxu0 0.0
    %2907 = vmatprep.subr.mxu0 0.0
    %2908 = vmatpush1.msra.mxu0 0.0
    %2909 = vmatprep.subr.mxu0 0.0
    %2910 = vmatpush1.msra.mxu0 0.0
    %2911 = vmatprep.subr.mxu0 0.0
    %2912 = vmatpush1.msra.mxu0 0.0
    %2913 = vmatprep.subr.mxu0 0.0
    %2914 = vmatpush1.msra.mxu0 0.0
    %2915 = vmatprep.subr.mxu0 0.0
    %2916 = vmatpush1.msra.mxu0 0.0
    %2917 = vmatprep.subr.mxu0 0.0
    %2918 = vmatpush1.msra.mxu0 0.0
    %2919 = vmatprep.subr.mxu0 0.0
    %2920 = vmatpush1.msra.mxu0 0.0
    %2921 = vmatprep.subr.mxu0 0.0
    %2922 = vmatpush1.msra.mxu0 0.0
    %2923 = vmatprep.subr.mxu0 0.0
    %2924 = vmatpush1.msra.mxu0 0.0
    %2925 = vmatprep.subr.mxu0 0.0
    %2926 = vmatpush1.msra.mxu0 %v2900
    %2927 = vmatprep.subr.mxu0 0.0
    %2928 = vmatpush1.msra.mxu0 %v2899
    %2929 = vmatprep.subr.mxu0 0.0
    %2930 = vmatpush1.msra.mxu0 %v2898
    %2931 = vmatprep.subr.mxu0 0.0
    %2932 = vmatpush1.msra.mxu0 %v2897
    %2933 = vmatprep.subr.mxu0 0.0
    %2934 = vmatpush2.msra.mxu0 0.0
    %2935 = vmatprep.subr.mxu0 0.0
    %2936 = vmatpush2.msra.mxu0 0.0
    %2937 = vmatprep.subr.mxu0 0.0
    %2938 = vmatpush2.msra.mxu0 0.0
    %2939 = vmatprep.subr.mxu0 0.0
    %2940 = vmatpush2.msra.mxu0 0.0
    %2941 = vmatprep.subr.mxu0 0.0
    %2942 = vmatpush2.msra.mxu0 0.0
    %2943 = vmatprep.subr.mxu0 0.0
    %2944 = vmatpush2.msra.mxu0 0.0
    %2945 = vmatprep.subr.mxu0 0.0
    %2946 = vmatpush2.msra.mxu0 0.0
    %2947 = vmatprep.subr.mxu0 0.0
    %2948 = vmatpush2.msra.mxu0 0.0
    %2949 = vmatprep.subr.mxu0 0.0
    %2950 = vmatpush2.msra.mxu0 0.0
    %2951 = vmatprep.subr.mxu0 0.0
    %2952 = vmatpush2.msra.mxu0 0.0
    %2953 = vmatprep.subr.mxu0 0.0
    %2954 = vmatpush2.msra.mxu0 0.0
    %2955 = vmatprep.subr.mxu0 0.0
    %2956 = vmatpush2.msra.mxu0 0.0
    %2957 = vmatprep.subr.mxu0 0.0
    %2958 = vmatpush2.msra.mxu0 0.0
    %2959 = vmatprep.subr.mxu0 0.0
    %2960 = vmatpush2.msra.mxu0 0.0
    %2961 = vmatprep.subr.mxu0 0.0
    %2962 = vmatpush2.msra.mxu0 0.0
    %2963 = vmatprep.subr.mxu0 0.0
    %2964 = vmatpush2.msra.mxu0 0.0
    %2965 = vmatprep.mubr.f32.mxu0 0.0
    %2966 = vmatmul.mubr.f32.gmra.mxu0 %v2602
    %v2967 = vpop.f32.mrf.mxu0
    %v2968 = vadd.f32 0.0, %v2967
    %v2969 = vpop.f32.mrf.mxu0
    %2970 = vdwg.mxu0
    %2972 = vrot.lane.b32.xlu0 %v2892, 32
    %v2973 = vpop.permute.xlu0 %2972
    %v2974 = vsel %vm65, %v2973, 0
    %2976 = vmatprep.subr.mxu0 0.0
    %2977 = vmatpush1.msra.mxu0 0.0
    %2978 = vmatprep.subr.mxu0 0.0
    %2979 = vmatpush1.msra.mxu0 0.0
    %2980 = vmatprep.subr.mxu0 0.0
    %2981 = vmatpush1.msra.mxu0 0.0
    %2982 = vmatprep.subr.mxu0 0.0
    %2983 = vmatpush1.msra.mxu0 0.0
    %2984 = vmatprep.subr.mxu0 0.0
    %2985 = vmatpush1.msra.mxu0 0.0
    %2986 = vmatprep.subr.mxu0 0.0
    %2987 = vmatpush1.msra.mxu0 0.0
    %2988 = vmatprep.subr.mxu0 0.0
    %2989 = vmatpush1.msra.mxu0 0.0
    %2990 = vmatprep.subr.mxu0 0.0
    %2991 = vmatpush1.msra.mxu0 0.0
    %2992 = vmatprep.subr.mxu0 0.0
    %2993 = vmatpush1.msra.mxu0 0.0
    %2994 = vmatprep.subr.mxu0 0.0
    %2995 = vmatpush1.msra.mxu0 0.0
    %2996 = vmatprep.subr.mxu0 0.0
    %2997 = vmatpush1.msra.mxu0 0.0
    %2998 = vmatprep.subr.mxu0 0.0
    %2999 = vmatpush1.msra.mxu0 0.0
    %3000 = vmatprep.subr.mxu0 0.0
    %3001 = vmatpush1.msra.mxu0 %v2896
    %3002 = vmatprep.subr.mxu0 0.0
    %3003 = vmatpush1.msra.mxu0 %v2895
    %3004 = vmatprep.subr.mxu0 0.0
    %3005 = vmatpush1.msra.mxu0 %v2894
    %3006 = vmatprep.subr.mxu0 0.0
    %3007 = vmatpush1.msra.mxu0 %v2893
    %3008 = vmatprep.subr.mxu0 0.0
    %3009 = vmatpush2.msra.mxu0 0.0
    %3010 = vmatprep.subr.mxu0 0.0
    %3011 = vmatpush2.msra.mxu0 0.0
    %3012 = vmatprep.subr.mxu0 0.0
    %3013 = vmatpush2.msra.mxu0 0.0
    %3014 = vmatprep.subr.mxu0 0.0
    %3015 = vmatpush2.msra.mxu0 0.0
    %3016 = vmatprep.subr.mxu0 0.0
    %3017 = vmatpush2.msra.mxu0 0.0
    %3018 = vmatprep.subr.mxu0 0.0
    %3019 = vmatpush2.msra.mxu0 0.0
    %3020 = vmatprep.subr.mxu0 0.0
    %3021 = vmatpush2.msra.mxu0 0.0
    %3022 = vmatprep.subr.mxu0 0.0
    %3023 = vmatpush2.msra.mxu0 0.0
    %3024 = vmatprep.subr.mxu0 0.0
    %3025 = vmatpush2.msra.mxu0 0.0
    %3026 = vmatprep.subr.mxu0 0.0
    %3027 = vmatpush2.msra.mxu0 0.0
    %3028 = vmatprep.subr.mxu0 0.0
    %3029 = vmatpush2.msra.mxu0 0.0
    %3030 = vmatprep.subr.mxu0 0.0
    %3031 = vmatpush2.msra.mxu0 0.0
    %3032 = vmatprep.subr.mxu0 0.0
    %3033 = vmatpush2.msra.mxu0 0.0
    %3034 = vmatprep.subr.mxu0 0.0
    %3035 = vmatpush2.msra.mxu0 0.0
    %3036 = vmatprep.subr.mxu0 0.0
    %3037 = vmatpush2.msra.mxu0 0.0
    %3038 = vmatprep.subr.mxu0 0.0
    %3039 = vmatpush2.msra.mxu0 0.0
    %3040 = vmatprep.mubr.f32.mxu0 0.0
    %3041 = vmatmul.mubr.f32.gmra.mxu0 %v2974
    %v3042 = vpop.f32.mrf.mxu0
    %v3043 = vadd.f32 %v2968, %v3042
    %v3044 = vpop.f32.mrf.mxu0
    %3045 = vdwg.mxu0
    %v3046 = vld [vmem:[%s9] sm:$0x1]
    %v3048 = vlaneseq
    %v3049 = vshrl.u32 %v3048, 7
    %v3050 = vsub.s32 0, %v3049
    %v3051 = vrot.slane %v3046, %v3050
    %v3053 = vadd.f32 %v3043, %v3051
    %v3054 = vxor.u32 %v3053, 2147483648
    %v3055 = vmul.f32 %v3054, 1.442695
    %v3056 = vpow.pop %v3055
    %v3057 = vadd.f32 %v3056, 1.0
    %v3058 = vrcp.pop %v3057
    %v3059 = vmul.f32 1.0, %v3058
    %v3060 = vtanh.pop %v3053
    %v3061 = vmul.f32 %v3059, %v2581
    %3063 = vrot.lane.b32.xlu0 %v3060, 64
    %v3064 = vpop.permute.xlu0 %3063
    %v3066 = vmul.f32 %v3059, %v3064
    %3068 = vrot.lane.b32.xlu0 %v3066, 32
    %v3069 = vpop.permute.xlu0 %3068
    %v3071 = vadd.f32 %v3061, %v3069
    %v3072 = vtanh.pop %v3071
    %3074 = vrot.lane.b32.xlu0 %v3072, 64
    %v3075 = vpop.permute.xlu0 %3074
    %v3077 = vmul.f32 %v3059, %v3075
    %v3078 = vld [vmem:[%s10] sm:$0xff]
    %v3079 = vld [vmem:[%s10 + $0x8] sm:$0xff]
    %v3080 = vld [vmem:[%s10 + $0x10] sm:$0xff]
    %v3081 = vld [vmem:[%s10 + $0x18] sm:$0xff]
    %v3082 = vld [vmem:[%s11] sm:$0x1]
    %v3084 = vlaneseq
    %v3085 = vshrl.u32 %v3084, 7
    %v3086 = vsub.s32 0, %v3085
    %v3087 = vrot.slane %v3082, %v3086
    %3090 = vrot.lane.b32.xlu0 %v3077, 32
    %v3091 = vpop.permute.xlu0 %3090
    %v3092 = vsel %vm65, %v3091, 0
    %3094 = vmatprep.subr.mxu0 0.0
    %3095 = vmatpush1.msra.mxu0 0.0
    %3096 = vmatprep.subr.mxu0 0.0
    %3097 = vmatpush1.msra.mxu0 0.0
    %3098 = vmatprep.subr.mxu0 0.0
    %3099 = vmatpush1.msra.mxu0 0.0
    %3100 = vmatprep.subr.mxu0 0.0
    %3101 = vmatpush1.msra.mxu0 0.0
    %3102 = vmatprep.subr.mxu0 0.0
    %3103 = vmatpush1.msra.mxu0 0.0
    %3104 = vmatprep.subr.mxu0 0.0
    %3105 = vmatpush1.msra.mxu0 0.0
    %3106 = vmatprep.subr.mxu0 0.0
    %3107 = vmatpush1.msra.mxu0 0.0
    %3108 = vmatprep.subr.mxu0 0.0
    %3109 = vmatpush1.msra.mxu0 0.0
    %3110 = vmatprep.subr.mxu0 0.0
    %3111 = vmatpush1.msra.mxu0 0.0
    %3112 = vmatprep.subr.mxu0 0.0
    %3113 = vmatpush1.msra.mxu0 0.0
    %3114 = vmatprep.subr.mxu0 0.0
    %3115 = vmatpush1.msra.mxu0 0.0
    %3116 = vmatprep.subr.mxu0 0.0
    %3117 = vmatpush1.msra.mxu0 0.0
    %3118 = vmatprep.subr.mxu0 0.0
    %3119 = vmatpush1.msra.mxu0 %v3081
    %3120 = vmatprep.subr.mxu0 0.0
    %3121 = vmatpush1.msra.mxu0 %v3080
    %3122 = vmatprep.subr.mxu0 0.0
    %3123 = vmatpush1.msra.mxu0 %v3079
    %3124 = vmatprep.subr.mxu0 0.0
    %3125 = vmatpush1.msra.mxu0 %v3078
    %3126 = vmatprep.subr.mxu0 0.0
    %3127 = vmatpush2.msra.mxu0 0.0
    %3128 = vmatprep.subr.mxu0 0.0
    %3129 = vmatpush2.msra.mxu0 0.0
    %3130 = vmatprep.subr.mxu0 0.0
    %3131 = vmatpush2.msra.mxu0 0.0
    %3132 = vmatprep.subr.mxu0 0.0
    %3133 = vmatpush2.msra.mxu0 0.0
    %3134 = vmatprep.subr.mxu0 0.0
    %3135 = vmatpush2.msra.mxu0 0.0
    %3136 = vmatprep.subr.mxu0 0.0
    %3137 = vmatpush2.msra.mxu0 0.0
    %3138 = vmatprep.subr.mxu0 0.0
    %3139 = vmatpush2.msra.mxu0 0.0
    %3140 = vmatprep.subr.mxu0 0.0
    %3141 = vmatpush2.msra.mxu0 0.0
    %3142 = vmatprep.subr.mxu0 0.0
    %3143 = vmatpush2.msra.mxu0 0.0
    %3144 = vmatprep.subr.mxu0 0.0
    %3145 = vmatpush2.msra.mxu0 0.0
    %3146 = vmatprep.subr.mxu0 0.0
    %3147 = vmatpush2.msra.mxu0 0.0
    %3148 = vmatprep.subr.mxu0 0.0
    %3149 = vmatpush2.msra.mxu0 0.0
    %3150 = vmatprep.subr.mxu0 0.0
    %3151 = vmatpush2.msra.mxu0 0.0
    %3152 = vmatprep.subr.mxu0 0.0
    %3153 = vmatpush2.msra.mxu0 0.0
    %3154 = vmatprep.subr.mxu0 0.0
    %3155 = vmatpush2.msra.mxu0 0.0
    %3156 = vmatprep.subr.mxu0 0.0
    %3157 = vmatpush2.msra.mxu0 0.0
    %3158 = vmatprep.mubr.f32.mxu0 0.0
    %3159 = vmatmul.mubr.f32.gmra.mxu0 %v3092
    %v3160 = vpop.f32.mrf.mxu0
    %v3161 = vadd.f32 %v3087, %v3160
    %v3162 = vpop.f32.mrf.mxu0
    %3163 = vdwg.mxu0
    %s3164 = scalar_lea.vmem %s14, 16
    %3165 = vst [vmem:[%s3164] sm:$0xff] %v3161
    %v3166 = vsel %vm2185, %v3161, -inf
    %3167 = vmax.xlane.f32.xlu0 %v3166
    %v3168 = vpop.xlane.xlu0 %3167
    %vm3169 = vcmp.ge.f32.partialorder %v3166, %v3168
    %v3170 = vsel %vm3169, %v1710, 128
    %v3171 = vand.u32 %v3170, 65535
    %v3172 = vshra.s32 %v3170, 16
    %v3173 = vcvt.s32.f32 %v3171
    %v3174 = vcvt.s32.f32 %v3172
    %3175 = vmin.xlane.f32.xlu0 %v3174
    %v3176 = vpop.xlane.xlu0 %3175
    %vm3177 = vcmp.eq.f32.partialorder %v3174, %v3176
    %v3178 = vsel %vm3177, %v3173, inf
    %3179 = vmin.xlane.f32.xlu0 %v3178
    %v3180 = vpop.xlane.xlu0 %3179
    %v3181 = vcvt.f32.s32 %v3180
    %v3182 = vcvt.f32.s32 %v3176
    %v3183 = vshll.u32 %v3182, 16
    %v3184 = vadd.s32 %v3183, %v3181
    %s3185 = sld [smem:[#allocation2 + $0x3]]
    %p3186 = scmp.gt.s32.totalorder %s3185, 0
    %s3187 = scalar_lea.vmem %s12, 24
    %v3188 = vld [vmem:[%s3187] sm:$0xff]
    %s3189 = scalar_select %p3186, 1, 0
    %v3190 = vstv %s3189
    %vm3191 = vcmp.eq.s32.totalorder %v3190, 1
    %v3192 = vsel %vm3191, %v3188, %v3184
    %3193 = vset.pattern.permute.xlu0 0
    %3194 = vperm.xlu0 %3193, %v3192
    %v3195 = vpop.permute.xlu0 %3194
    %vm3196 = vcmp.eq.s32.totalorder %v1710, %v3195
    %v3197 = vsel %vm3196, 1, 0
    %v3198 = vcvt.s32.f32 %v3197
    %v3199 = vld [vmem:[%s5] sm:$0xff]
    %v3200 = vld [vmem:[%s5 + $0x8] sm:$0xff]
    %v3201 = vld [vmem:[%s5 + $0x10] sm:$0xff]
    %v3202 = vld [vmem:[%s5 + $0x18] sm:$0xff]
    %v3203 = vld [vmem:[%s5 + $0x20] sm:$0xff]
    %v3204 = vld [vmem:[%s5 + $0x28] sm:$0xff]
    %v3205 = vld [vmem:[%s5 + $0x30] sm:$0xff]
    %v3206 = vld [vmem:[%s5 + $0x38] sm:$0xff]
    %v3207 = vld [vmem:[%s5 + $0x40] sm:$0xff]
    %v3208 = vld [vmem:[%s5 + $0x48] sm:$0xff]
    %v3209 = vld [vmem:[%s5 + $0x50] sm:$0xff]
    %v3210 = vld [vmem:[%s5 + $0x58] sm:$0xff]
    %v3211 = vld [vmem:[%s5 + $0x60] sm:$0xff]
    %v3212 = vld [vmem:[%s5 + $0x68] sm:$0xff]
    %v3213 = vld [vmem:[%s5 + $0x70] sm:$0xff]
    %v3214 = vld [vmem:[%s5 + $0x78] sm:$0xff]
    %v3215 = vld [vmem:[%s6] sm:$0xff]
    %v3216 = vld [vmem:[%s6 + $0x8] sm:$0xff]
    %v3217 = vld [vmem:[%s6 + $0x10] sm:$0xff]
    %v3218 = vld [vmem:[%s6 + $0x18] sm:$0xff]
    %3219 = vmatprep.subr.mxu0 0.0
    %3220 = vmatpush1.msra.mxu0 0.0
    %3221 = vmatprep.subr.mxu0 0.0
    %3222 = vmatpush1.msra.mxu0 0.0
    %3223 = vmatprep.subr.mxu0 0.0
    %3224 = vmatpush1.msra.mxu0 0.0
    %3225 = vmatprep.subr.mxu0 0.0
    %3226 = vmatpush1.msra.mxu0 0.0
    %3227 = vmatprep.subr.mxu0 0.0
    %3228 = vmatpush1.msra.mxu0 0.0
    %3229 = vmatprep.subr.mxu0 0.0
    %3230 = vmatpush1.msra.mxu0 0.0
    %3231 = vmatprep.subr.mxu0 0.0
    %3232 = vmatpush1.msra.mxu0 0.0
    %3233 = vmatprep.subr.mxu0 0.0
    %3234 = vmatpush1.msra.mxu0 0.0
    %3235 = vmatprep.subr.mxu0 0.0
    %3236 = vmatpush1.msra.mxu0 0.0
    %3237 = vmatprep.subr.mxu0 0.0
    %3238 = vmatpush1.msra.mxu0 0.0
    %3239 = vmatprep.subr.mxu0 0.0
    %3240 = vmatpush1.msra.mxu0 0.0
    %3241 = vmatprep.subr.mxu0 0.0
    %3242 = vmatpush1.msra.mxu0 0.0
    %3243 = vmatprep.subr.mxu0 0.0
    %3244 = vmatpush1.msra.mxu0 %v3218
    %3245 = vmatprep.subr.mxu0 0.0
    %3246 = vmatpush1.msra.mxu0 %v3217
    %3247 = vmatprep.subr.mxu0 0.0
    %3248 = vmatpush1.msra.mxu0 %v3216
    %3249 = vmatprep.subr.mxu0 0.0
    %3250 = vmatpush1.msra.mxu0 %v3215
    %3251 = vmatprep.subr.mxu0 0.0
    %3252 = vmatpush2.msra.mxu0 0.0
    %3253 = vmatprep.subr.mxu0 0.0
    %3254 = vmatpush2.msra.mxu0 0.0
    %3255 = vmatprep.subr.mxu0 0.0
    %3256 = vmatpush2.msra.mxu0 0.0
    %3257 = vmatprep.subr.mxu0 0.0
    %3258 = vmatpush2.msra.mxu0 0.0
    %3259 = vmatprep.subr.mxu0 0.0
    %3260 = vmatpush2.msra.mxu0 0.0
    %3261 = vmatprep.subr.mxu0 0.0
    %3262 = vmatpush2.msra.mxu0 0.0
    %3263 = vmatprep.subr.mxu0 0.0
    %3264 = vmatpush2.msra.mxu0 0.0
    %3265 = vmatprep.subr.mxu0 0.0
    %3266 = vmatpush2.msra.mxu0 0.0
    %3267 = vmatprep.subr.mxu0 0.0
    %3268 = vmatpush2.msra.mxu0 0.0
    %3269 = vmatprep.subr.mxu0 0.0
    %3270 = vmatpush2.msra.mxu0 0.0
    %3271 = vmatprep.subr.mxu0 0.0
    %3272 = vmatpush2.msra.mxu0 0.0
    %3273 = vmatprep.subr.mxu0 0.0
    %3274 = vmatpush2.msra.mxu0 0.0
    %3275 = vmatprep.subr.mxu0 0.0
    %3276 = vmatpush2.msra.mxu0 0.0
    %3277 = vmatprep.subr.mxu0 0.0
    %3278 = vmatpush2.msra.mxu0 0.0
    %3279 = vmatprep.subr.mxu0 0.0
    %3280 = vmatpush2.msra.mxu0 0.0
    %3281 = vmatprep.subr.mxu0 0.0
    %3282 = vmatpush2.msra.mxu0 0.0
    %3283 = vmatprep.mubr.f32.mxu0 0.0
    %3284 = vmatmul.mubr.f32.gmra.mxu0 %v2974
    %v3285 = vpop.f32.mrf.mxu0
    %v3286 = vadd.f32 0.0, %v3285
    %v3287 = vpop.f32.mrf.mxu0
    %3288 = vdwg.mxu0
    %3289 = vmatprep.subr.mxu0 0.0
    %3290 = vmatpush1.msra.mxu0 %v3214
    %3291 = vmatprep.subr.mxu0 0.0
    %3292 = vmatpush1.msra.mxu0 %v3213
    %3293 = vmatprep.subr.mxu0 0.0
    %3294 = vmatpush1.msra.mxu0 %v3212
    %3295 = vmatprep.subr.mxu0 0.0
    %3296 = vmatpush1.msra.mxu0 %v3211
    %3297 = vmatprep.subr.mxu0 0.0
    %3298 = vmatpush1.msra.mxu0 %v3210
    %3299 = vmatprep.subr.mxu0 0.0
    %3300 = vmatpush1.msra.mxu0 %v3209
    %3301 = vmatprep.subr.mxu0 0.0
    %3302 = vmatpush1.msra.mxu0 %v3208
    %3303 = vmatprep.subr.mxu0 0.0
    %3304 = vmatpush1.msra.mxu0 %v3207
    %3305 = vmatprep.subr.mxu0 0.0
    %3306 = vmatpush1.msra.mxu0 %v3206
    %3307 = vmatprep.subr.mxu0 0.0
    %3308 = vmatpush1.msra.mxu0 %v3205
    %3309 = vmatprep.subr.mxu0 0.0
    %3310 = vmatpush1.msra.mxu0 %v3204
    %3311 = vmatprep.subr.mxu0 0.0
    %3312 = vmatpush1.msra.mxu0 %v3203
    %3313 = vmatprep.subr.mxu0 0.0
    %3314 = vmatpush1.msra.mxu0 %v3202
    %3315 = vmatprep.subr.mxu0 0.0
    %3316 = vmatpush1.msra.mxu0 %v3201
    %3317 = vmatprep.subr.mxu0 0.0
    %3318 = vmatpush1.msra.mxu0 %v3200
    %3319 = vmatprep.subr.mxu0 0.0
    %3320 = vmatpush1.msra.mxu0 %v3199
    %3321 = vmatprep.subr.mxu0 0.0
    %3322 = vmatpush2.msra.mxu0 0.0
    %3323 = vmatprep.subr.mxu0 0.0
    %3324 = vmatpush2.msra.mxu0 0.0
    %3325 = vmatprep.subr.mxu0 0.0
    %3326 = vmatpush2.msra.mxu0 0.0
    %3327 = vmatprep.subr.mxu0 0.0
    %3328 = vmatpush2.msra.mxu0 0.0
    %3329 = vmatprep.subr.mxu0 0.0
    %3330 = vmatpush2.msra.mxu0 0.0
    %3331 = vmatprep.subr.mxu0 0.0
    %3332 = vmatpush2.msra.mxu0 0.0
    %3333 = vmatprep.subr.mxu0 0.0
    %3334 = vmatpush2.msra.mxu0 0.0
    %3335 = vmatprep.subr.mxu0 0.0
    %3336 = vmatpush2.msra.mxu0 0.0
    %3337 = vmatprep.subr.mxu0 0.0
    %3338 = vmatpush2.msra.mxu0 0.0
    %3339 = vmatprep.subr.mxu0 0.0
    %3340 = vmatpush2.msra.mxu0 0.0
    %3341 = vmatprep.subr.mxu0 0.0
    %3342 = vmatpush2.msra.mxu0 0.0
    %3343 = vmatprep.subr.mxu0 0.0
    %3344 = vmatpush2.msra.mxu0 0.0
    %3345 = vmatprep.subr.mxu0 0.0
    %3346 = vmatpush2.msra.mxu0 0.0
    %3347 = vmatprep.subr.mxu0 0.0
    %3348 = vmatpush2.msra.mxu0 0.0
    %3349 = vmatprep.subr.mxu0 0.0
    %3350 = vmatpush2.msra.mxu0 0.0
    %3351 = vmatprep.subr.mxu0 0.0
    %3352 = vmatpush2.msra.mxu0 0.0
    %3353 = vmatprep.mubr.f32.mxu0 0.0
    %3354 = vmatmul.mubr.f32.gmra.mxu0 %v3198
    %v3355 = vpop.f32.mrf.mxu0
    %v3356 = vadd.f32 %v3286, %v3355
    %v3357 = vpop.f32.mrf.mxu0
    %3358 = vdwg.mxu0
    %v3359 = vxor.u32 %v3356, 2147483648
    %v3360 = vmul.f32 %v3359, 1.442695
    %v3361 = vpow.pop %v3360
    %v3362 = vadd.f32 %v3361, 1.0
    %v3363 = vrcp.pop %v3362
    %v3364 = vmul.f32 1.0, %v3363
    %v3365 = vtanh.pop %v3356
    %v3366 = vmul.f32 %v3364, %v2886
    %3368 = vrot.lane.b32.xlu0 %v3365, 64
    %v3369 = vpop.permute.xlu0 %3368
    %v3371 = vmul.f32 %v3364, %v3369
    %3373 = vrot.lane.b32.xlu0 %v3371, 32
    %v3374 = vpop.permute.xlu0 %3373
    %v3376 = vadd.f32 %v3366, %v3374
    %v3377 = vtanh.pop %v3376
    %3379 = vrot.lane.b32.xlu0 %v3377, 64
    %v3380 = vpop.permute.xlu0 %3379
    %v3382 = vmul.f32 %v3364, %v3380
    %v3383 = vld [vmem:[%s7] sm:$0xff]
    %v3384 = vld [vmem:[%s7 + $0x8] sm:$0xff]
    %v3385 = vld [vmem:[%s7 + $0x10] sm:$0xff]
    %v3386 = vld [vmem:[%s7 + $0x18] sm:$0xff]
    %v3387 = vld [vmem:[%s8] sm:$0xff]
    %v3388 = vld [vmem:[%s8 + $0x8] sm:$0xff]
    %v3389 = vld [vmem:[%s8 + $0x10] sm:$0xff]
    %v3390 = vld [vmem:[%s8 + $0x18] sm:$0xff]
    %3391 = vmatprep.subr.mxu0 0.0
    %3392 = vmatpush1.msra.mxu0 0.0
    %3393 = vmatprep.subr.mxu0 0.0
    %3394 = vmatpush1.msra.mxu0 0.0
    %3395 = vmatprep.subr.mxu0 0.0
    %3396 = vmatpush1.msra.mxu0 0.0
    %3397 = vmatprep.subr.mxu0 0.0
    %3398 = vmatpush1.msra.mxu0 0.0
    %3399 = vmatprep.subr.mxu0 0.0
    %3400 = vmatpush1.msra.mxu0 0.0
    %3401 = vmatprep.subr.mxu0 0.0
    %3402 = vmatpush1.msra.mxu0 0.0
    %3403 = vmatprep.subr.mxu0 0.0
    %3404 = vmatpush1.msra.mxu0 0.0
    %3405 = vmatprep.subr.mxu0 0.0
    %3406 = vmatpush1.msra.mxu0 0.0
    %3407 = vmatprep.subr.mxu0 0.0
    %3408 = vmatpush1.msra.mxu0 0.0
    %3409 = vmatprep.subr.mxu0 0.0
    %3410 = vmatpush1.msra.mxu0 0.0
    %3411 = vmatprep.subr.mxu0 0.0
    %3412 = vmatpush1.msra.mxu0 0.0
    %3413 = vmatprep.subr.mxu0 0.0
    %3414 = vmatpush1.msra.mxu0 0.0
    %3415 = vmatprep.subr.mxu0 0.0
    %3416 = vmatpush1.msra.mxu0 %v3390
    %3417 = vmatprep.subr.mxu0 0.0
    %3418 = vmatpush1.msra.mxu0 %v3389
    %3419 = vmatprep.subr.mxu0 0.0
    %3420 = vmatpush1.msra.mxu0 %v3388
    %3421 = vmatprep.subr.mxu0 0.0
    %3422 = vmatpush1.msra.mxu0 %v3387
    %3423 = vmatprep.subr.mxu0 0.0
    %3424 = vmatpush2.msra.mxu0 0.0
    %3425 = vmatprep.subr.mxu0 0.0
    %3426 = vmatpush2.msra.mxu0 0.0
    %3427 = vmatprep.subr.mxu0 0.0
    %3428 = vmatpush2.msra.mxu0 0.0
    %3429 = vmatprep.subr.mxu0 0.0
    %3430 = vmatpush2.msra.mxu0 0.0
    %3431 = vmatprep.subr.mxu0 0.0
    %3432 = vmatpush2.msra.mxu0 0.0
    %3433 = vmatprep.subr.mxu0 0.0
    %3434 = vmatpush2.msra.mxu0 0.0
    %3435 = vmatprep.subr.mxu0 0.0
    %3436 = vmatpush2.msra.mxu0 0.0
    %3437 = vmatprep.subr.mxu0 0.0
    %3438 = vmatpush2.msra.mxu0 0.0
    %3439 = vmatprep.subr.mxu0 0.0
    %3440 = vmatpush2.msra.mxu0 0.0
    %3441 = vmatprep.subr.mxu0 0.0
    %3442 = vmatpush2.msra.mxu0 0.0
    %3443 = vmatprep.subr.mxu0 0.0
    %3444 = vmatpush2.msra.mxu0 0.0
    %3445 = vmatprep.subr.mxu0 0.0
    %3446 = vmatpush2.msra.mxu0 0.0
    %3447 = vmatprep.subr.mxu0 0.0
    %3448 = vmatpush2.msra.mxu0 0.0
    %3449 = vmatprep.subr.mxu0 0.0
    %3450 = vmatpush2.msra.mxu0 0.0
    %3451 = vmatprep.subr.mxu0 0.0
    %3452 = vmatpush2.msra.mxu0 0.0
    %3453 = vmatprep.subr.mxu0 0.0
    %3454 = vmatpush2.msra.mxu0 0.0
    %3455 = vmatprep.mubr.f32.mxu0 0.0
    %3456 = vmatmul.mubr.f32.gmra.mxu0 %v3092
    %v3457 = vpop.f32.mrf.mxu0
    %v3458 = vadd.f32 0.0, %v3457
    %v3459 = vpop.f32.mrf.mxu0
    %3460 = vdwg.mxu0
    %3462 = vrot.lane.b32.xlu0 %v3382, 32
    %v3463 = vpop.permute.xlu0 %3462
    %v3464 = vsel %vm65, %v3463, 0
    %3466 = vmatprep.subr.mxu0 0.0
    %3467 = vmatpush1.msra.mxu0 0.0
    %3468 = vmatprep.subr.mxu0 0.0
    %3469 = vmatpush1.msra.mxu0 0.0
    %3470 = vmatprep.subr.mxu0 0.0
    %3471 = vmatpush1.msra.mxu0 0.0
    %3472 = vmatprep.subr.mxu0 0.0
    %3473 = vmatpush1.msra.mxu0 0.0
    %3474 = vmatprep.subr.mxu0 0.0
    %3475 = vmatpush1.msra.mxu0 0.0
    %3476 = vmatprep.subr.mxu0 0.0
    %3477 = vmatpush1.msra.mxu0 0.0
    %3478 = vmatprep.subr.mxu0 0.0
    %3479 = vmatpush1.msra.mxu0 0.0
    %3480 = vmatprep.subr.mxu0 0.0
    %3481 = vmatpush1.msra.mxu0 0.0
    %3482 = vmatprep.subr.mxu0 0.0
    %3483 = vmatpush1.msra.mxu0 0.0
    %3484 = vmatprep.subr.mxu0 0.0
    %3485 = vmatpush1.msra.mxu0 0.0
    %3486 = vmatprep.subr.mxu0 0.0
    %3487 = vmatpush1.msra.mxu0 0.0
    %3488 = vmatprep.subr.mxu0 0.0
    %3489 = vmatpush1.msra.mxu0 0.0
    %3490 = vmatprep.subr.mxu0 0.0
    %3491 = vmatpush1.msra.mxu0 %v3386
    %3492 = vmatprep.subr.mxu0 0.0
    %3493 = vmatpush1.msra.mxu0 %v3385
    %3494 = vmatprep.subr.mxu0 0.0
    %3495 = vmatpush1.msra.mxu0 %v3384
    %3496 = vmatprep.subr.mxu0 0.0
    %3497 = vmatpush1.msra.mxu0 %v3383
    %3498 = vmatprep.subr.mxu0 0.0
    %3499 = vmatpush2.msra.mxu0 0.0
    %3500 = vmatprep.subr.mxu0 0.0
    %3501 = vmatpush2.msra.mxu0 0.0
    %3502 = vmatprep.subr.mxu0 0.0
    %3503 = vmatpush2.msra.mxu0 0.0
    %3504 = vmatprep.subr.mxu0 0.0
    %3505 = vmatpush2.msra.mxu0 0.0
    %3506 = vmatprep.subr.mxu0 0.0
    %3507 = vmatpush2.msra.mxu0 0.0
    %3508 = vmatprep.subr.mxu0 0.0
    %3509 = vmatpush2.msra.mxu0 0.0
    %3510 = vmatprep.subr.mxu0 0.0
    %3511 = vmatpush2.msra.mxu0 0.0
    %3512 = vmatprep.subr.mxu0 0.0
    %3513 = vmatpush2.msra.mxu0 0.0
    %3514 = vmatprep.subr.mxu0 0.0
    %3515 = vmatpush2.msra.mxu0 0.0
    %3516 = vmatprep.subr.mxu0 0.0
    %3517 = vmatpush2.msra.mxu0 0.0
    %3518 = vmatprep.subr.mxu0 0.0
    %3519 = vmatpush2.msra.mxu0 0.0
    %3520 = vmatprep.subr.mxu0 0.0
    %3521 = vmatpush2.msra.mxu0 0.0
    %3522 = vmatprep.subr.mxu0 0.0
    %3523 = vmatpush2.msra.mxu0 0.0
    %3524 = vmatprep.subr.mxu0 0.0
    %3525 = vmatpush2.msra.mxu0 0.0
    %3526 = vmatprep.subr.mxu0 0.0
    %3527 = vmatpush2.msra.mxu0 0.0
    %3528 = vmatprep.subr.mxu0 0.0
    %3529 = vmatpush2.msra.mxu0 0.0
    %3530 = vmatprep.mubr.f32.mxu0 0.0
    %3531 = vmatmul.mubr.f32.gmra.mxu0 %v3464
    %v3532 = vpop.f32.mrf.mxu0
    %v3533 = vadd.f32 %v3458, %v3532
    %v3534 = vpop.f32.mrf.mxu0
    %3535 = vdwg.mxu0
    %v3536 = vld [vmem:[%s9] sm:$0x1]
    %v3538 = vlaneseq
    %v3539 = vshrl.u32 %v3538, 7
    %v3540 = vsub.s32 0, %v3539
    %v3541 = vrot.slane %v3536, %v3540
    %v3543 = vadd.f32 %v3533, %v3541
    %v3544 = vxor.u32 %v3543, 2147483648
    %v3545 = vmul.f32 %v3544, 1.442695
    %v3546 = vpow.pop %v3545
    %v3547 = vadd.f32 %v3546, 1.0
    %v3548 = vrcp.pop %v3547
    %v3549 = vmul.f32 1.0, %v3548
    %v3550 = vtanh.pop %v3543
    %v3551 = vmul.f32 %v3549, %v3071
    %3553 = vrot.lane.b32.xlu0 %v3550, 64
    %v3554 = vpop.permute.xlu0 %3553
    %v3556 = vmul.f32 %v3549, %v3554
    %3558 = vrot.lane.b32.xlu0 %v3556, 32
    %v3559 = vpop.permute.xlu0 %3558
    %v3561 = vadd.f32 %v3551, %v3559
    %v3562 = vtanh.pop %v3561
    %3564 = vrot.lane.b32.xlu0 %v3562, 64
    %v3565 = vpop.permute.xlu0 %3564
    %v3567 = vmul.f32 %v3549, %v3565
    %v3568 = vld [vmem:[%s10] sm:$0xff]
    %v3569 = vld [vmem:[%s10 + $0x8] sm:$0xff]
    %v3570 = vld [vmem:[%s10 + $0x10] sm:$0xff]
    %v3571 = vld [vmem:[%s10 + $0x18] sm:$0xff]
    %v3572 = vld [vmem:[%s11] sm:$0x1]
    %v3574 = vlaneseq
    %v3575 = vshrl.u32 %v3574, 7
    %v3576 = vsub.s32 0, %v3575
    %v3577 = vrot.slane %v3572, %v3576
    %3580 = vrot.lane.b32.xlu0 %v3567, 32
    %v3581 = vpop.permute.xlu0 %3580
    %v3582 = vsel %vm65, %v3581, 0
    %3584 = vmatprep.subr.mxu0 0.0
    %3585 = vmatpush1.msra.mxu0 0.0
    %3586 = vmatprep.subr.mxu0 0.0
    %3587 = vmatpush1.msra.mxu0 0.0
    %3588 = vmatprep.subr.mxu0 0.0
    %3589 = vmatpush1.msra.mxu0 0.0
    %3590 = vmatprep.subr.mxu0 0.0
    %3591 = vmatpush1.msra.mxu0 0.0
    %3592 = vmatprep.subr.mxu0 0.0
    %3593 = vmatpush1.msra.mxu0 0.0
    %3594 = vmatprep.subr.mxu0 0.0
    %3595 = vmatpush1.msra.mxu0 0.0
    %3596 = vmatprep.subr.mxu0 0.0
    %3597 = vmatpush1.msra.mxu0 0.0
    %3598 = vmatprep.subr.mxu0 0.0
    %3599 = vmatpush1.msra.mxu0 0.0
    %3600 = vmatprep.subr.mxu0 0.0
    %3601 = vmatpush1.msra.mxu0 0.0
    %3602 = vmatprep.subr.mxu0 0.0
    %3603 = vmatpush1.msra.mxu0 0.0
    %3604 = vmatprep.subr.mxu0 0.0
    %3605 = vmatpush1.msra.mxu0 0.0
    %3606 = vmatprep.subr.mxu0 0.0
    %3607 = vmatpush1.msra.mxu0 0.0
    %3608 = vmatprep.subr.mxu0 0.0
    %3609 = vmatpush1.msra.mxu0 %v3571
    %3610 = vmatprep.subr.mxu0 0.0
    %3611 = vmatpush1.msra.mxu0 %v3570
    %3612 = vmatprep.subr.mxu0 0.0
    %3613 = vmatpush1.msra.mxu0 %v3569
    %3614 = vmatprep.subr.mxu0 0.0
    %3615 = vmatpush1.msra.mxu0 %v3568
    %3616 = vmatprep.subr.mxu0 0.0
    %3617 = vmatpush2.msra.mxu0 0.0
    %3618 = vmatprep.subr.mxu0 0.0
    %3619 = vmatpush2.msra.mxu0 0.0
    %3620 = vmatprep.subr.mxu0 0.0
    %3621 = vmatpush2.msra.mxu0 0.0
    %3622 = vmatprep.subr.mxu0 0.0
    %3623 = vmatpush2.msra.mxu0 0.0
    %3624 = vmatprep.subr.mxu0 0.0
    %3625 = vmatpush2.msra.mxu0 0.0
    %3626 = vmatprep.subr.mxu0 0.0
    %3627 = vmatpush2.msra.mxu0 0.0
    %3628 = vmatprep.subr.mxu0 0.0
    %3629 = vmatpush2.msra.mxu0 0.0
    %3630 = vmatprep.subr.mxu0 0.0
    %3631 = vmatpush2.msra.mxu0 0.0
    %3632 = vmatprep.subr.mxu0 0.0
    %3633 = vmatpush2.msra.mxu0 0.0
    %3634 = vmatprep.subr.mxu0 0.0
    %3635 = vmatpush2.msra.mxu0 0.0
    %3636 = vmatprep.subr.mxu0 0.0
    %3637 = vmatpush2.msra.mxu0 0.0
    %3638 = vmatprep.subr.mxu0 0.0
    %3639 = vmatpush2.msra.mxu0 0.0
    %3640 = vmatprep.subr.mxu0 0.0
    %3641 = vmatpush2.msra.mxu0 0.0
    %3642 = vmatprep.subr.mxu0 0.0
    %3643 = vmatpush2.msra.mxu0 0.0
    %3644 = vmatprep.subr.mxu0 0.0
    %3645 = vmatpush2.msra.mxu0 0.0
    %3646 = vmatprep.subr.mxu0 0.0
    %3647 = vmatpush2.msra.mxu0 0.0
    %3648 = vmatprep.mubr.f32.mxu0 0.0
    %3649 = vmatmul.mubr.f32.gmra.mxu0 %v3582
    %v3650 = vpop.f32.mrf.mxu0
    %v3651 = vadd.f32 %v3577, %v3650
    %v3652 = vpop.f32.mrf.mxu0
    %3653 = vdwg.mxu0
    %s3654 = scalar_lea.vmem %s14, 24
    %3655 = vst [vmem:[%s3654] sm:$0xff] %v3651
    // Predicated region
    $region62: #{_seq2seq_impl.1} parent=1 // pred_check
      _
    $region63: #{_seq2seq_impl.1} parent=1 // pred_check_branch
      %3657 = sbr.rel (0) target = $region65
    $region64: #{_seq2seq_impl.1} parent=1 // pred_region
      _
    $region65: #{_seq2seq_impl.1} parent=1 // pred_fallthru
      _
    // Predicated region
    $region66: #{_seq2seq_impl.1} parent=1 // pred_check
      _
    $region67: #{_seq2seq_impl.1} parent=1 // pred_check_branch
      %3659 = sbr.rel (0) target = $region69
    $region68: #{_seq2seq_impl.1} parent=1 // pred_region
      _
    $region69: #{_seq2seq_impl.1} parent=1 // pred_fallthru
      _
    %3660 = vsyncpa [#allocation3], 1

</llo_original>
